<compile_context>
chip_gen: v6e
topology: v6e:2x2x1
jax: 0.10.0
libtpu: 0.0.40
codegen_flags: <defaults>
</compile_context>

<pallas_src>
import math
import functools

import jax
import jax.numpy as jnp
from jax.experimental import pallas as pl
from jax.experimental.pallas import tpu as pltpu

F32 = jnp.float32
BF16 = jnp.bfloat16


def _ln(x, g, b):
    mu = jnp.mean(x, axis=-1, keepdims=True)
    var = jnp.mean(jnp.square(x - mu), axis=-1, keepdims=True)
    return (x - mu) * jax.lax.rsqrt(var + 1e-5) * g + b


# ---------------- fused transformer encoder layer (one pallas_call) ----------

def _encoder_layer_kernel(x_ref, m_ref, wqkv_ref, bqkv_ref, wo_ref, bo_ref,
                          ln1_g, ln1_b, ff1_w, ff1_b, ff2_w, ff2_b,
                          ln2_g, ln2_b, o_ref, *, nhead, scale):
    x = x_ref[0]                       # (N, D) f32
    mask = m_ref[0]                    # (1, N) additive key-padding mask
    xb = x.astype(BF16)
    N, D = x.shape

    # Multi-head self-attention.  Per-head Q/K/V/output-proj weights arrive as
    # leading-axis-indexed slabs, so the kernel never lane-slices or transposes.
    acc = jnp.zeros((N, D), F32)
    for h in range(nhead):
        q = jnp.dot(xb, wqkv_ref[0, h].astype(BF16),
                    preferred_element_type=F32) + bqkv_ref[0, h]
        k = jnp.dot(xb, wqkv_ref[1, h].astype(BF16),
                    preferred_element_type=F32) + bqkv_ref[1, h]
        v = jnp.dot(xb, wqkv_ref[2, h].astype(BF16),
                    preferred_element_type=F32) + bqkv_ref[2, h]
        s = jax.lax.dot_general(q.astype(BF16), k.astype(BF16),
                                (((1,), (1,)), ((), ())),
                                preferred_element_type=F32) * scale + mask
        s = s - jnp.max(s, axis=-1, keepdims=True)
        p = jnp.exp(s)
        p = p * pl.reciprocal(jnp.sum(p, axis=-1, keepdims=True), approx=True)
        o = jnp.dot(p.astype(BF16), v.astype(BF16), preferred_element_type=F32)
        # fold the output projection in per head: attn = sum_h o_h @ Wo[h]
        acc = acc + jnp.dot(o.astype(BF16), wo_ref[h].astype(BF16),
                            preferred_element_type=F32)
    attn = acc + bo_ref[...]

    x1 = _ln(x + attn, ln1_g[...], ln1_b[...])
    z = jnp.maximum(jnp.dot(x1.astype(BF16), ff1_w[...].astype(BF16),
                            preferred_element_type=F32) + ff1_b[...], 0.0)
    ff = jnp.dot(z.astype(BF16), ff2_w[...].astype(BF16),
                 preferred_element_type=F32) + ff2_b[...]
    o_ref[0] = _ln(x1 + ff, ln2_g[...], ln2_b[...])


def encoder_layer(x, mask_add, lp, *, nhead, scale):
    B, N, D = x.shape
    hd = D // nhead
    Fd = lp["ff1_w"].shape[1]
    # Restructure torch-layout weights into per-head slabs (cheap XLA ops on
    # weights only):  in_w (D,3D)->(3,H,D,hd), in_b->(3,H,1,hd), out_w->(H,hd,D)
    wqkv = lp["in_w"].reshape(D, 3, nhead, hd).transpose(1, 2, 0, 3)
    bqkv = lp["in_b"].reshape(3, nhead, 1, hd)
    wo = lp["out_w"].reshape(nhead, hd, D)

    full = lambda shape: pl.BlockSpec(shape, lambda b, n=len(shape): (0,) * n)
    return pl.pallas_call(
        functools.partial(_encoder_layer_kernel, nhead=nhead, scale=scale),
        out_shape=jax.ShapeDtypeStruct((B, N, D), F32),
        grid=(B,),
        in_specs=[pl.BlockSpec((1, N, D), lambda b: (b, 0, 0)),
                  pl.BlockSpec((1, 1, N), lambda b: (b, 0, 0)),
                  full((3, nhead, D, hd)), full((3, nhead, 1, hd)),
                  full((nhead, hd, D)), full((1, D)),
                  full((1, D)), full((1, D)),
                  full((D, Fd)), full((1, Fd)),
                  full((Fd, D)), full((1, D)),
                  full((1, D)), full((1, D))],
        out_specs=pl.BlockSpec((1, N, D), lambda b: (b, 0, 0)),
        compiler_params=pltpu.CompilerParams(dimension_semantics=("parallel",)),
    )(x, mask_add, wqkv, bqkv, wo, lp["out_b"].reshape(1, D),
      lp["ln1_g"].reshape(1, D), lp["ln1_b"].reshape(1, D),
      lp["ff1_w"], lp["ff1_b"].reshape(1, Fd),
      lp["ff2_w"], lp["ff2_b"].reshape(1, D),
      lp["ln2_g"].reshape(1, D), lp["ln2_b"].reshape(1, D))


def transformer_encoder(layers, x, pad_mask, nhead):
    """nn.TransformerEncoder (post-norm, ReLU FFN, dropout disabled / eval)."""
    B, N, D = x.shape
    scale = 1.0 / math.sqrt(D // nhead)
    # NOTE: an all-padded query row yields a uniform softmax here (torch would
    # produce NaN/undefined for a fully-masked row) — only pathological inputs.
    mask_add = jnp.where(pad_mask, jnp.float32(-1e30),
                         jnp.float32(0.0)).reshape(B, 1, N)
    for lp in layers:
        x = encoder_layer(x, mask_add, lp, nhead=nhead, scale=scale)
    return x


# --------------------------- insertion-count head ---------------------------

def _ins_head_kernel(x_ref, w_ref, b_ref, o_ref):
    o_ref[0] = (jnp.dot(x_ref[0].astype(BF16), w_ref[...].astype(BF16),
                        preferred_element_type=F32) + b_ref[...])


def ins_head(h_cat, w, b):
    B, M, Din = h_cat.shape
    K = w.shape[1]
    LP = pl.cdiv(K, 128) * 128                      # lane-dense padded output
    w_p = jnp.zeros((Din, LP), F32).at[:, :K].set(w)
    b_p = jnp.zeros((1, LP), F32).at[:, :K].set(b[None, :])
    out = pl.pallas_call(
        _ins_head_kernel,
        out_shape=jax.ShapeDtypeStruct((B, M, LP), F32),
        grid=(B,),
        in_specs=[pl.BlockSpec((1, M, Din), lambda i: (i, 0, 0)),
                  pl.BlockSpec((Din, LP), lambda i: (0, 0)),
                  pl.BlockSpec((1, LP), lambda i: (0, 0))],
        out_specs=pl.BlockSpec((1, M, LP), lambda i: (i, 0, 0)),
        compiler_params=pltpu.CompilerParams(dimension_semantics=("parallel",)),
    )(h_cat, w_p, b_p)
    return out[..., :K]


# ----- fused tail: par head + encode_par + rel/pos/tok heads + emb adds ------

def _tail_kernel(henc_ref, h_ref, pm_ref, re_ref, pe_ref, te_ref,
                 ep1_w, ep1_b, ep2_w, ep2_b,
                 w_par, w_rel, w_pos, w_tok, b_all, lo_ref, ho_ref):
    h_enc = henc_ref[0]            # (N, D) re-encoded sequence -> par head
    h = h_ref[0]                   # (N, D) placeholder-filled sequence
    m = pm_ref[0]                  # (N, 1) (tgt_par != -1) mask

    # _add_par: h + mask * encode_par(h)
    z = jnp.maximum(jnp.dot(h.astype(BF16), ep1_w[...].astype(BF16),
                            preferred_element_type=F32) + ep1_b[...], 0.0)
    par = jnp.dot(z.astype(BF16), ep2_w[...].astype(BF16),
                  preferred_element_type=F32) + ep2_b[...]
    h1 = h + m * par
    h2 = h1 + re_ref[0]            # + rel embedding
    h3 = h2 + pe_ref[0]            # + pos embedding

    # par/rel/pos/tok logits as ONE lane-dense 128-wide slab: each head weight
    # is zero-padded into its own column segment, so summing the four matmuls
    # deposits each head's logits in its segment (single unmasked output store).
    logits = (jnp.dot(h_enc.astype(BF16), w_par[...].astype(BF16),
                      preferred_element_type=F32)
              + jnp.dot(h1.astype(BF16), w_rel[...].astype(BF16),
                        preferred_element_type=F32)
              + jnp.dot(h2.astype(BF16), w_pos[...].astype(BF16),
                        preferred_element_type=F32)
              + jnp.dot(h3.astype(BF16), w_tok[...].astype(BF16),
                        preferred_element_type=F32)
              + b_all[...])
    lo_ref[0] = logits
    ho_ref[0] = h3 + te_ref[0]     # + tok embedding


def tail_fused(h_enc, h, par_mask, rel_e, pos_e, tok_e, params):
    B, N, D = h.shape
    Fd = params["ep1_w"].shape[1]
    ws = [params["par_w"], params["rel_w"], params["pos_w"], params["tok_w"]]
    bs = [params["par_b"], params["rel_b"], params["pos_b"], params["tok_b"]]
    widths = [w.shape[1] for w in ws]
    offs = [0]
    for wd in widths[:-1]:
        offs.append(offs[-1] + wd)
    total = offs[-1] + widths[-1]
    LP = pl.cdiv(total, 128) * 128

    def seg_w(w, off):
        return jnp.zeros((w.shape[0], LP), F32).at[:, off:off + w.shape[1]].set(w)

    wp = [seg_w(w, o) for w, o in zip(ws, offs)]
    b_all = jnp.zeros((1, LP), F32)
    for b, o, wd in zip(bs, offs, widths):
        b_all = b_all.at[:, o:o + wd].set(b[None, :])

    full = lambda shape: pl.BlockSpec(shape, lambda b, n=len(shape): (0,) * n)
    bspec = lambda last: pl.BlockSpec((1, N, last), lambda b: (b, 0, 0))

    logits, h_out = pl.pallas_call(
        _tail_kernel,
        out_shape=(jax.ShapeDtypeStruct((B, N, LP), F32),
                   jax.ShapeDtypeStruct((B, N, D), F32)),
        grid=(B,),
        in_specs=[bspec(D), bspec(D), bspec(1), bspec(D), bspec(D), bspec(D),
                  full((D, Fd)), full((1, Fd)), full((Fd, D)), full((1, D)),
                  full((D, LP)), full((D, LP)), full((D, LP)), full((D, LP)),
                  full((1, LP))],
        out_specs=(pl.BlockSpec((1, N, LP), lambda b: (b, 0, 0)),
                   pl.BlockSpec((1, N, D), lambda b: (b, 0, 0))),
        compiler_params=pltpu.CompilerParams(dimension_semantics=("parallel",)),
    )(h_enc, h, par_mask, rel_e, pos_e, tok_e,
      params["ep1_w"], params["ep1_b"].reshape(1, Fd),
      params["ep2_w"], params["ep2_b"].reshape(1, D),
      wp[0], wp[1], wp[2], wp[3], b_all)

    sl = lambda i: logits[..., offs[i]:offs[i] + widths[i]]
    return (sl(0), sl(1), sl(2), sl(3)), h_out


# --------------------------- model (JAX glue) ------------------------------

def sinusoidal_pe(N, D):
    pos = jnp.arange(N, dtype=F32)[:, None]
    i = jnp.arange(D, dtype=F32)[None, :]
    angle = pos / jnp.power(10000.0, (2.0 * jnp.floor(i / 2.0)) / D)
    return jnp.where((jnp.arange(D)[None, :] % 2) == 0, jnp.sin(angle), jnp.cos(angle))


def forward(params, src, src_pad_mask, tgt_ins, tgt_par, tgt_rel, tgt_pos, tgt_tok,
            *, nhead):
    B, N, D = src.shape
    pe = sinusoidal_pe(N, D)

    # ---- _ins: encode, concat adjacent states, insertion-count head ----
    h = transformer_encoder(params["layers"], src, src_pad_mask, nhead)
    h_cat = jnp.concatenate([h[:, :-1], h[:, 1:]], axis=-1)          # (B, N-1, 2D)
    l_ins = ins_head(h_cat, params["ins_w"], params["ins_b"])        # (B, N-1, K)

    # ---- _ins_plh: scatter existing tokens, fill placeholders ----
    # TODO(synk): SinusoidalEmbedding class is not in the source; assumed to be
    #             h + d * standard_sinusoidal_pe(max_len=N, d_model).
    h = h - pe[None]                                                 # d = -1
    cumsum = jnp.concatenate(
        [jnp.zeros((B, 1), jnp.int32), jnp.cumsum(tgt_ins, axis=1, dtype=jnp.int32)],
        axis=1)
    cpy = jnp.where(src_pad_mask, 0, jnp.arange(N, dtype=jnp.int32)[None, :] + cumsum)
    # TODO(synk): torch's scatter_ with duplicate indices is nondeterministic and
    #             the overflow check raises; here duplicates follow JAX scatter
    #             semantics and the check is omitted (done in plain-JAX glue).
    res = jax.vmap(lambda idx, rows: jnp.zeros((N, D), F32).at[idx].set(rows))(cpy, h)
    plh_mask = jax.vmap(lambda idx: jnp.ones((N,), bool).at[idx].set(False))(cpy)
    res = jnp.where(plh_mask[..., None], params["plh"][None, None, :], res)
    h = res + pe[None]                                               # d = +1
    src_pad_mask = jnp.arange(N)[None, :] > jnp.max(cpy, axis=-1, keepdims=True)

    # ---- _par + _add_par + rel/pos/tok heads + embedding adds (fused tail) ----
    h_enc = transformer_encoder(params["layers"], h, src_pad_mask, nhead)
    par_mask = (tgt_par != -1).astype(F32)[..., None]
    rel_e = jnp.take(params["rel_emb"], jnp.where(tgt_rel == -1, 0, tgt_rel), axis=0)
    pos_e = jnp.take(params["pos_emb"], jnp.where(tgt_pos == -1, 0, tgt_pos), axis=0)
    tok_e = jnp.take(params["tok_emb"], jnp.where(tgt_tok == -1, 0, tgt_tok), axis=0)
    (l_par, l_rel, l_pos, l_tok), h_out = tail_fused(
        h_enc, h, par_mask, rel_e, pos_e, tok_e, params)

    return (l_ins, l_par, l_rel, l_pos, l_tok), h_out, src_pad_mask


# ------------------------------ parameters ---------------------------------

def init_params(key, D, F, L, N, K, n_tok, n_pos, n_rel):
    keys = iter(jax.random.split(key, 64))
    w = lambda shape, s=0.02: jax.random.normal(next(keys), shape, F32) * s
    layers = []
    for _ in range(L):
        layers.append(dict(
            in_w=w((D, 3 * D)), in_b=jnp.zeros((3 * D,), F32),
            out_w=w((D, D)), out_b=jnp.zeros((D,), F32),
            ln1_g=jnp.ones((D,), F32), ln1_b=jnp.zeros((D,), F32),
            ff1_w=w((D, F)), ff1_b=jnp.zeros((F,), F32),
            ff2_w=w((F, D)), ff2_b=jnp.zeros((D,), F32),
            ln2_g=jnp.ones((D,), F32), ln2_b=jnp.zeros((D,), F32),
        ))
    return dict(
        layers=layers,
        ins_w=w((2 * D, K)), ins_b=jnp.zeros((K,), F32),
        par_w=w((D, N)), par_b=jnp.zeros((N,), F32),
        rel_w=w((D, n_rel)), rel_b=jnp.zeros((n_rel,), F32),
        pos_w=w((D, n_pos)), pos_b=jnp.zeros((n_pos,), F32),
        tok_w=w((D, n_tok)), tok_b=jnp.zeros((n_tok,), F32),
        ep1_w=w((D, F)), ep1_b=jnp.zeros((F,), F32),
        ep2_w=w((F, D)), ep2_b=jnp.zeros((D,), F32),
        tok_emb=w((n_tok, D)), pos_emb=w((n_pos, D)), rel_emb=w((n_rel, D)),
        plh=w((D,), 1.0 / math.sqrt(D)),
    )


# --------------------------------- main -------------------------------------

if __name__ == "__main__":
    # Small shapes: d_model=32, nhead=4, dim_ff=64, 2 encoder layers, N=K=16
    D, H, F, L, N, K = 32, 4, 64, 2, 16, 16
    n_tok, n_pos, n_rel = 48, 8, 16
    B = 2

    key = jax.random.PRNGKey(0)
    kp, kx = jax.random.split(key)
    params = init_params(kp, D, F, L, N, K, n_tok, n_pos, n_rel)

    src = jax.random.normal(kx, (B, N, D), F32)
    src_pad_mask = jnp.broadcast_to(jnp.arange(N)[None, :] >= 3, (B, N))  # first 3 real
    tgt_ins = (jnp.zeros((B, N - 1), jnp.int32)
               .at[0, 0].set(1).at[0, 1].set(2).at[1, 1].set(1))
    tgt_par = jnp.full((B, N), -1, jnp.int32).at[:, 1:4].set(
        jnp.array([[1, 2, 1], [2, 1, 3]], jnp.int32))
    tgt_rel = jnp.full((B, N), -1, jnp.int32).at[:, 1:4].set(
        jnp.array([[0, 3, 5], [1, 2, 4]], jnp.int32))
    tgt_pos = jnp.full((B, N), -1, jnp.int32).at[:, 1:4].set(
        jnp.array([[1, 2, 3], [0, 4, 5]], jnp.int32))
    tgt_tok = jnp.full((B, N), -1, jnp.int32).at[:, 1:4].set(
        jnp.array([[5, 7, 9], [11, 13, 2]], jnp.int32))

    fwd = jax.jit(functools.partial(forward, nhead=H))
    (l_ins, l_par, l_rel, l_pos, l_tok), h_out, new_pad = fwd(
        params, src, src_pad_mask, tgt_ins, tgt_par, tgt_rel, tgt_pos, tgt_tok)
    jax.block_until_ready((l_ins, l_par, l_rel, l_pos, l_tok, h_out, new_pad))

    assert l_ins.shape == (B, N - 1, K)
    assert l_par.shape == (B, N, N)
    assert l_rel.shape == (B, N, n_rel)
    assert l_pos.shape == (B, N, n_pos)
    assert l_tok.shape == (B, N, n_tok)
    assert h_out.shape == (B, N, D)
    assert new_pad.shape == (B, N)
    print("KERNEL_OK")
</pallas_src>

<mosaic_0001>
module attributes {stable_mosaic.version = 11 : i64} {
  func.func @_encoder_layer_kernel(%arg0: i32, %arg1: memref<1x16x32xf32, #tpu.memory_space<vmem>>, %arg2: memref<1x1x16xf32, #tpu.memory_space<vmem>>, %arg3: memref<3x4x32x8xf32, #tpu.memory_space<vmem>>, %arg4: memref<3x4x1x8xf32, #tpu.memory_space<vmem>>, %arg5: memref<4x8x32xf32, #tpu.memory_space<vmem>>, %arg6: memref<1x32xf32, #tpu.memory_space<vmem>>, %arg7: memref<1x32xf32, #tpu.memory_space<vmem>>, %arg8: memref<1x32xf32, #tpu.memory_space<vmem>>, %arg9: memref<32x64xf32, #tpu.memory_space<vmem>>, %arg10: memref<1x64xf32, #tpu.memory_space<vmem>>, %arg11: memref<64x32xf32, #tpu.memory_space<vmem>>, %arg12: memref<1x32xf32, #tpu.memory_space<vmem>>, %arg13: memref<1x32xf32, #tpu.memory_space<vmem>>, %arg14: memref<1x32xf32, #tpu.memory_space<vmem>>, %arg15: memref<1x16x32xf32, #tpu.memory_space<vmem>>) attributes {dimension_semantics = [#tpu.dimension_semantics<parallel>], iteration_bounds = array<i64: 2>, scalar_prefetch = 0 : i64, scratch_operands = 0 : i64, tpu.core_type = #tpu.core_type<tc>, window_params = [{transform_indices = @transform_0, window_bounds = array<i64: 1, 16, 32>}, {transform_indices = @transform_1, window_bounds = array<i64: 1, 1, 16>}, {pipeline_mode = #tpu.pipeline_mode<synchronous>, transform_indices = @transform_2, window_bounds = array<i64: 3, 4, 32, 8>}, {pipeline_mode = #tpu.pipeline_mode<synchronous>, transform_indices = @transform_3, window_bounds = array<i64: 3, 4, 1, 8>}, {pipeline_mode = #tpu.pipeline_mode<synchronous>, transform_indices = @transform_4, window_bounds = array<i64: 4, 8, 32>}, {pipeline_mode = #tpu.pipeline_mode<synchronous>, transform_indices = @transform_5, window_bounds = array<i64: 1, 32>}, {pipeline_mode = #tpu.pipeline_mode<synchronous>, transform_indices = @transform_6, window_bounds = array<i64: 1, 32>}, {pipeline_mode = #tpu.pipeline_mode<synchronous>, transform_indices = @transform_7, window_bounds = array<i64: 1, 32>}, {pipeline_mode = #tpu.pipeline_mode<synchronous>, transform_indices = @transform_8, window_bounds = array<i64: 32, 64>}, {pipeline_mode = #tpu.pipeline_mode<synchronous>, transform_indices = @transform_9, window_bounds = array<i64: 1, 64>}, {pipeline_mode = #tpu.pipeline_mode<synchronous>, transform_indices = @transform_10, window_bounds = array<i64: 64, 32>}, {pipeline_mode = #tpu.pipeline_mode<synchronous>, transform_indices = @transform_11, window_bounds = array<i64: 1, 32>}, {pipeline_mode = #tpu.pipeline_mode<synchronous>, transform_indices = @transform_12, window_bounds = array<i64: 1, 32>}, {pipeline_mode = #tpu.pipeline_mode<synchronous>, transform_indices = @transform_13, window_bounds = array<i64: 1, 32>}, {transform_indices = @transform_14, window_bounds = array<i64: 1, 16, 32>}]} {
    %c0 = arith.constant 0 : index
    %c0_0 = arith.constant 0 : index
    %c0_1 = arith.constant 0 : index
    %0 = vector.load %arg1[%c0, %c0_0, %c0_1] : memref<1x16x32xf32, #tpu.memory_space<vmem>>, vector<1x16x32xf32>
    %1 = vector.shape_cast %0 : vector<1x16x32xf32> to vector<16x32xf32>
    %c0_2 = arith.constant 0 : index
    %c0_3 = arith.constant 0 : index
    %c0_4 = arith.constant 0 : index
    %2 = vector.load %arg2[%c0_2, %c0_3, %c0_4] : memref<1x1x16xf32, #tpu.memory_space<vmem>>, vector<1x1x16xf32>
    %3 = vector.shape_cast %2 : vector<1x1x16xf32> to vector<1x16xf32>
    %4 = arith.truncf %1 : vector<16x32xf32> to vector<16x32xbf16>
    %cst = arith.constant 0.000000e+00 : f32
    %5 = vector.broadcast %cst : f32 to vector<16x32xf32>
    %c0_5 = arith.constant 0 : index
    %c0_6 = arith.constant 0 : index
    %c0_7 = arith.constant 0 : index
    %c0_8 = arith.constant 0 : index
    %6 = vector.load %arg3[%c0_5, %c0_6, %c0_7, %c0_8] : memref<3x4x32x8xf32, #tpu.memory_space<vmem>>, vector<1x1x32x8xf32>
    %7 = vector.shape_cast %6 : vector<1x1x32x8xf32> to vector<32x8xf32>
    %8 = arith.truncf %7 : vector<32x8xf32> to vector<32x8xbf16>
    %cst_9 = arith.constant dense<0.000000e+00> : vector<16x8xf32>
    %9 = tpu.matmul %4, %8, %cst_9 {dimension_numbers = #tpu.dot_dimension_numbers<[1], [0], [0], [1], [0, 0, 1, 1], [], []>} : vector<16x32xbf16>, vector<32x8xbf16>, vector<16x8xf32> -> vector<16x8xf32>
    %c0_10 = arith.constant 0 : index
    %c0_11 = arith.constant 0 : index
    %c0_12 = arith.constant 0 : index
    %c0_13 = arith.constant 0 : index
    %10 = vector.load %arg4[%c0_10, %c0_11, %c0_12, %c0_13] : memref<3x4x1x8xf32, #tpu.memory_space<vmem>>, vector<1x1x1x8xf32>
    %11 = vector.shape_cast %10 : vector<1x1x1x8xf32> to vector<1x8xf32>
    %12 = vector.broadcast %11 : vector<1x8xf32> to vector<16x8xf32>
    %13 = arith.addf %9, %12 : vector<16x8xf32>
    %c1 = arith.constant 1 : index
    %c0_14 = arith.constant 0 : index
    %c0_15 = arith.constant 0 : index
    %c0_16 = arith.constant 0 : index
    %14 = vector.load %arg3[%c1, %c0_14, %c0_15, %c0_16] : memref<3x4x32x8xf32, #tpu.memory_space<vmem>>, vector<1x1x32x8xf32>
    %15 = vector.shape_cast %14 : vector<1x1x32x8xf32> to vector<32x8xf32>
    %16 = arith.truncf %15 : vector<32x8xf32> to vector<32x8xbf16>
    %cst_17 = arith.constant dense<0.000000e+00> : vector<16x8xf32>
    %17 = tpu.matmul %4, %16, %cst_17 {dimension_numbers = #tpu.dot_dimension_numbers<[1], [0], [0], [1], [0, 0, 1, 1], [], []>} : vector<16x32xbf16>, vector<32x8xbf16>, vector<16x8xf32> -> vector<16x8xf32>
    %c1_18 = arith.constant 1 : index
    %c0_19 = arith.constant 0 : index
    %c0_20 = arith.constant 0 : index
    %c0_21 = arith.constant 0 : index
    %18 = vector.load %arg4[%c1_18, %c0_19, %c0_20, %c0_21] : memref<3x4x1x8xf32, #tpu.memory_space<vmem>>, vector<1x1x1x8xf32>
    %19 = vector.shape_cast %18 : vector<1x1x1x8xf32> to vector<1x8xf32>
    %20 = vector.broadcast %19 : vector<1x8xf32> to vector<16x8xf32>
    %21 = arith.addf %17, %20 : vector<16x8xf32>
    %c2 = arith.constant 2 : index
    %c0_22 = arith.constant 0 : index
    %c0_23 = arith.constant 0 : index
    %c0_24 = arith.constant 0 : index
    %22 = vector.load %arg3[%c2, %c0_22, %c0_23, %c0_24] : memref<3x4x32x8xf32, #tpu.memory_space<vmem>>, vector<1x1x32x8xf32>
    %23 = vector.shape_cast %22 : vector<1x1x32x8xf32> to vector<32x8xf32>
    %24 = arith.truncf %23 : vector<32x8xf32> to vector<32x8xbf16>
    %cst_25 = arith.constant dense<0.000000e+00> : vector<16x8xf32>
    %25 = tpu.matmul %4, %24, %cst_25 {dimension_numbers = #tpu.dot_dimension_numbers<[1], [0], [0], [1], [0, 0, 1, 1], [], []>} : vector<16x32xbf16>, vector<32x8xbf16>, vector<16x8xf32> -> vector<16x8xf32>
    %c2_26 = arith.constant 2 : index
    %c0_27 = arith.constant 0 : index
    %c0_28 = arith.constant 0 : index
    %c0_29 = arith.constant 0 : index
    %26 = vector.load %arg4[%c2_26, %c0_27, %c0_28, %c0_29] : memref<3x4x1x8xf32, #tpu.memory_space<vmem>>, vector<1x1x1x8xf32>
    %27 = vector.shape_cast %26 : vector<1x1x1x8xf32> to vector<1x8xf32>
    %28 = vector.broadcast %27 : vector<1x8xf32> to vector<16x8xf32>
    %29 = arith.addf %25, %28 : vector<16x8xf32>
    %30 = arith.truncf %13 : vector<16x8xf32> to vector<16x8xbf16>
    %31 = arith.truncf %21 : vector<16x8xf32> to vector<16x8xbf16>
    %cst_30 = arith.constant dense<0.000000e+00> : vector<16x16xf32>
    %32 = tpu.matmul %30, %31, %cst_30 {dimension_numbers = #tpu.dot_dimension_numbers<[1], [1], [0], [0], [0, 0, 1, 0], [], []>} : vector<16x8xbf16>, vector<16x8xbf16>, vector<16x16xf32> -> vector<16x16xf32>
    %cst_31 = arith.constant 0.353553385 : f32
    %33 = vector.broadcast %cst_31 : f32 to vector<16x16xf32>
    %34 = arith.mulf %32, %33 : vector<16x16xf32>
    %35 = vector.broadcast %3 : vector<1x16xf32> to vector<16x16xf32>
    %36 = arith.addf %34, %35 : vector<16x16xf32>
    %cst_32 = arith.constant dense<0xFF800000> : vector<16xf32>
    %37 = vector.multi_reduction <maximumf>, %36, %cst_32 [1] : vector<16x16xf32> to vector<16xf32>
    %38 = vector.shape_cast %37 : vector<16xf32> to vector<16x1xf32>
    %39 = vector.broadcast %38 : vector<16x1xf32> to vector<16x16xf32>
    %40 = arith.subf %36, %39 : vector<16x16xf32>
    %41 = math.exp %40 : vector<16x16xf32>
    %cst_33 = arith.constant dense<0.000000e+00> : vector<16xf32>
    %42 = vector.multi_reduction <add>, %41, %cst_33 [1] : vector<16x16xf32> to vector<16xf32>
    %43 = vector.shape_cast %42 : vector<16xf32> to vector<16x1xf32>
    %44 = tpu.reciprocal %43 {approx = true} : vector<16x1xf32> -> vector<16x1xf32>
    %45 = vector.broadcast %44 : vector<16x1xf32> to vector<16x16xf32>
    %46 = arith.mulf %41, %45 : vector<16x16xf32>
    %47 = arith.truncf %46 : vector<16x16xf32> to vector<16x16xbf16>
    %48 = arith.truncf %29 : vector<16x8xf32> to vector<16x8xbf16>
    %cst_34 = arith.constant dense<0.000000e+00> : vector<16x8xf32>
    %49 = tpu.matmul %47, %48, %cst_34 {dimension_numbers = #tpu.dot_dimension_numbers<[1], [0], [0], [1], [0, 0, 1, 1], [], []>} : vector<16x16xbf16>, vector<16x8xbf16>, vector<16x8xf32> -> vector<16x8xf32>
    %50 = arith.truncf %49 : vector<16x8xf32> to vector<16x8xbf16>
    %c0_35 = arith.constant 0 : index
    %c0_36 = arith.constant 0 : index
    %c0_37 = arith.constant 0 : index
    %51 = vector.load %arg5[%c0_35, %c0_36, %c0_37] : memref<4x8x32xf32, #tpu.memory_space<vmem>>, vector<1x8x32xf32>
    %52 = vector.shape_cast %51 : vector<1x8x32xf32> to vector<8x32xf32>
    %53 = arith.truncf %52 : vector<8x32xf32> to vector<8x32xbf16>
    %cst_38 = arith.constant dense<0.000000e+00> : vector<16x32xf32>
    %54 = tpu.matmul %50, %53, %cst_38 {dimension_numbers = #tpu.dot_dimension_numbers<[1], [0], [0], [1], [0, 0, 1, 1], [], []>} : vector<16x8xbf16>, vector<8x32xbf16>, vector<16x32xf32> -> vector<16x32xf32>
    %55 = arith.addf %5, %54 : vector<16x32xf32>
    %c0_39 = arith.constant 0 : index
    %c1_40 = arith.constant 1 : index
    %c0_41 = arith.constant 0 : index
    %c0_42 = arith.constant 0 : index
    %56 = vector.load %arg3[%c0_39, %c1_40, %c0_41, %c0_42] : memref<3x4x32x8xf32, #tpu.memory_space<vmem>>, vector<1x1x32x8xf32>
    %57 = vector.shape_cast %56 : vector<1x1x32x8xf32> to vector<32x8xf32>
    %58 = arith.truncf %57 : vector<32x8xf32> to vector<32x8xbf16>
    %cst_43 = arith.constant dense<0.000000e+00> : vector<16x8xf32>
    %59 = tpu.matmul %4, %58, %cst_43 {dimension_numbers = #tpu.dot_dimension_numbers<[1], [0], [0], [1], [0, 0, 1, 1], [], []>} : vector<16x32xbf16>, vector<32x8xbf16>, vector<16x8xf32> -> vector<16x8xf32>
    %c0_44 = arith.constant 0 : index
    %c1_45 = arith.constant 1 : index
    %c0_46 = arith.constant 0 : index
    %c0_47 = arith.constant 0 : index
    %60 = vector.load %arg4[%c0_44, %c1_45, %c0_46, %c0_47] : memref<3x4x1x8xf32, #tpu.memory_space<vmem>>, vector<1x1x1x8xf32>
    %61 = vector.shape_cast %60 : vector<1x1x1x8xf32> to vector<1x8xf32>
    %62 = vector.broadcast %61 : vector<1x8xf32> to vector<16x8xf32>
    %63 = arith.addf %59, %62 : vector<16x8xf32>
    %c1_48 = arith.constant 1 : index
    %c1_49 = arith.constant 1 : index
    %c0_50 = arith.constant 0 : index
    %c0_51 = arith.constant 0 : index
    %64 = vector.load %arg3[%c1_48, %c1_49, %c0_50, %c0_51] : memref<3x4x32x8xf32, #tpu.memory_space<vmem>>, vector<1x1x32x8xf32>
    %65 = vector.shape_cast %64 : vector<1x1x32x8xf32> to vector<32x8xf32>
    %66 = arith.truncf %65 : vector<32x8xf32> to vector<32x8xbf16>
    %cst_52 = arith.constant dense<0.000000e+00> : vector<16x8xf32>
    %67 = tpu.matmul %4, %66, %cst_52 {dimension_numbers = #tpu.dot_dimension_numbers<[1], [0], [0], [1], [0, 0, 1, 1], [], []>} : vector<16x32xbf16>, vector<32x8xbf16>, vector<16x8xf32> -> vector<16x8xf32>
    %c1_53 = arith.constant 1 : index
    %c1_54 = arith.constant 1 : index
    %c0_55 = arith.constant 0 : index
    %c0_56 = arith.constant 0 : index
    %68 = vector.load %arg4[%c1_53, %c1_54, %c0_55, %c0_56] : memref<3x4x1x8xf32, #tpu.memory_space<vmem>>, vector<1x1x1x8xf32>
    %69 = vector.shape_cast %68 : vector<1x1x1x8xf32> to vector<1x8xf32>
    %70 = vector.broadcast %69 : vector<1x8xf32> to vector<16x8xf32>
    %71 = arith.addf %67, %70 : vector<16x8xf32>
    %c2_57 = arith.constant 2 : index
    %c1_58 = arith.constant 1 : index
    %c0_59 = arith.constant 0 : index
    %c0_60 = arith.constant 0 : index
    %72 = vector.load %arg3[%c2_57, %c1_58, %c0_59, %c0_60] : memref<3x4x32x8xf32, #tpu.memory_space<vmem>>, vector<1x1x32x8xf32>
    %73 = vector.shape_cast %72 : vector<1x1x32x8xf32> to vector<32x8xf32>
    %74 = arith.truncf %73 : vector<32x8xf32> to vector<32x8xbf16>
    %cst_61 = arith.constant dense<0.000000e+00> : vector<16x8xf32>
    %75 = tpu.matmul %4, %74, %cst_61 {dimension_numbers = #tpu.dot_dimension_numbers<[1], [0], [0], [1], [0, 0, 1, 1], [], []>} : vector<16x32xbf16>, vector<32x8xbf16>, vector<16x8xf32> -> vector<16x8xf32>
    %c2_62 = arith.constant 2 : index
    %c1_63 = arith.constant 1 : index
    %c0_64 = arith.constant 0 : index
    %c0_65 = arith.constant 0 : index
    %76 = vector.load %arg4[%c2_62, %c1_63, %c0_64, %c0_65] : memref<3x4x1x8xf32, #tpu.memory_space<vmem>>, vector<1x1x1x8xf32>
    %77 = vector.shape_cast %76 : vector<1x1x1x8xf32> to vector<1x8xf32>
    %78 = vector.broadcast %77 : vector<1x8xf32> to vector<16x8xf32>
    %79 = arith.addf %75, %78 : vector<16x8xf32>
    %80 = arith.truncf %63 : vector<16x8xf32> to vector<16x8xbf16>
    %81 = arith.truncf %71 : vector<16x8xf32> to vector<16x8xbf16>
    %cst_66 = arith.constant dense<0.000000e+00> : vector<16x16xf32>
    %82 = tpu.matmul %80, %81, %cst_66 {dimension_numbers = #tpu.dot_dimension_numbers<[1], [1], [0], [0], [0, 0, 1, 0], [], []>} : vector<16x8xbf16>, vector<16x8xbf16>, vector<16x16xf32> -> vector<16x16xf32>
    %cst_67 = arith.constant 0.353553385 : f32
    %83 = vector.broadcast %cst_67 : f32 to vector<16x16xf32>
    %84 = arith.mulf %82, %83 : vector<16x16xf32>
    %85 = vector.broadcast %3 : vector<1x16xf32> to vector<16x16xf32>
    %86 = arith.addf %84, %85 : vector<16x16xf32>
    %cst_68 = arith.constant dense<0xFF800000> : vector<16xf32>
    %87 = vector.multi_reduction <maximumf>, %86, %cst_68 [1] : vector<16x16xf32> to vector<16xf32>
    %88 = vector.shape_cast %87 : vector<16xf32> to vector<16x1xf32>
    %89 = vector.broadcast %88 : vector<16x1xf32> to vector<16x16xf32>
    %90 = arith.subf %86, %89 : vector<16x16xf32>
    %91 = math.exp %90 : vector<16x16xf32>
    %cst_69 = arith.constant dense<0.000000e+00> : vector<16xf32>
    %92 = vector.multi_reduction <add>, %91, %cst_69 [1] : vector<16x16xf32> to vector<16xf32>
    %93 = vector.shape_cast %92 : vector<16xf32> to vector<16x1xf32>
    %94 = tpu.reciprocal %93 {approx = true} : vector<16x1xf32> -> vector<16x1xf32>
    %95 = vector.broadcast %94 : vector<16x1xf32> to vector<16x16xf32>
    %96 = arith.mulf %91, %95 : vector<16x16xf32>
    %97 = arith.truncf %96 : vector<16x16xf32> to vector<16x16xbf16>
    %98 = arith.truncf %79 : vector<16x8xf32> to vector<16x8xbf16>
    %cst_70 = arith.constant dense<0.000000e+00> : vector<16x8xf32>
    %99 = tpu.matmul %97, %98, %cst_70 {dimension_numbers = #tpu.dot_dimension_numbers<[1], [0], [0], [1], [0, 0, 1, 1], [], []>} : vector<16x16xbf16>, vector<16x8xbf16>, vector<16x8xf32> -> vector<16x8xf32>
    %100 = arith.truncf %99 : vector<16x8xf32> to vector<16x8xbf16>
    %c1_71 = arith.constant 1 : index
    %c0_72 = arith.constant 0 : index
    %c0_73 = arith.constant 0 : index
    %101 = vector.load %arg5[%c1_71, %c0_72, %c0_73] : memref<4x8x32xf32, #tpu.memory_space<vmem>>, vector<1x8x32xf32>
    %102 = vector.shape_cast %101 : vector<1x8x32xf32> to vector<8x32xf32>
    %103 = arith.truncf %102 : vector<8x32xf32> to vector<8x32xbf16>
    %cst_74 = arith.constant dense<0.000000e+00> : vector<16x32xf32>
    %104 = tpu.matmul %100, %103, %cst_74 {dimension_numbers = #tpu.dot_dimension_numbers<[1], [0], [0], [1], [0, 0, 1, 1], [], []>} : vector<16x8xbf16>, vector<8x32xbf16>, vector<16x32xf32> -> vector<16x32xf32>
    %105 = arith.addf %55, %104 : vector<16x32xf32>
    %c0_75 = arith.constant 0 : index
    %c2_76 = arith.constant 2 : index
    %c0_77 = arith.constant 0 : index
    %c0_78 = arith.constant 0 : index
    %106 = vector.load %arg3[%c0_75, %c2_76, %c0_77, %c0_78] : memref<3x4x32x8xf32, #tpu.memory_space<vmem>>, vector<1x1x32x8xf32>
    %107 = vector.shape_cast %106 : vector<1x1x32x8xf32> to vector<32x8xf32>
    %108 = arith.truncf %107 : vector<32x8xf32> to vector<32x8xbf16>
    %cst_79 = arith.constant dense<0.000000e+00> : vector<16x8xf32>
    %109 = tpu.matmul %4, %108, %cst_79 {dimension_numbers = #tpu.dot_dimension_numbers<[1], [0], [0], [1], [0, 0, 1, 1], [], []>} : vector<16x32xbf16>, vector<32x8xbf16>, vector<16x8xf32> -> vector<16x8xf32>
    %c0_80 = arith.constant 0 : index
    %c2_81 = arith.constant 2 : index
    %c0_82 = arith.constant 0 : index
    %c0_83 = arith.constant 0 : index
    %110 = vector.load %arg4[%c0_80, %c2_81, %c0_82, %c0_83] : memref<3x4x1x8xf32, #tpu.memory_space<vmem>>, vector<1x1x1x8xf32>
    %111 = vector.shape_cast %110 : vector<1x1x1x8xf32> to vector<1x8xf32>
    %112 = vector.broadcast %111 : vector<1x8xf32> to vector<16x8xf32>
    %113 = arith.addf %109, %112 : vector<16x8xf32>
    %c1_84 = arith.constant 1 : index
    %c2_85 = arith.constant 2 : index
    %c0_86 = arith.constant 0 : index
    %c0_87 = arith.constant 0 : index
    %114 = vector.load %arg3[%c1_84, %c2_85, %c0_86, %c0_87] : memref<3x4x32x8xf32, #tpu.memory_space<vmem>>, vector<1x1x32x8xf32>
    %115 = vector.shape_cast %114 : vector<1x1x32x8xf32> to vector<32x8xf32>
    %116 = arith.truncf %115 : vector<32x8xf32> to vector<32x8xbf16>
    %cst_88 = arith.constant dense<0.000000e+00> : vector<16x8xf32>
    %117 = tpu.matmul %4, %116, %cst_88 {dimension_numbers = #tpu.dot_dimension_numbers<[1], [0], [0], [1], [0, 0, 1, 1], [], []>} : vector<16x32xbf16>, vector<32x8xbf16>, vector<16x8xf32> -> vector<16x8xf32>
    %c1_89 = arith.constant 1 : index
    %c2_90 = arith.constant 2 : index
    %c0_91 = arith.constant 0 : index
    %c0_92 = arith.constant 0 : index
    %118 = vector.load %arg4[%c1_89, %c2_90, %c0_91, %c0_92] : memref<3x4x1x8xf32, #tpu.memory_space<vmem>>, vector<1x1x1x8xf32>
    %119 = vector.shape_cast %118 : vector<1x1x1x8xf32> to vector<1x8xf32>
    %120 = vector.broadcast %119 : vector<1x8xf32> to vector<16x8xf32>
    %121 = arith.addf %117, %120 : vector<16x8xf32>
    %c2_93 = arith.constant 2 : index
    %c2_94 = arith.constant 2 : index
    %c0_95 = arith.constant 0 : index
    %c0_96 = arith.constant 0 : index
    %122 = vector.load %arg3[%c2_93, %c2_94, %c0_95, %c0_96] : memref<3x4x32x8xf32, #tpu.memory_space<vmem>>, vector<1x1x32x8xf32>
    %123 = vector.shape_cast %122 : vector<1x1x32x8xf32> to vector<32x8xf32>
    %124 = arith.truncf %123 : vector<32x8xf32> to vector<32x8xbf16>
    %cst_97 = arith.constant dense<0.000000e+00> : vector<16x8xf32>
    %125 = tpu.matmul %4, %124, %cst_97 {dimension_numbers = #tpu.dot_dimension_numbers<[1], [0], [0], [1], [0, 0, 1, 1], [], []>} : vector<16x32xbf16>, vector<32x8xbf16>, vector<16x8xf32> -> vector<16x8xf32>
    %c2_98 = arith.constant 2 : index
    %c2_99 = arith.constant 2 : index
    %c0_100 = arith.constant 0 : index
    %c0_101 = arith.constant 0 : index
    %126 = vector.load %arg4[%c2_98, %c2_99, %c0_100, %c0_101] : memref<3x4x1x8xf32, #tpu.memory_space<vmem>>, vector<1x1x1x8xf32>
    %127 = vector.shape_cast %126 : vector<1x1x1x8xf32> to vector<1x8xf32>
    %128 = vector.broadcast %127 : vector<1x8xf32> to vector<16x8xf32>
    %129 = arith.addf %125, %128 : vector<16x8xf32>
    %130 = arith.truncf %113 : vector<16x8xf32> to vector<16x8xbf16>
    %131 = arith.truncf %121 : vector<16x8xf32> to vector<16x8xbf16>
    %cst_102 = arith.constant dense<0.000000e+00> : vector<16x16xf32>
    %132 = tpu.matmul %130, %131, %cst_102 {dimension_numbers = #tpu.dot_dimension_numbers<[1], [1], [0], [0], [0, 0, 1, 0], [], []>} : vector<16x8xbf16>, vector<16x8xbf16>, vector<16x16xf32> -> vector<16x16xf32>
    %cst_103 = arith.constant 0.353553385 : f32
    %133 = vector.broadcast %cst_103 : f32 to vector<16x16xf32>
    %134 = arith.mulf %132, %133 : vector<16x16xf32>
    %135 = vector.broadcast %3 : vector<1x16xf32> to vector<16x16xf32>
    %136 = arith.addf %134, %135 : vector<16x16xf32>
    %cst_104 = arith.constant dense<0xFF800000> : vector<16xf32>
    %137 = vector.multi_reduction <maximumf>, %136, %cst_104 [1] : vector<16x16xf32> to vector<16xf32>
    %138 = vector.shape_cast %137 : vector<16xf32> to vector<16x1xf32>
    %139 = vector.broadcast %138 : vector<16x1xf32> to vector<16x16xf32>
    %140 = arith.subf %136, %139 : vector<16x16xf32>
    %141 = math.exp %140 : vector<16x16xf32>
    %cst_105 = arith.constant dense<0.000000e+00> : vector<16xf32>
    %142 = vector.multi_reduction <add>, %141, %cst_105 [1] : vector<16x16xf32> to vector<16xf32>
    %143 = vector.shape_cast %142 : vector<16xf32> to vector<16x1xf32>
    %144 = tpu.reciprocal %143 {approx = true} : vector<16x1xf32> -> vector<16x1xf32>
    %145 = vector.broadcast %144 : vector<16x1xf32> to vector<16x16xf32>
    %146 = arith.mulf %141, %145 : vector<16x16xf32>
    %147 = arith.truncf %146 : vector<16x16xf32> to vector<16x16xbf16>
    %148 = arith.truncf %129 : vector<16x8xf32> to vector<16x8xbf16>
    %cst_106 = arith.constant dense<0.000000e+00> : vector<16x8xf32>
    %149 = tpu.matmul %147, %148, %cst_106 {dimension_numbers = #tpu.dot_dimension_numbers<[1], [0], [0], [1], [0, 0, 1, 1], [], []>} : vector<16x16xbf16>, vector<16x8xbf16>, vector<16x8xf32> -> vector<16x8xf32>
    %150 = arith.truncf %149 : vector<16x8xf32> to vector<16x8xbf16>
    %c2_107 = arith.constant 2 : index
    %c0_108 = arith.constant 0 : index
    %c0_109 = arith.constant 0 : index
    %151 = vector.load %arg5[%c2_107, %c0_108, %c0_109] : memref<4x8x32xf32, #tpu.memory_space<vmem>>, vector<1x8x32xf32>
    %152 = vector.shape_cast %151 : vector<1x8x32xf32> to vector<8x32xf32>
    %153 = arith.truncf %152 : vector<8x32xf32> to vector<8x32xbf16>
    %cst_110 = arith.constant dense<0.000000e+00> : vector<16x32xf32>
    %154 = tpu.matmul %150, %153, %cst_110 {dimension_numbers = #tpu.dot_dimension_numbers<[1], [0], [0], [1], [0, 0, 1, 1], [], []>} : vector<16x8xbf16>, vector<8x32xbf16>, vector<16x32xf32> -> vector<16x32xf32>
    %155 = arith.addf %105, %154 : vector<16x32xf32>
    %c0_111 = arith.constant 0 : index
    %c3 = arith.constant 3 : index
    %c0_112 = arith.constant 0 : index
    %c0_113 = arith.constant 0 : index
    %156 = vector.load %arg3[%c0_111, %c3, %c0_112, %c0_113] : memref<3x4x32x8xf32, #tpu.memory_space<vmem>>, vector<1x1x32x8xf32>
    %157 = vector.shape_cast %156 : vector<1x1x32x8xf32> to vector<32x8xf32>
    %158 = arith.truncf %157 : vector<32x8xf32> to vector<32x8xbf16>
    %cst_114 = arith.constant dense<0.000000e+00> : vector<16x8xf32>
    %159 = tpu.matmul %4, %158, %cst_114 {dimension_numbers = #tpu.dot_dimension_numbers<[1], [0], [0], [1], [0, 0, 1, 1], [], []>} : vector<16x32xbf16>, vector<32x8xbf16>, vector<16x8xf32> -> vector<16x8xf32>
    %c0_115 = arith.constant 0 : index
    %c3_116 = arith.constant 3 : index
    %c0_117 = arith.constant 0 : index
    %c0_118 = arith.constant 0 : index
    %160 = vector.load %arg4[%c0_115, %c3_116, %c0_117, %c0_118] : memref<3x4x1x8xf32, #tpu.memory_space<vmem>>, vector<1x1x1x8xf32>
    %161 = vector.shape_cast %160 : vector<1x1x1x8xf32> to vector<1x8xf32>
    %162 = vector.broadcast %161 : vector<1x8xf32> to vector<16x8xf32>
    %163 = arith.addf %159, %162 : vector<16x8xf32>
    %c1_119 = arith.constant 1 : index
    %c3_120 = arith.constant 3 : index
    %c0_121 = arith.constant 0 : index
    %c0_122 = arith.constant 0 : index
    %164 = vector.load %arg3[%c1_119, %c3_120, %c0_121, %c0_122] : memref<3x4x32x8xf32, #tpu.memory_space<vmem>>, vector<1x1x32x8xf32>
    %165 = vector.shape_cast %164 : vector<1x1x32x8xf32> to vector<32x8xf32>
    %166 = arith.truncf %165 : vector<32x8xf32> to vector<32x8xbf16>
    %cst_123 = arith.constant dense<0.000000e+00> : vector<16x8xf32>
    %167 = tpu.matmul %4, %166, %cst_123 {dimension_numbers = #tpu.dot_dimension_numbers<[1], [0], [0], [1], [0, 0, 1, 1], [], []>} : vector<16x32xbf16>, vector<32x8xbf16>, vector<16x8xf32> -> vector<16x8xf32>
    %c1_124 = arith.constant 1 : index
    %c3_125 = arith.constant 3 : index
    %c0_126 = arith.constant 0 : index
    %c0_127 = arith.constant 0 : index
    %168 = vector.load %arg4[%c1_124, %c3_125, %c0_126, %c0_127] : memref<3x4x1x8xf32, #tpu.memory_space<vmem>>, vector<1x1x1x8xf32>
    %169 = vector.shape_cast %168 : vector<1x1x1x8xf32> to vector<1x8xf32>
    %170 = vector.broadcast %169 : vector<1x8xf32> to vector<16x8xf32>
    %171 = arith.addf %167, %170 : vector<16x8xf32>
    %c2_128 = arith.constant 2 : index
    %c3_129 = arith.constant 3 : index
    %c0_130 = arith.constant 0 : index
    %c0_131 = arith.constant 0 : index
    %172 = vector.load %arg3[%c2_128, %c3_129, %c0_130, %c0_131] : memref<3x4x32x8xf32, #tpu.memory_space<vmem>>, vector<1x1x32x8xf32>
    %173 = vector.shape_cast %172 : vector<1x1x32x8xf32> to vector<32x8xf32>
    %174 = arith.truncf %173 : vector<32x8xf32> to vector<32x8xbf16>
    %cst_132 = arith.constant dense<0.000000e+00> : vector<16x8xf32>
    %175 = tpu.matmul %4, %174, %cst_132 {dimension_numbers = #tpu.dot_dimension_numbers<[1], [0], [0], [1], [0, 0, 1, 1], [], []>} : vector<16x32xbf16>, vector<32x8xbf16>, vector<16x8xf32> -> vector<16x8xf32>
    %c2_133 = arith.constant 2 : index
    %c3_134 = arith.constant 3 : index
    %c0_135 = arith.constant 0 : index
    %c0_136 = arith.constant 0 : index
    %176 = vector.load %arg4[%c2_133, %c3_134, %c0_135, %c0_136] : memref<3x4x1x8xf32, #tpu.memory_space<vmem>>, vector<1x1x1x8xf32>
    %177 = vector.shape_cast %176 : vector<1x1x1x8xf32> to vector<1x8xf32>
    %178 = vector.broadcast %177 : vector<1x8xf32> to vector<16x8xf32>
    %179 = arith.addf %175, %178 : vector<16x8xf32>
    %180 = arith.truncf %163 : vector<16x8xf32> to vector<16x8xbf16>
    %181 = arith.truncf %171 : vector<16x8xf32> to vector<16x8xbf16>
    %cst_137 = arith.constant dense<0.000000e+00> : vector<16x16xf32>
    %182 = tpu.matmul %180, %181, %cst_137 {dimension_numbers = #tpu.dot_dimension_numbers<[1], [1], [0], [0], [0, 0, 1, 0], [], []>} : vector<16x8xbf16>, vector<16x8xbf16>, vector<16x16xf32> -> vector<16x16xf32>
    %cst_138 = arith.constant 0.353553385 : f32
    %183 = vector.broadcast %cst_138 : f32 to vector<16x16xf32>
    %184 = arith.mulf %182, %183 : vector<16x16xf32>
    %185 = vector.broadcast %3 : vector<1x16xf32> to vector<16x16xf32>
    %186 = arith.addf %184, %185 : vector<16x16xf32>
    %cst_139 = arith.constant dense<0xFF800000> : vector<16xf32>
    %187 = vector.multi_reduction <maximumf>, %186, %cst_139 [1] : vector<16x16xf32> to vector<16xf32>
    %188 = vector.shape_cast %187 : vector<16xf32> to vector<16x1xf32>
    %189 = vector.broadcast %188 : vector<16x1xf32> to vector<16x16xf32>
    %190 = arith.subf %186, %189 : vector<16x16xf32>
    %191 = math.exp %190 : vector<16x16xf32>
    %cst_140 = arith.constant dense<0.000000e+00> : vector<16xf32>
    %192 = vector.multi_reduction <add>, %191, %cst_140 [1] : vector<16x16xf32> to vector<16xf32>
    %193 = vector.shape_cast %192 : vector<16xf32> to vector<16x1xf32>
    %194 = tpu.reciprocal %193 {approx = true} : vector<16x1xf32> -> vector<16x1xf32>
    %195 = vector.broadcast %194 : vector<16x1xf32> to vector<16x16xf32>
    %196 = arith.mulf %191, %195 : vector<16x16xf32>
    %197 = arith.truncf %196 : vector<16x16xf32> to vector<16x16xbf16>
    %198 = arith.truncf %179 : vector<16x8xf32> to vector<16x8xbf16>
    %cst_141 = arith.constant dense<0.000000e+00> : vector<16x8xf32>
    %199 = tpu.matmul %197, %198, %cst_141 {dimension_numbers = #tpu.dot_dimension_numbers<[1], [0], [0], [1], [0, 0, 1, 1], [], []>} : vector<16x16xbf16>, vector<16x8xbf16>, vector<16x8xf32> -> vector<16x8xf32>
    %200 = arith.truncf %199 : vector<16x8xf32> to vector<16x8xbf16>
    %c3_142 = arith.constant 3 : index
    %c0_143 = arith.constant 0 : index
    %c0_144 = arith.constant 0 : index
    %201 = vector.load %arg5[%c3_142, %c0_143, %c0_144] : memref<4x8x32xf32, #tpu.memory_space<vmem>>, vector<1x8x32xf32>
    %202 = vector.shape_cast %201 : vector<1x8x32xf32> to vector<8x32xf32>
    %203 = arith.truncf %202 : vector<8x32xf32> to vector<8x32xbf16>
    %cst_145 = arith.constant dense<0.000000e+00> : vector<16x32xf32>
    %204 = tpu.matmul %200, %203, %cst_145 {dimension_numbers = #tpu.dot_dimension_numbers<[1], [0], [0], [1], [0, 0, 1, 1], [], []>} : vector<16x8xbf16>, vector<8x32xbf16>, vector<16x32xf32> -> vector<16x32xf32>
    %205 = arith.addf %155, %204 : vector<16x32xf32>
    %c0_146 = arith.constant 0 : index
    %c0_147 = arith.constant 0 : index
    %206 = vector.load %arg6[%c0_146, %c0_147] : memref<1x32xf32, #tpu.memory_space<vmem>>, vector<1x32xf32>
    %207 = vector.broadcast %206 : vector<1x32xf32> to vector<16x32xf32>
    %208 = arith.addf %205, %207 : vector<16x32xf32>
    %209 = arith.addf %1, %208 : vector<16x32xf32>
    %c0_148 = arith.constant 0 : index
    %c0_149 = arith.constant 0 : index
    %210 = vector.load %arg7[%c0_148, %c0_149] : memref<1x32xf32, #tpu.memory_space<vmem>>, vector<1x32xf32>
    %c0_150 = arith.constant 0 : index
    %c0_151 = arith.constant 0 : index
    %211 = vector.load %arg8[%c0_150, %c0_151] : memref<1x32xf32, #tpu.memory_space<vmem>>, vector<1x32xf32>
    %cst_152 = arith.constant dense<0.000000e+00> : vector<16xf32>
    %212 = vector.multi_reduction <add>, %209, %cst_152 [1] : vector<16x32xf32> to vector<16xf32>
    %213 = vector.shape_cast %212 : vector<16xf32> to vector<16x1xf32>
    %cst_153 = arith.constant 3.200000e+01 : f32
    %214 = vector.broadcast %cst_153 : f32 to vector<16x1xf32>
    %215 = arith.divf %213, %214 : vector<16x1xf32>
    %216 = vector.broadcast %215 : vector<16x1xf32> to vector<16x32xf32>
    %217 = arith.subf %209, %216 : vector<16x32xf32>
    %218 = arith.mulf %217, %217 : vector<16x32xf32>
    %cst_154 = arith.constant dense<0.000000e+00> : vector<16xf32>
    %219 = vector.multi_reduction <add>, %218, %cst_154 [1] : vector<16x32xf32> to vector<16xf32>
    %220 = vector.shape_cast %219 : vector<16xf32> to vector<16x1xf32>
    %cst_155 = arith.constant 3.200000e+01 : f32
    %221 = vector.broadcast %cst_155 : f32 to vector<16x1xf32>
    %222 = arith.divf %220, %221 : vector<16x1xf32>
    %223 = vector.broadcast %215 : vector<16x1xf32> to vector<16x32xf32>
    %224 = arith.subf %209, %223 : vector<16x32xf32>
    %cst_156 = arith.constant 9.99999974E-6 : f32
    %225 = vector.broadcast %cst_156 : f32 to vector<16x1xf32>
    %226 = arith.addf %222, %225 : vector<16x1xf32>
    %227 = math.rsqrt %226 : vector<16x1xf32>
    %228 = vector.broadcast %227 : vector<16x1xf32> to vector<16x32xf32>
    %229 = arith.mulf %224, %228 : vector<16x32xf32>
    %230 = vector.broadcast %210 : vector<1x32xf32> to vector<16x32xf32>
    %231 = arith.mulf %229, %230 : vector<16x32xf32>
    %232 = vector.broadcast %211 : vector<1x32xf32> to vector<16x32xf32>
    %233 = arith.addf %231, %232 : vector<16x32xf32>
    %234 = arith.truncf %233 : vector<16x32xf32> to vector<16x32xbf16>
    %c0_157 = arith.constant 0 : index
    %c0_158 = arith.constant 0 : index
    %235 = vector.load %arg9[%c0_157, %c0_158] : memref<32x64xf32, #tpu.memory_space<vmem>>, vector<32x64xf32>
    %236 = arith.truncf %235 : vector<32x64xf32> to vector<32x64xbf16>
    %cst_159 = arith.constant dense<0.000000e+00> : vector<16x64xf32>
    %237 = tpu.matmul %234, %236, %cst_159 {dimension_numbers = #tpu.dot_dimension_numbers<[1], [0], [0], [1], [0, 0, 1, 1], [], []>} : vector<16x32xbf16>, vector<32x64xbf16>, vector<16x64xf32> -> vector<16x64xf32>
    %c0_160 = arith.constant 0 : index
    %c0_161 = arith.constant 0 : index
    %238 = vector.load %arg10[%c0_160, %c0_161] : memref<1x64xf32, #tpu.memory_space<vmem>>, vector<1x64xf32>
    %239 = vector.broadcast %238 : vector<1x64xf32> to vector<16x64xf32>
    %240 = arith.addf %237, %239 : vector<16x64xf32>
    %cst_162 = arith.constant 0.000000e+00 : f32
    %241 = vector.broadcast %cst_162 : f32 to vector<16x64xf32>
    %242 = arith.maximumf %240, %241 : vector<16x64xf32>
    %243 = arith.truncf %242 : vector<16x64xf32> to vector<16x64xbf16>
    %c0_163 = arith.constant 0 : index
    %c0_164 = arith.constant 0 : index
    %244 = vector.load %arg11[%c0_163, %c0_164] : memref<64x32xf32, #tpu.memory_space<vmem>>, vector<64x32xf32>
    %245 = arith.truncf %244 : vector<64x32xf32> to vector<64x32xbf16>
    %cst_165 = arith.constant dense<0.000000e+00> : vector<16x32xf32>
    %246 = tpu.matmul %243, %245, %cst_165 {dimension_numbers = #tpu.dot_dimension_numbers<[1], [0], [0], [1], [0, 0, 1, 1], [], []>} : vector<16x64xbf16>, vector<64x32xbf16>, vector<16x32xf32> -> vector<16x32xf32>
    %c0_166 = arith.constant 0 : index
    %c0_167 = arith.constant 0 : index
    %247 = vector.load %arg12[%c0_166, %c0_167] : memref<1x32xf32, #tpu.memory_space<vmem>>, vector<1x32xf32>
    %248 = vector.broadcast %247 : vector<1x32xf32> to vector<16x32xf32>
    %249 = arith.addf %246, %248 : vector<16x32xf32>
    %250 = arith.addf %233, %249 : vector<16x32xf32>
    %c0_168 = arith.constant 0 : index
    %c0_169 = arith.constant 0 : index
    %251 = vector.load %arg13[%c0_168, %c0_169] : memref<1x32xf32, #tpu.memory_space<vmem>>, vector<1x32xf32>
    %c0_170 = arith.constant 0 : index
    %c0_171 = arith.constant 0 : index
    %252 = vector.load %arg14[%c0_170, %c0_171] : memref<1x32xf32, #tpu.memory_space<vmem>>, vector<1x32xf32>
    %cst_172 = arith.constant dense<0.000000e+00> : vector<16xf32>
    %253 = vector.multi_reduction <add>, %250, %cst_172 [1] : vector<16x32xf32> to vector<16xf32>
    %254 = vector.shape_cast %253 : vector<16xf32> to vector<16x1xf32>
    %cst_173 = arith.constant 3.200000e+01 : f32
    %255 = vector.broadcast %cst_173 : f32 to vector<16x1xf32>
    %256 = arith.divf %254, %255 : vector<16x1xf32>
    %257 = vector.broadcast %256 : vector<16x1xf32> to vector<16x32xf32>
    %258 = arith.subf %250, %257 : vector<16x32xf32>
    %259 = arith.mulf %258, %258 : vector<16x32xf32>
    %cst_174 = arith.constant dense<0.000000e+00> : vector<16xf32>
    %260 = vector.multi_reduction <add>, %259, %cst_174 [1] : vector<16x32xf32> to vector<16xf32>
    %261 = vector.shape_cast %260 : vector<16xf32> to vector<16x1xf32>
    %cst_175 = arith.constant 3.200000e+01 : f32
    %262 = vector.broadcast %cst_175 : f32 to vector<16x1xf32>
    %263 = arith.divf %261, %262 : vector<16x1xf32>
    %264 = vector.broadcast %256 : vector<16x1xf32> to vector<16x32xf32>
    %265 = arith.subf %250, %264 : vector<16x32xf32>
    %cst_176 = arith.constant 9.99999974E-6 : f32
    %266 = vector.broadcast %cst_176 : f32 to vector<16x1xf32>
    %267 = arith.addf %263, %266 : vector<16x1xf32>
    %268 = math.rsqrt %267 : vector<16x1xf32>
    %269 = vector.broadcast %268 : vector<16x1xf32> to vector<16x32xf32>
    %270 = arith.mulf %265, %269 : vector<16x32xf32>
    %271 = vector.broadcast %251 : vector<1x32xf32> to vector<16x32xf32>
    %272 = arith.mulf %270, %271 : vector<16x32xf32>
    %273 = vector.broadcast %252 : vector<1x32xf32> to vector<16x32xf32>
    %274 = arith.addf %272, %273 : vector<16x32xf32>
    %c0_177 = arith.constant 0 : index
    %c0_178 = arith.constant 0 : index
    %c0_179 = arith.constant 0 : index
    %275 = vector.load %arg15[%c0_177, %c0_178, %c0_179] : memref<1x16x32xf32, #tpu.memory_space<vmem>>, vector<1x16x32xf32>
    %276 = vector.shape_cast %275 : vector<1x16x32xf32> to vector<16x32xf32>
    %277 = vector.shape_cast %274 : vector<16x32xf32> to vector<1x16x32xf32>
    tpu.vector_store %arg15[%c0_177, %c0_178, %c0_179], %277 {strides = array<i32>} : memref<1x16x32xf32, #tpu.memory_space<vmem>>, vector<1x16x32xf32>,
    return
  }
  func.func @transform_0(%arg0: i32) -> (i32, i32, i32) {
    %c0_i32 = arith.constant 0 : i32
    %c0_i32_0 = arith.constant 0 : i32
    %c0_i32_1 = arith.constant 0 : i32
    return %arg0, %c0_i32, %c0_i32_0 : i32, i32, i32
  }
  func.func @transform_1(%arg0: i32) -> (i32, i32, i32) {
    %c0_i32 = arith.constant 0 : i32
    %c0_i32_0 = arith.constant 0 : i32
    %c0_i32_1 = arith.constant 0 : i32
    return %arg0, %c0_i32, %c0_i32_0 : i32, i32, i32
  }
  func.func @transform_2(%arg0: i32) -> (i32, i32, i32, i32) {
    %c0_i32 = arith.constant 0 : i32
    %c0_i32_0 = arith.constant 0 : i32
    %c0_i32_1 = arith.constant 0 : i32
    %c0_i32_2 = arith.constant 0 : i32
    %c0_i32_3 = arith.constant 0 : i32
    return %c0_i32, %c0_i32_0, %c0_i32_1, %c0_i32_2 : i32, i32, i32, i32
  }
  func.func @transform_3(%arg0: i32) -> (i32, i32, i32, i32) {
    %c0_i32 = arith.constant 0 : i32
    %c0_i32_0 = arith.constant 0 : i32
    %c0_i32_1 = arith.constant 0 : i32
    %c0_i32_2 = arith.constant 0 : i32
    %c0_i32_3 = arith.constant 0 : i32
    return %c0_i32, %c0_i32_0, %c0_i32_1, %c0_i32_2 : i32, i32, i32, i32
  }
  func.func @transform_4(%arg0: i32) -> (i32, i32, i32) {
    %c0_i32 = arith.constant 0 : i32
    %c0_i32_0 = arith.constant 0 : i32
    %c0_i32_1 = arith.constant 0 : i32
    %c0_i32_2 = arith.constant 0 : i32
    return %c0_i32, %c0_i32_0, %c0_i32_1 : i32, i32, i32
  }
  func.func @transform_5(%arg0: i32) -> (i32, i32) {
    %c0_i32 = arith.constant 0 : i32
    %c0_i32_0 = arith.constant 0 : i32
    %c0_i32_1 = arith.constant 0 : i32
    return %c0_i32, %c0_i32_0 : i32, i32
  }
  func.func @transform_6(%arg0: i32) -> (i32, i32) {
    %c0_i32 = arith.constant 0 : i32
    %c0_i32_0 = arith.constant 0 : i32
    %c0_i32_1 = arith.constant 0 : i32
    return %c0_i32, %c0_i32_0 : i32, i32
  }
  func.func @transform_7(%arg0: i32) -> (i32, i32) {
    %c0_i32 = arith.constant 0 : i32
    %c0_i32_0 = arith.constant 0 : i32
    %c0_i32_1 = arith.constant 0 : i32
    return %c0_i32, %c0_i32_0 : i32, i32
  }
  func.func @transform_8(%arg0: i32) -> (i32, i32) {
    %c0_i32 = arith.constant 0 : i32
    %c0_i32_0 = arith.constant 0 : i32
    %c0_i32_1 = arith.constant 0 : i32
    return %c0_i32, %c0_i32_0 : i32, i32
  }
  func.func @transform_9(%arg0: i32) -> (i32, i32) {
    %c0_i32 = arith.constant 0 : i32
    %c0_i32_0 = arith.constant 0 : i32
    %c0_i32_1 = arith.constant 0 : i32
    return %c0_i32, %c0_i32_0 : i32, i32
  }
  func.func @transform_10(%arg0: i32) -> (i32, i32) {
    %c0_i32 = arith.constant 0 : i32
    %c0_i32_0 = arith.constant 0 : i32
    %c0_i32_1 = arith.constant 0 : i32
    return %c0_i32, %c0_i32_0 : i32, i32
  }
  func.func @transform_11(%arg0: i32) -> (i32, i32) {
    %c0_i32 = arith.constant 0 : i32
    %c0_i32_0 = arith.constant 0 : i32
    %c0_i32_1 = arith.constant 0 : i32
    return %c0_i32, %c0_i32_0 : i32, i32
  }
  func.func @transform_12(%arg0: i32) -> (i32, i32) {
    %c0_i32 = arith.constant 0 : i32
    %c0_i32_0 = arith.constant 0 : i32
    %c0_i32_1 = arith.constant 0 : i32
    return %c0_i32, %c0_i32_0 : i32, i32
  }
  func.func @transform_13(%arg0: i32) -> (i32, i32) {
    %c0_i32 = arith.constant 0 : i32
    %c0_i32_0 = arith.constant 0 : i32
    %c0_i32_1 = arith.constant 0 : i32
    return %c0_i32, %c0_i32_0 : i32, i32
  }
  func.func @transform_14(%arg0: i32) -> (i32, i32, i32) {
    %c0_i32 = arith.constant 0 : i32
    %c0_i32_0 = arith.constant 0 : i32
    %c0_i32_1 = arith.constant 0 : i32
    return %arg0, %c0_i32, %c0_i32_0 : i32, i32, i32
  }
}

module attributes {stable_mosaic.version = 11 : i64} {
  func.func @_ins_head_kernel(%arg0: i32, %arg1: memref<1x15x64xf32, #tpu.memory_space<vmem>>, %arg2: memref<64x128xf32, #tpu.memory_space<vmem>>, %arg3: memref<1x128xf32, #tpu.memory_space<vmem>>, %arg4: memref<1x15x128xf32, #tpu.memory_space<vmem>>) attributes {dimension_semantics = [#tpu.dimension_semantics<parallel>], iteration_bounds = array<i64: 2>, scalar_prefetch = 0 : i64, scratch_operands = 0 : i64, tpu.core_type = #tpu.core_type<tc>, window_params = [{transform_indices = @transform_0, window_bounds = array<i64: 1, 15, 64>}, {pipeline_mode = #tpu.pipeline_mode<synchronous>, transform_indices = @transform_1, window_bounds = array<i64: 64, 128>}, {pipeline_mode = #tpu.pipeline_mode<synchronous>, transform_indices = @transform_2, window_bounds = array<i64: 1, 128>}, {transform_indices = @transform_3, window_bounds = array<i64: 1, 15, 128>}]} {
    %c0 = arith.constant 0 : index
    %c0_0 = arith.constant 0 : index
    %c0_1 = arith.constant 0 : index
    %0 = vector.load %arg1[%c0, %c0_0, %c0_1] : memref<1x15x64xf32, #tpu.memory_space<vmem>>, vector<1x15x64xf32>
    %1 = vector.shape_cast %0 : vector<1x15x64xf32> to vector<15x64xf32>
    %2 = arith.truncf %1 : vector<15x64xf32> to vector<15x64xbf16>
    %c0_2 = arith.constant 0 : index
    %c0_3 = arith.constant 0 : index
    %3 = vector.load %arg2[%c0_2, %c0_3] : memref<64x128xf32, #tpu.memory_space<vmem>>, vector<64x128xf32>
    %4 = arith.truncf %3 : vector<64x128xf32> to vector<64x128xbf16>
    %cst = arith.constant dense<0.000000e+00> : vector<15x128xf32>
    %5 = tpu.matmul %2, %4, %cst {dimension_numbers = #tpu.dot_dimension_numbers<[1], [0], [0], [1], [0, 0, 1, 1], [], []>} : vector<15x64xbf16>, vector<64x128xbf16>, vector<15x128xf32> -> vector<15x128xf32>
    %c0_4 = arith.constant 0 : index
    %c0_5 = arith.constant 0 : index
    %6 = vector.load %arg3[%c0_4, %c0_5] : memref<1x128xf32, #tpu.memory_space<vmem>>, vector<1x128xf32>
    %7 = vector.broadcast %6 : vector<1x128xf32> to vector<15x128xf32>
    %8 = arith.addf %5, %7 : vector<15x128xf32>
    %c0_6 = arith.constant 0 : index
    %c0_7 = arith.constant 0 : index
    %c0_8 = arith.constant 0 : index
    %9 = vector.load %arg4[%c0_6, %c0_7, %c0_8] : memref<1x15x128xf32, #tpu.memory_space<vmem>>, vector<1x15x128xf32>
    %10 = vector.shape_cast %9 : vector<1x15x128xf32> to vector<15x128xf32>
    %11 = vector.shape_cast %8 : vector<15x128xf32> to vector<1x15x128xf32>
    tpu.vector_store %arg4[%c0_6, %c0_7, %c0_8], %11 {strides = array<i32>} : memref<1x15x128xf32, #tpu.memory_space<vmem>>, vector<1x15x128xf32>,
    return
  }
  func.func @transform_0(%arg0: i32) -> (i32, i32, i32) {
    %c0_i32 = arith.constant 0 : i32
    %c0_i32_0 = arith.constant 0 : i32
    %c0_i32_1 = arith.constant 0 : i32
    return %arg0, %c0_i32, %c0_i32_0 : i32, i32, i32
  }
  func.func @transform_1(%arg0: i32) -> (i32, i32) {
    %c0_i32 = arith.constant 0 : i32
    %c0_i32_0 = arith.constant 0 : i32
    %c0_i32_1 = arith.constant 0 : i32
    return %c0_i32, %c0_i32_0 : i32, i32
  }
  func.func @transform_2(%arg0: i32) -> (i32, i32) {
    %c0_i32 = arith.constant 0 : i32
    %c0_i32_0 = arith.constant 0 : i32
    %c0_i32_1 = arith.constant 0 : i32
    return %c0_i32, %c0_i32_0 : i32, i32
  }
  func.func @transform_3(%arg0: i32) -> (i32, i32, i32) {
    %c0_i32 = arith.constant 0 : i32
    %c0_i32_0 = arith.constant 0 : i32
    %c0_i32_1 = arith.constant 0 : i32
    return %arg0, %c0_i32, %c0_i32_0 : i32, i32, i32
  }
}

module attributes {stable_mosaic.version = 11 : i64} {
  func.func @_tail_kernel(%arg0: i32, %arg1: memref<1x16x32xf32, #tpu.memory_space<vmem>>, %arg2: memref<1x16x32xf32, #tpu.memory_space<vmem>>, %arg3: memref<1x16x1xf32, #tpu.memory_space<vmem>>, %arg4: memref<1x16x32xf32, #tpu.memory_space<vmem>>, %arg5: memref<1x16x32xf32, #tpu.memory_space<vmem>>, %arg6: memref<1x16x32xf32, #tpu.memory_space<vmem>>, %arg7: memref<32x64xf32, #tpu.memory_space<vmem>>, %arg8: memref<1x64xf32, #tpu.memory_space<vmem>>, %arg9: memref<64x32xf32, #tpu.memory_space<vmem>>, %arg10: memref<1x32xf32, #tpu.memory_space<vmem>>, %arg11: memref<32x128xf32, #tpu.memory_space<vmem>>, %arg12: memref<32x128xf32, #tpu.memory_space<vmem>>, %arg13: memref<32x128xf32, #tpu.memory_space<vmem>>, %arg14: memref<32x128xf32, #tpu.memory_space<vmem>>, %arg15: memref<1x128xf32, #tpu.memory_space<vmem>>, %arg16: memref<1x16x128xf32, #tpu.memory_space<vmem>>, %arg17: memref<1x16x32xf32, #tpu.memory_space<vmem>>) attributes {dimension_semantics = [#tpu.dimension_semantics<parallel>], iteration_bounds = array<i64: 2>, scalar_prefetch = 0 : i64, scratch_operands = 0 : i64, tpu.core_type = #tpu.core_type<tc>, window_params = [{transform_indices = @transform_0, window_bounds = array<i64: 1, 16, 32>}, {transform_indices = @transform_1, window_bounds = array<i64: 1, 16, 32>}, {transform_indices = @transform_2, window_bounds = array<i64: 1, 16, 1>}, {transform_indices = @transform_3, window_bounds = array<i64: 1, 16, 32>}, {transform_indices = @transform_4, window_bounds = array<i64: 1, 16, 32>}, {transform_indices = @transform_5, window_bounds = array<i64: 1, 16, 32>}, {pipeline_mode = #tpu.pipeline_mode<synchronous>, transform_indices = @transform_6, window_bounds = array<i64: 32, 64>}, {pipeline_mode = #tpu.pipeline_mode<synchronous>, transform_indices = @transform_7, window_bounds = array<i64: 1, 64>}, {pipeline_mode = #tpu.pipeline_mode<synchronous>, transform_indices = @transform_8, window_bounds = array<i64: 64, 32>}, {pipeline_mode = #tpu.pipeline_mode<synchronous>, transform_indices = @transform_9, window_bounds = array<i64: 1, 32>}, {pipeline_mode = #tpu.pipeline_mode<synchronous>, transform_indices = @transform_10, window_bounds = array<i64: 32, 128>}, {pipeline_mode = #tpu.pipeline_mode<synchronous>, transform_indices = @transform_11, window_bounds = array<i64: 32, 128>}, {pipeline_mode = #tpu.pipeline_mode<synchronous>, transform_indices = @transform_12, window_bounds = array<i64: 32, 128>}, {pipeline_mode = #tpu.pipeline_mode<synchronous>, transform_indices = @transform_13, window_bounds = array<i64: 32, 128>}, {pipeline_mode = #tpu.pipeline_mode<synchronous>, transform_indices = @transform_14, window_bounds = array<i64: 1, 128>}, {transform_indices = @transform_15, window_bounds = array<i64: 1, 16, 128>}, {transform_indices = @transform_16, window_bounds = array<i64: 1, 16, 32>}]} {
    %c0 = arith.constant 0 : index
    %c0_0 = arith.constant 0 : index
    %c0_1 = arith.constant 0 : index
    %0 = vector.load %arg1[%c0, %c0_0, %c0_1] : memref<1x16x32xf32, #tpu.memory_space<vmem>>, vector<1x16x32xf32>
    %1 = vector.shape_cast %0 : vector<1x16x32xf32> to vector<16x32xf32>
    %c0_2 = arith.constant 0 : index
    %c0_3 = arith.constant 0 : index
    %c0_4 = arith.constant 0 : index
    %2 = vector.load %arg2[%c0_2, %c0_3, %c0_4] : memref<1x16x32xf32, #tpu.memory_space<vmem>>, vector<1x16x32xf32>
    %3 = vector.shape_cast %2 : vector<1x16x32xf32> to vector<16x32xf32>
    %c0_5 = arith.constant 0 : index
    %c0_6 = arith.constant 0 : index
    %c0_7 = arith.constant 0 : index
    %4 = vector.load %arg3[%c0_5, %c0_6, %c0_7] : memref<1x16x1xf32, #tpu.memory_space<vmem>>, vector<1x16x1xf32>
    %5 = vector.shape_cast %4 : vector<1x16x1xf32> to vector<16x1xf32>
    %6 = arith.truncf %3 : vector<16x32xf32> to vector<16x32xbf16>
    %c0_8 = arith.constant 0 : index
    %c0_9 = arith.constant 0 : index
    %7 = vector.load %arg7[%c0_8, %c0_9] : memref<32x64xf32, #tpu.memory_space<vmem>>, vector<32x64xf32>
    %8 = arith.truncf %7 : vector<32x64xf32> to vector<32x64xbf16>
    %cst = arith.constant dense<0.000000e+00> : vector<16x64xf32>
    %9 = tpu.matmul %6, %8, %cst {dimension_numbers = #tpu.dot_dimension_numbers<[1], [0], [0], [1], [0, 0, 1, 1], [], []>} : vector<16x32xbf16>, vector<32x64xbf16>, vector<16x64xf32> -> vector<16x64xf32>
    %c0_10 = arith.constant 0 : index
    %c0_11 = arith.constant 0 : index
    %10 = vector.load %arg8[%c0_10, %c0_11] : memref<1x64xf32, #tpu.memory_space<vmem>>, vector<1x64xf32>
    %11 = vector.broadcast %10 : vector<1x64xf32> to vector<16x64xf32>
    %12 = arith.addf %9, %11 : vector<16x64xf32>
    %cst_12 = arith.constant 0.000000e+00 : f32
    %13 = vector.broadcast %cst_12 : f32 to vector<16x64xf32>
    %14 = arith.maximumf %12, %13 : vector<16x64xf32>
    %15 = arith.truncf %14 : vector<16x64xf32> to vector<16x64xbf16>
    %c0_13 = arith.constant 0 : index
    %c0_14 = arith.constant 0 : index
    %16 = vector.load %arg9[%c0_13, %c0_14] : memref<64x32xf32, #tpu.memory_space<vmem>>, vector<64x32xf32>
    %17 = arith.truncf %16 : vector<64x32xf32> to vector<64x32xbf16>
    %cst_15 = arith.constant dense<0.000000e+00> : vector<16x32xf32>
    %18 = tpu.matmul %15, %17, %cst_15 {dimension_numbers = #tpu.dot_dimension_numbers<[1], [0], [0], [1], [0, 0, 1, 1], [], []>} : vector<16x64xbf16>, vector<64x32xbf16>, vector<16x32xf32> -> vector<16x32xf32>
    %c0_16 = arith.constant 0 : index
    %c0_17 = arith.constant 0 : index
    %19 = vector.load %arg10[%c0_16, %c0_17] : memref<1x32xf32, #tpu.memory_space<vmem>>, vector<1x32xf32>
    %20 = vector.broadcast %19 : vector<1x32xf32> to vector<16x32xf32>
    %21 = arith.addf %18, %20 : vector<16x32xf32>
    %22 = vector.broadcast %5 : vector<16x1xf32> to vector<16x32xf32>
    %23 = arith.mulf %22, %21 : vector<16x32xf32>
    %24 = arith.addf %3, %23 : vector<16x32xf32>
    %c0_18 = arith.constant 0 : index
    %c0_19 = arith.constant 0 : index
    %c0_20 = arith.constant 0 : index
    %25 = vector.load %arg4[%c0_18, %c0_19, %c0_20] : memref<1x16x32xf32, #tpu.memory_space<vmem>>, vector<1x16x32xf32>
    %26 = vector.shape_cast %25 : vector<1x16x32xf32> to vector<16x32xf32>
    %27 = arith.addf %24, %26 : vector<16x32xf32>
    %c0_21 = arith.constant 0 : index
    %c0_22 = arith.constant 0 : index
    %c0_23 = arith.constant 0 : index
    %28 = vector.load %arg5[%c0_21, %c0_22, %c0_23] : memref<1x16x32xf32, #tpu.memory_space<vmem>>, vector<1x16x32xf32>
    %29 = vector.shape_cast %28 : vector<1x16x32xf32> to vector<16x32xf32>
    %30 = arith.addf %27, %29 : vector<16x32xf32>
    %31 = arith.truncf %1 : vector<16x32xf32> to vector<16x32xbf16>
    %c0_24 = arith.constant 0 : index
    %c0_25 = arith.constant 0 : index
    %32 = vector.load %arg11[%c0_24, %c0_25] : memref<32x128xf32, #tpu.memory_space<vmem>>, vector<32x128xf32>
    %33 = arith.truncf %32 : vector<32x128xf32> to vector<32x128xbf16>
    %cst_26 = arith.constant dense<0.000000e+00> : vector<16x128xf32>
    %34 = tpu.matmul %31, %33, %cst_26 {dimension_numbers = #tpu.dot_dimension_numbers<[1], [0], [0], [1], [0, 0, 1, 1], [], []>} : vector<16x32xbf16>, vector<32x128xbf16>, vector<16x128xf32> -> vector<16x128xf32>
    %35 = arith.truncf %24 : vector<16x32xf32> to vector<16x32xbf16>
    %c0_27 = arith.constant 0 : index
    %c0_28 = arith.constant 0 : index
    %36 = vector.load %arg12[%c0_27, %c0_28] : memref<32x128xf32, #tpu.memory_space<vmem>>, vector<32x128xf32>
    %37 = arith.truncf %36 : vector<32x128xf32> to vector<32x128xbf16>
    %cst_29 = arith.constant dense<0.000000e+00> : vector<16x128xf32>
    %38 = tpu.matmul %35, %37, %cst_29 {dimension_numbers = #tpu.dot_dimension_numbers<[1], [0], [0], [1], [0, 0, 1, 1], [], []>} : vector<16x32xbf16>, vector<32x128xbf16>, vector<16x128xf32> -> vector<16x128xf32>
    %39 = arith.addf %34, %38 : vector<16x128xf32>
    %40 = arith.truncf %27 : vector<16x32xf32> to vector<16x32xbf16>
    %c0_30 = arith.constant 0 : index
    %c0_31 = arith.constant 0 : index
    %41 = vector.load %arg13[%c0_30, %c0_31] : memref<32x128xf32, #tpu.memory_space<vmem>>, vector<32x128xf32>
    %42 = arith.truncf %41 : vector<32x128xf32> to vector<32x128xbf16>
    %cst_32 = arith.constant dense<0.000000e+00> : vector<16x128xf32>
    %43 = tpu.matmul %40, %42, %cst_32 {dimension_numbers = #tpu.dot_dimension_numbers<[1], [0], [0], [1], [0, 0, 1, 1], [], []>} : vector<16x32xbf16>, vector<32x128xbf16>, vector<16x128xf32> -> vector<16x128xf32>
    %44 = arith.addf %39, %43 : vector<16x128xf32>
    %45 = arith.truncf %30 : vector<16x32xf32> to vector<16x32xbf16>
    %c0_33 = arith.constant 0 : index
    %c0_34 = arith.constant 0 : index
    %46 = vector.load %arg14[%c0_33, %c0_34] : memref<32x128xf32, #tpu.memory_space<vmem>>, vector<32x128xf32>
    %47 = arith.truncf %46 : vector<32x128xf32> to vector<32x128xbf16>
    %cst_35 = arith.constant dense<0.000000e+00> : vector<16x128xf32>
    %48 = tpu.matmul %45, %47, %cst_35 {dimension_numbers = #tpu.dot_dimension_numbers<[1], [0], [0], [1], [0, 0, 1, 1], [], []>} : vector<16x32xbf16>, vector<32x128xbf16>, vector<16x128xf32> -> vector<16x128xf32>
    %49 = arith.addf %44, %48 : vector<16x128xf32>
    %c0_36 = arith.constant 0 : index
    %c0_37 = arith.constant 0 : index
    %50 = vector.load %arg15[%c0_36, %c0_37] : memref<1x128xf32, #tpu.memory_space<vmem>>, vector<1x128xf32>
    %51 = vector.broadcast %50 : vector<1x128xf32> to vector<16x128xf32>
    %52 = arith.addf %49, %51 : vector<16x128xf32>
    %c0_38 = arith.constant 0 : index
    %c0_39 = arith.constant 0 : index
    %c0_40 = arith.constant 0 : index
    %53 = vector.load %arg16[%c0_38, %c0_39, %c0_40] : memref<1x16x128xf32, #tpu.memory_space<vmem>>, vector<1x16x128xf32>
    %54 = vector.shape_cast %53 : vector<1x16x128xf32> to vector<16x128xf32>
    %55 = vector.shape_cast %52 : vector<16x128xf32> to vector<1x16x128xf32>
    tpu.vector_store %arg16[%c0_38, %c0_39, %c0_40], %55 {strides = array<i32>} : memref<1x16x128xf32, #tpu.memory_space<vmem>>, vector<1x16x128xf32>,
    %c0_41 = arith.constant 0 : index
    %c0_42 = arith.constant 0 : index
    %c0_43 = arith.constant 0 : index
    %56 = vector.load %arg6[%c0_41, %c0_42, %c0_43] : memref<1x16x32xf32, #tpu.memory_space<vmem>>, vector<1x16x32xf32>
    %57 = vector.shape_cast %56 : vector<1x16x32xf32> to vector<16x32xf32>
    %58 = arith.addf %30, %57 : vector<16x32xf32>
    %c0_44 = arith.constant 0 : index
    %c0_45 = arith.constant 0 : index
    %c0_46 = arith.constant 0 : index
    %59 = vector.load %arg17[%c0_44, %c0_45, %c0_46] : memref<1x16x32xf32, #tpu.memory_space<vmem>>, vector<1x16x32xf32>
    %60 = vector.shape_cast %59 : vector<1x16x32xf32> to vector<16x32xf32>
    %61 = vector.shape_cast %58 : vector<16x32xf32> to vector<1x16x32xf32>
    tpu.vector_store %arg17[%c0_44, %c0_45, %c0_46], %61 {strides = array<i32>} : memref<1x16x32xf32, #tpu.memory_space<vmem>>, vector<1x16x32xf32>,
    return
  }
  func.func @transform_0(%arg0: i32) -> (i32, i32, i32) {
    %c0_i32 = arith.constant 0 : i32
    %c0_i32_0 = arith.constant 0 : i32
    %c0_i32_1 = arith.constant 0 : i32
    return %arg0, %c0_i32, %c0_i32_0 : i32, i32, i32
  }
  func.func @transform_1(%arg0: i32) -> (i32, i32, i32) {
    %c0_i32 = arith.constant 0 : i32
    %c0_i32_0 = arith.constant 0 : i32
    %c0_i32_1 = arith.constant 0 : i32
    return %arg0, %c0_i32, %c0_i32_0 : i32, i32, i32
  }
  func.func @transform_2(%arg0: i32) -> (i32, i32, i32) {
    %c0_i32 = arith.constant 0 : i32
    %c0_i32_0 = arith.constant 0 : i32
    %c0_i32_1 = arith.constant 0 : i32
    return %arg0, %c0_i32, %c0_i32_0 : i32, i32, i32
  }
  func.func @transform_3(%arg0: i32) -> (i32, i32, i32) {
    %c0_i32 = arith.constant 0 : i32
    %c0_i32_0 = arith.constant 0 : i32
    %c0_i32_1 = arith.constant 0 : i32
    return %arg0, %c0_i32, %c0_i32_0 : i32, i32, i32
  }
  func.func @transform_4(%arg0: i32) -> (i32, i32, i32) {
    %c0_i32 = arith.constant 0 : i32
    %c0_i32_0 = arith.constant 0 : i32
    %c0_i32_1 = arith.constant 0 : i32
    return %arg0, %c0_i32, %c0_i32_0 : i32, i32, i32
  }
  func.func @transform_5(%arg0: i32) -> (i32, i32, i32) {
    %c0_i32 = arith.constant 0 : i32
    %c0_i32_0 = arith.constant 0 : i32
    %c0_i32_1 = arith.constant 0 : i32
    return %arg0, %c0_i32, %c0_i32_0 : i32, i32, i32
  }
  func.func @transform_6(%arg0: i32) -> (i32, i32) {
    %c0_i32 = arith.constant 0 : i32
    %c0_i32_0 = arith.constant 0 : i32
    %c0_i32_1 = arith.constant 0 : i32
    return %c0_i32, %c0_i32_0 : i32, i32
  }
  func.func @transform_7(%arg0: i32) -> (i32, i32) {
    %c0_i32 = arith.constant 0 : i32
    %c0_i32_0 = arith.constant 0 : i32
    %c0_i32_1 = arith.constant 0 : i32
    return %c0_i32, %c0_i32_0 : i32, i32
  }
  func.func @transform_8(%arg0: i32) -> (i32, i32) {
    %c0_i32 = arith.constant 0 : i32
    %c0_i32_0 = arith.constant 0 : i32
    %c0_i32_1 = arith.constant 0 : i32
    return %c0_i32, %c0_i32_0 : i32, i32
  }
  func.func @transform_9(%arg0: i32) -> (i32, i32) {
    %c0_i32 = arith.constant 0 : i32
    %c0_i32_0 = arith.constant 0 : i32
    %c0_i32_1 = arith.constant 0 : i32
    return %c0_i32, %c0_i32_0 : i32, i32
  }
  func.func @transform_10(%arg0: i32) -> (i32, i32) {
    %c0_i32 = arith.constant 0 : i32
    %c0_i32_0 = arith.constant 0 : i32
    %c0_i32_1 = arith.constant 0 : i32
    return %c0_i32, %c0_i32_0 : i32, i32
  }
  func.func @transform_11(%arg0: i32) -> (i32, i32) {
    %c0_i32 = arith.constant 0 : i32
    %c0_i32_0 = arith.constant 0 : i32
    %c0_i32_1 = arith.constant 0 : i32
    return %c0_i32, %c0_i32_0 : i32, i32
  }
  func.func @transform_12(%arg0: i32) -> (i32, i32) {
    %c0_i32 = arith.constant 0 : i32
    %c0_i32_0 = arith.constant 0 : i32
    %c0_i32_1 = arith.constant 0 : i32
    return %c0_i32, %c0_i32_0 : i32, i32
  }
  func.func @transform_13(%arg0: i32) -> (i32, i32) {
    %c0_i32 = arith.constant 0 : i32
    %c0_i32_0 = arith.constant 0 : i32
    %c0_i32_1 = arith.constant 0 : i32
    return %c0_i32, %c0_i32_0 : i32, i32
  }
  func.func @transform_14(%arg0: i32) -> (i32, i32) {
    %c0_i32 = arith.constant 0 : i32
    %c0_i32_0 = arith.constant 0 : i32
    %c0_i32_1 = arith.constant 0 : i32
    return %c0_i32, %c0_i32_0 : i32, i32
  }
  func.func @transform_15(%arg0: i32) -> (i32, i32, i32) {
    %c0_i32 = arith.constant 0 : i32
    %c0_i32_0 = arith.constant 0 : i32
    %c0_i32_1 = arith.constant 0 : i32
    return %arg0, %c0_i32, %c0_i32_0 : i32, i32, i32
  }
  func.func @transform_16(%arg0: i32) -> (i32, i32, i32) {
    %c0_i32 = arith.constant 0 : i32
    %c0_i32_0 = arith.constant 0 : i32
    %c0_i32_1 = arith.constant 0 : i32
    return %arg0, %c0_i32, %c0_i32_0 : i32, i32, i32
  }
}

</mosaic_0001>

<llo_original>
// kernel: forward.6
$region0: #{forward.6}
  #allocation0 [shape = 'u32[]', space=smem, size = 0x4, offset = 0x4, fixed_abs, tag = 'smem constant byte address 0x4 - core index']
  #allocation1 [shape = 'u32[144,128]{1,0:T(1,128)}', space=vmem, size = 0x12000, scoped, tag = 'internal scratch']
  %s0 = inlined_call_operand.vmem [shape: f32[2,16,32], index: 0, kind: input, shape index: {}]
  %s1 = inlined_call_operand.vmem [shape: f32[2,1,16], index: 1, kind: input, shape index: {}]
  %s2 = inlined_call_operand.vmem [shape: f32[3,4,32,8], index: 2, kind: input, shape index: {}]
  %s3 = inlined_call_operand.vmem [shape: f32[3,4,1,8], index: 3, kind: input, shape index: {}]
  %s4 = inlined_call_operand.vmem [shape: f32[4,8,32], index: 4, kind: input, shape index: {}]
  %s5 = inlined_call_operand.vmem [shape: f32[1,32], index: 5, kind: input, shape index: {}]
  %s6 = inlined_call_operand.vmem [shape: f32[1,32], index: 6, kind: input, shape index: {}]
  %s7 = inlined_call_operand.vmem [shape: f32[1,32], index: 7, kind: input, shape index: {}]
  %s8 = inlined_call_operand.vmem [shape: f32[32,64], index: 8, kind: input, shape index: {}]
  %s9 = inlined_call_operand.vmem [shape: f32[1,64], index: 9, kind: input, shape index: {}]
  %s10 = inlined_call_operand.vmem [shape: f32[64,32], index: 10, kind: input, shape index: {}]
  %s11 = inlined_call_operand.vmem [shape: f32[1,32], index: 11, kind: input, shape index: {}]
  %s12 = inlined_call_operand.vmem [shape: f32[1,32], index: 12, kind: input, shape index: {}]
  %s13 = inlined_call_operand.vmem [shape: f32[1,32], index: 13, kind: input, shape index: {}]
  %s14 = inlined_call_operand.vmem [shape: f32[2,16,32], index: 14, kind: output, shape index: {}]
  %s15 = sld [smem:[#allocation0]]
  $region89: #{forward.6} parent=0
    _
  %s17 = ssub.s32 1, %s15
  %s18 = scalar_select 0, %s17, %s15
  loop: start=0, step=1, limit=4
  $region2: #{forward.6} parent=0 // loop_pre_header
    _
  $region3: #{forward.6} parent=0 // loop_header
    %s20 = sphi 0, %s24
    %p21 = scmp.ge.s32.totalorder %s20, 4
    %s30 = sphi 0, %s32
    %s33 = sphi 0, %s30
    %s34 = sphi 0, %s33
    %s50 = sphi 0, %s34
    %s56 = sphi 0, %s58
    %s59 = sphi 0, %s56
    %s60 = sphi 0, %s59
    %s76 = sphi 0, %s60
    %s80 = sphi 0, %s80
    %s82 = sphi 0, %s80
    %s83 = sphi 0, %s82
    %s97 = sphi 0, %s83
    %s101 = sphi 0, %s101
    %s103 = sphi 0, %s101
    %s104 = sphi 0, %s103
    %s118 = sphi 0, %s104
    %s122 = sphi 0, %s122
    %s124 = sphi 0, %s122
    %s125 = sphi 0, %s124
    %s139 = sphi 0, %s125
    %s143 = sphi 0, %s143
    %s145 = sphi 0, %s143
    %s146 = sphi 0, %s145
    %s160 = sphi 0, %s146
    %s164 = sphi 0, %s164
    %s166 = sphi 0, %s164
    %s167 = sphi 0, %s166
    %s181 = sphi 0, %s167
    %s185 = sphi 0, %s185
    %s187 = sphi 0, %s185
    %s188 = sphi 0, %s187
    %s202 = sphi 0, %s188
    %s206 = sphi 0, %s206
    %s208 = sphi 0, %s206
    %s209 = sphi 0, %s208
    %s223 = sphi 0, %s209
    %s227 = sphi 0, %s227
    %s229 = sphi 0, %s227
    %s230 = sphi 0, %s229
    %s244 = sphi 0, %s230
    %s248 = sphi 0, %s248
    %s250 = sphi 0, %s248
    %s251 = sphi 0, %s250
    %s265 = sphi 0, %s251
    %s269 = sphi 0, %s269
    %s271 = sphi 0, %s269
    %s272 = sphi 0, %s271
    %s286 = sphi 0, %s272
    %s290 = sphi 0, %s290
    %s292 = sphi 0, %s290
    %s293 = sphi 0, %s292
    %s307 = sphi 0, %s293
    %s311 = sphi 0, %s311
    %s313 = sphi 0, %s311
    %s314 = sphi 0, %s313
    %s328 = sphi 0, %s314
    %s334 = sphi 0, %s336
    %s337 = sphi 0, %s334
    %s338 = sphi 0, %s337
    %s354 = sphi 0, %s338
  $region4: #{forward.6} parent=0 // loop_header_branch
    %23 = sbr.rel (%p21) target = $region8
  $region5: #{forward.6} parent=0 // loop_body
    %s25 = ssub.s32 %s20, 1
    %s26 = ssub.s32 %s20, 2
    %s27 = sadd.s32 %s20, 1
    %s28 = ssub.s32 %s20, %s27
    %p29 = scmp.eq.s32.totalorder %s28, 0
    %s31 = sadd.s32 %s30, 1
    %s32 = scalar_select %p29, %s30, %s31
    %p35 = pneg %p29
    %p36 = scmp.eq.s32.totalorder %s20, 1
    %p37 = por %p35, %p36
    %p38 = scmp.ne.s32.totalorder %s30, %s33
    %p39 = scmp.eq.s32.totalorder %s20, 0
    %p40 = por %p38, %p39
    %p41 = scmp.ne.s32.totalorder %s30, %s33
    %p42 = scmp.eq.s32.totalorder %s25, 1
    %p43 = por %p41, %p42
    %p44 = scmp.ne.s32.totalorder %s33, %s34
    %p45 = scmp.eq.s32.totalorder %s25, 0
    %p46 = por %p44, %p45
    %p47 = scmp.ne.s32.totalorder %s33, %s34
    %p48 = scmp.eq.s32.totalorder %s26, 1
    %p49 = por %p47, %p48
    %p51 = scmp.ne.s32.totalorder %s34, %s50
    %p52 = scmp.eq.s32.totalorder %s26, 0
    %p53 = por %p51, %p52
    %s54 = ssub.s32 %s20, %s27
    %p55 = scmp.eq.s32.totalorder %s54, 0
    %s57 = sadd.s32 %s56, 1
    %s58 = scalar_select %p55, %s56, %s57
    %p61 = pneg %p55
    %p62 = scmp.eq.s32.totalorder %s20, 1
    %p63 = por %p61, %p62
    %p64 = scmp.ne.s32.totalorder %s56, %s59
    %p65 = scmp.eq.s32.totalorder %s20, 0
    %p66 = por %p64, %p65
    %p67 = scmp.ne.s32.totalorder %s56, %s59
    %p68 = scmp.eq.s32.totalorder %s25, 1
    %p69 = por %p67, %p68
    %p70 = scmp.ne.s32.totalorder %s59, %s60
    %p71 = scmp.eq.s32.totalorder %s25, 0
    %p72 = por %p70, %p71
    %p73 = scmp.ne.s32.totalorder %s59, %s60
    %p74 = scmp.eq.s32.totalorder %s26, 1
    %p75 = por %p73, %p74
    %p77 = scmp.ne.s32.totalorder %s60, %s76
    %p78 = scmp.eq.s32.totalorder %s26, 0
    %p79 = por %p77, %p78
    %s81 = sadd.s32 %s80, 1
    %p84 = scmp.eq.s32.totalorder %s20, 1
    %p85 = scmp.ne.s32.totalorder %s80, %s82
    %p86 = scmp.eq.s32.totalorder %s20, 0
    %p87 = por %p85, %p86
    %p88 = scmp.ne.s32.totalorder %s80, %s82
    %p89 = scmp.eq.s32.totalorder %s25, 1
    %p90 = por %p88, %p89
    %p91 = scmp.ne.s32.totalorder %s82, %s83
    %p92 = scmp.eq.s32.totalorder %s25, 0
    %p93 = por %p91, %p92
    %p94 = scmp.ne.s32.totalorder %s82, %s83
    %p95 = scmp.eq.s32.totalorder %s26, 1
    %p96 = por %p94, %p95
    %p98 = scmp.ne.s32.totalorder %s83, %s97
    %p99 = scmp.eq.s32.totalorder %s26, 0
    %p100 = por %p98, %p99
    %s102 = sadd.s32 %s101, 1
    %p105 = scmp.eq.s32.totalorder %s20, 1
    %p106 = scmp.ne.s32.totalorder %s101, %s103
    %p107 = scmp.eq.s32.totalorder %s20, 0
    %p108 = por %p106, %p107
    %p109 = scmp.ne.s32.totalorder %s101, %s103
    %p110 = scmp.eq.s32.totalorder %s25, 1
    %p111 = por %p109, %p110
    %p112 = scmp.ne.s32.totalorder %s103, %s104
    %p113 = scmp.eq.s32.totalorder %s25, 0
    %p114 = por %p112, %p113
    %p115 = scmp.ne.s32.totalorder %s103, %s104
    %p116 = scmp.eq.s32.totalorder %s26, 1
    %p117 = por %p115, %p116
    %p119 = scmp.ne.s32.totalorder %s104, %s118
    %p120 = scmp.eq.s32.totalorder %s26, 0
    %p121 = por %p119, %p120
    %s123 = sadd.s32 %s122, 1
    %p126 = scmp.eq.s32.totalorder %s20, 1
    %p127 = scmp.ne.s32.totalorder %s122, %s124
    %p128 = scmp.eq.s32.totalorder %s20, 0
    %p129 = por %p127, %p128
    %p130 = scmp.ne.s32.totalorder %s122, %s124
    %p131 = scmp.eq.s32.totalorder %s25, 1
    %p132 = por %p130, %p131
    %p133 = scmp.ne.s32.totalorder %s124, %s125
    %p134 = scmp.eq.s32.totalorder %s25, 0
    %p135 = por %p133, %p134
    %p136 = scmp.ne.s32.totalorder %s124, %s125
    %p137 = scmp.eq.s32.totalorder %s26, 1
    %p138 = por %p136, %p137
    %p140 = scmp.ne.s32.totalorder %s125, %s139
    %p141 = scmp.eq.s32.totalorder %s26, 0
    %p142 = por %p140, %p141
    %s144 = sadd.s32 %s143, 1
    %p147 = scmp.eq.s32.totalorder %s20, 1
    %p148 = scmp.ne.s32.totalorder %s143, %s145
    %p149 = scmp.eq.s32.totalorder %s20, 0
    %p150 = por %p148, %p149
    %p151 = scmp.ne.s32.totalorder %s143, %s145
    %p152 = scmp.eq.s32.totalorder %s25, 1
    %p153 = por %p151, %p152
    %p154 = scmp.ne.s32.totalorder %s145, %s146
    %p155 = scmp.eq.s32.totalorder %s25, 0
    %p156 = por %p154, %p155
    %p157 = scmp.ne.s32.totalorder %s145, %s146
    %p158 = scmp.eq.s32.totalorder %s26, 1
    %p159 = por %p157, %p158
    %p161 = scmp.ne.s32.totalorder %s146, %s160
    %p162 = scmp.eq.s32.totalorder %s26, 0
    %p163 = por %p161, %p162
    %s165 = sadd.s32 %s164, 1
    %p168 = scmp.eq.s32.totalorder %s20, 1
    %p169 = scmp.ne.s32.totalorder %s164, %s166
    %p170 = scmp.eq.s32.totalorder %s20, 0
    %p171 = por %p169, %p170
    %p172 = scmp.ne.s32.totalorder %s164, %s166
    %p173 = scmp.eq.s32.totalorder %s25, 1
    %p174 = por %p172, %p173
    %p175 = scmp.ne.s32.totalorder %s166, %s167
    %p176 = scmp.eq.s32.totalorder %s25, 0
    %p177 = por %p175, %p176
    %p178 = scmp.ne.s32.totalorder %s166, %s167
    %p179 = scmp.eq.s32.totalorder %s26, 1
    %p180 = por %p178, %p179
    %p182 = scmp.ne.s32.totalorder %s167, %s181
    %p183 = scmp.eq.s32.totalorder %s26, 0
    %p184 = por %p182, %p183
    %s186 = sadd.s32 %s185, 1
    %p189 = scmp.eq.s32.totalorder %s20, 1
    %p190 = scmp.ne.s32.totalorder %s185, %s187
    %p191 = scmp.eq.s32.totalorder %s20, 0
    %p192 = por %p190, %p191
    %p193 = scmp.ne.s32.totalorder %s185, %s187
    %p194 = scmp.eq.s32.totalorder %s25, 1
    %p195 = por %p193, %p194
    %p196 = scmp.ne.s32.totalorder %s187, %s188
    %p197 = scmp.eq.s32.totalorder %s25, 0
    %p198 = por %p196, %p197
    %p199 = scmp.ne.s32.totalorder %s187, %s188
    %p200 = scmp.eq.s32.totalorder %s26, 1
    %p201 = por %p199, %p200
    %p203 = scmp.ne.s32.totalorder %s188, %s202
    %p204 = scmp.eq.s32.totalorder %s26, 0
    %p205 = por %p203, %p204
    %s207 = sadd.s32 %s206, 1
    %p210 = scmp.eq.s32.totalorder %s20, 1
    %p211 = scmp.ne.s32.totalorder %s206, %s208
    %p212 = scmp.eq.s32.totalorder %s20, 0
    %p213 = por %p211, %p212
    %p214 = scmp.ne.s32.totalorder %s206, %s208
    %p215 = scmp.eq.s32.totalorder %s25, 1
    %p216 = por %p214, %p215
    %p217 = scmp.ne.s32.totalorder %s208, %s209
    %p218 = scmp.eq.s32.totalorder %s25, 0
    %p219 = por %p217, %p218
    %p220 = scmp.ne.s32.totalorder %s208, %s209
    %p221 = scmp.eq.s32.totalorder %s26, 1
    %p222 = por %p220, %p221
    %p224 = scmp.ne.s32.totalorder %s209, %s223
    %p225 = scmp.eq.s32.totalorder %s26, 0
    %p226 = por %p224, %p225
    %s228 = sadd.s32 %s227, 1
    %p231 = scmp.eq.s32.totalorder %s20, 1
    %p232 = scmp.ne.s32.totalorder %s227, %s229
    %p233 = scmp.eq.s32.totalorder %s20, 0
    %p234 = por %p232, %p233
    %p235 = scmp.ne.s32.totalorder %s227, %s229
    %p236 = scmp.eq.s32.totalorder %s25, 1
    %p237 = por %p235, %p236
    %p238 = scmp.ne.s32.totalorder %s229, %s230
    %p239 = scmp.eq.s32.totalorder %s25, 0
    %p240 = por %p238, %p239
    %p241 = scmp.ne.s32.totalorder %s229, %s230
    %p242 = scmp.eq.s32.totalorder %s26, 1
    %p243 = por %p241, %p242
    %p245 = scmp.ne.s32.totalorder %s230, %s244
    %p246 = scmp.eq.s32.totalorder %s26, 0
    %p247 = por %p245, %p246
    %s249 = sadd.s32 %s248, 1
    %p252 = scmp.eq.s32.totalorder %s20, 1
    %p253 = scmp.ne.s32.totalorder %s248, %s250
    %p254 = scmp.eq.s32.totalorder %s20, 0
    %p255 = por %p253, %p254
    %p256 = scmp.ne.s32.totalorder %s248, %s250
    %p257 = scmp.eq.s32.totalorder %s25, 1
    %p258 = por %p256, %p257
    %p259 = scmp.ne.s32.totalorder %s250, %s251
    %p260 = scmp.eq.s32.totalorder %s25, 0
    %p261 = por %p259, %p260
    %p262 = scmp.ne.s32.totalorder %s250, %s251
    %p263 = scmp.eq.s32.totalorder %s26, 1
    %p264 = por %p262, %p263
    %p266 = scmp.ne.s32.totalorder %s251, %s265
    %p267 = scmp.eq.s32.totalorder %s26, 0
    %p268 = por %p266, %p267
    %s270 = sadd.s32 %s269, 1
    %p273 = scmp.eq.s32.totalorder %s20, 1
    %p274 = scmp.ne.s32.totalorder %s269, %s271
    %p275 = scmp.eq.s32.totalorder %s20, 0
    %p276 = por %p274, %p275
    %p277 = scmp.ne.s32.totalorder %s269, %s271
    %p278 = scmp.eq.s32.totalorder %s25, 1
    %p279 = por %p277, %p278
    %p280 = scmp.ne.s32.totalorder %s271, %s272
    %p281 = scmp.eq.s32.totalorder %s25, 0
    %p282 = por %p280, %p281
    %p283 = scmp.ne.s32.totalorder %s271, %s272
    %p284 = scmp.eq.s32.totalorder %s26, 1
    %p285 = por %p283, %p284
    %p287 = scmp.ne.s32.totalorder %s272, %s286
    %p288 = scmp.eq.s32.totalorder %s26, 0
    %p289 = por %p287, %p288
    %s291 = sadd.s32 %s290, 1
    %p294 = scmp.eq.s32.totalorder %s20, 1
    %p295 = scmp.ne.s32.totalorder %s290, %s292
    %p296 = scmp.eq.s32.totalorder %s20, 0
    %p297 = por %p295, %p296
    %p298 = scmp.ne.s32.totalorder %s290, %s292
    %p299 = scmp.eq.s32.totalorder %s25, 1
    %p300 = por %p298, %p299
    %p301 = scmp.ne.s32.totalorder %s292, %s293
    %p302 = scmp.eq.s32.totalorder %s25, 0
    %p303 = por %p301, %p302
    %p304 = scmp.ne.s32.totalorder %s292, %s293
    %p305 = scmp.eq.s32.totalorder %s26, 1
    %p306 = por %p304, %p305
    %p308 = scmp.ne.s32.totalorder %s293, %s307
    %p309 = scmp.eq.s32.totalorder %s26, 0
    %p310 = por %p308, %p309
    %s312 = sadd.s32 %s311, 1
    %p315 = scmp.eq.s32.totalorder %s20, 1
    %p316 = scmp.ne.s32.totalorder %s311, %s313
    %p317 = scmp.eq.s32.totalorder %s20, 0
    %p318 = por %p316, %p317
    %p319 = scmp.ne.s32.totalorder %s311, %s313
    %p320 = scmp.eq.s32.totalorder %s25, 1
    %p321 = por %p319, %p320
    %p322 = scmp.ne.s32.totalorder %s313, %s314
    %p323 = scmp.eq.s32.totalorder %s25, 0
    %p324 = por %p322, %p323
    %p325 = scmp.ne.s32.totalorder %s313, %s314
    %p326 = scmp.eq.s32.totalorder %s26, 1
    %p327 = por %p325, %p326
    %p329 = scmp.ne.s32.totalorder %s314, %s328
    %p330 = scmp.eq.s32.totalorder %s26, 0
    %p331 = por %p329, %p330
    %s332 = ssub.s32 %s20, %s27
    %p333 = scmp.eq.s32.totalorder %s332, 0
    %s335 = sadd.s32 %s334, 1
    %s336 = scalar_select %p333, %s334, %s335
    %p339 = pneg %p333
    %p340 = scmp.eq.s32.totalorder %s20, 1
    %p341 = por %p339, %p340
    %p342 = scmp.ne.s32.totalorder %s334, %s337
    %p343 = scmp.eq.s32.totalorder %s20, 0
    %p344 = por %p342, %p343
    %p345 = scmp.ne.s32.totalorder %s334, %s337
    %p346 = scmp.eq.s32.totalorder %s25, 1
    %p347 = por %p345, %p346
    %p348 = scmp.ne.s32.totalorder %s337, %s338
    %p349 = scmp.eq.s32.totalorder %s25, 0
    %p350 = por %p348, %p349
    %p351 = scmp.ne.s32.totalorder %s337, %s338
    %p352 = scmp.eq.s32.totalorder %s26, 1
    %p353 = por %p351, %p352
    %p355 = scmp.ne.s32.totalorder %s338, %s354
    %p356 = scmp.eq.s32.totalorder %s26, 0
    %p357 = por %p355, %p356
    %p358 = scmp.le.s32.totalorder 1, %s20
    %p359 = scmp.lt.s32.totalorder %s20, 3
    %p360 = pnand %p358, %p359
    %p361 = pneg %p360
    // Predicated region
    $region9: #{forward.6} parent=5 // pred_check
      _
    $region10: #{forward.6} parent=5 // pred_check_branch
      %363 = sbr.rel (%p360) target = $region12
    $region11: #{forward.6} parent=5 // pred_region
      %s364 = ssub.s32 %s20, 1
      // Predicated region
      $region13: #{forward.6} parent=11 // pred_check
        %p365 = pneg %p93
      $region14: #{forward.6} parent=11 // pred_check_branch
        %367 = sbr.rel (%p365) target = $region16
      $region15: #{forward.6} parent=11 // pred_region
        _
      $region16: #{forward.6} parent=11 // pred_fallthru
        _
      // Predicated region
      $region17: #{forward.6} parent=11 // pred_check
        %p368 = pneg %p114
      $region18: #{forward.6} parent=11 // pred_check_branch
        %370 = sbr.rel (%p368) target = $region20
      $region19: #{forward.6} parent=11 // pred_region
        _
      $region20: #{forward.6} parent=11 // pred_fallthru
        _
      // Predicated region
      $region21: #{forward.6} parent=11 // pred_check
        %p371 = pneg %p135
      $region22: #{forward.6} parent=11 // pred_check_branch
        %373 = sbr.rel (%p371) target = $region24
      $region23: #{forward.6} parent=11 // pred_region
        _
      $region24: #{forward.6} parent=11 // pred_fallthru
        _
      // Predicated region
      $region25: #{forward.6} parent=11 // pred_check
        %p374 = pneg %p156
      $region26: #{forward.6} parent=11 // pred_check_branch
        %376 = sbr.rel (%p374) target = $region28
      $region27: #{forward.6} parent=11 // pred_region
        _
      $region28: #{forward.6} parent=11 // pred_fallthru
        _
      // Predicated region
      $region29: #{forward.6} parent=11 // pred_check
        %p377 = pneg %p177
      $region30: #{forward.6} parent=11 // pred_check_branch
        %379 = sbr.rel (%p377) target = $region32
      $region31: #{forward.6} parent=11 // pred_region
        _
      $region32: #{forward.6} parent=11 // pred_fallthru
        _
      // Predicated region
      $region33: #{forward.6} parent=11 // pred_check
        %p380 = pneg %p198
      $region34: #{forward.6} parent=11 // pred_check_branch
        %382 = sbr.rel (%p380) target = $region36
      $region35: #{forward.6} parent=11 // pred_region
        _
      $region36: #{forward.6} parent=11 // pred_fallthru
        _
      // Predicated region
      $region37: #{forward.6} parent=11 // pred_check
        %p383 = pneg %p219
      $region38: #{forward.6} parent=11 // pred_check_branch
        %385 = sbr.rel (%p383) target = $region40
      $region39: #{forward.6} parent=11 // pred_region
        _
      $region40: #{forward.6} parent=11 // pred_fallthru
        _
      // Predicated region
      $region41: #{forward.6} parent=11 // pred_check
        %p386 = pneg %p240
      $region42: #{forward.6} parent=11 // pred_check_branch
        %388 = sbr.rel (%p386) target = $region44
      $region43: #{forward.6} parent=11 // pred_region
        _
      $region44: #{forward.6} parent=11 // pred_fallthru
        _
      // Predicated region
      $region45: #{forward.6} parent=11 // pred_check
        %p389 = pneg %p261
      $region46: #{forward.6} parent=11 // pred_check_branch
        %391 = sbr.rel (%p389) target = $region48
      $region47: #{forward.6} parent=11 // pred_region
        _
      $region48: #{forward.6} parent=11 // pred_fallthru
        _
      // Predicated region
      $region49: #{forward.6} parent=11 // pred_check
        %p392 = pneg %p282
      $region50: #{forward.6} parent=11 // pred_check_branch
        %394 = sbr.rel (%p392) target = $region52
      $region51: #{forward.6} parent=11 // pred_region
        _
      $region52: #{forward.6} parent=11 // pred_fallthru
        _
      // Predicated region
      $region53: #{forward.6} parent=11 // pred_check
        %p395 = pneg %p303
      $region54: #{forward.6} parent=11 // pred_check_branch
        %397 = sbr.rel (%p395) target = $region56
      $region55: #{forward.6} parent=11 // pred_region
        _
      $region56: #{forward.6} parent=11 // pred_fallthru
        _
      // Predicated region
      $region57: #{forward.6} parent=11 // pred_check
        %p398 = pneg %p324
      $region58: #{forward.6} parent=11 // pred_check_branch
        %400 = sbr.rel (%p398) target = $region60
      $region59: #{forward.6} parent=11 // pred_region
        _
      $region60: #{forward.6} parent=11 // pred_fallthru
        _
    $region12: #{forward.6} parent=5 // pred_fallthru
      _
    %p401 = scmp.lt.s32.totalorder %s20, 2
    // Predicated region
    $region61: #{forward.6} parent=5 // pred_check
      %p402 = pneg %p401
    $region62: #{forward.6} parent=5 // pred_check_branch
      %404 = sbr.rel (%p402) target = $region64
    $region63: #{forward.6} parent=5 // pred_region
      // Predicated region
      $region65: #{forward.6} parent=63 // pred_check
        %p405 = pneg %p40
      $region66: #{forward.6} parent=63 // pred_check_branch
        %407 = sbr.rel (%p405) target = $region68
      $region67: #{forward.6} parent=63 // pred_region
        %p408 = scmp.lt.s32.totalorder %s20, 1
        %s409 = scalar_select %p408, %s20, 1
        %s410 = smul.addr %s409, 2
        %s411 = smul.addr %s410, 8
        %s412 = scalar_lea.vmem %s0, %s411
      $region68: #{forward.6} parent=63 // pred_fallthru
        _
      // Predicated region
      $region69: #{forward.6} parent=63 // pred_check
        %p413 = pneg %p66
      $region70: #{forward.6} parent=63 // pred_check_branch
        %415 = sbr.rel (%p413) target = $region72
      $region71: #{forward.6} parent=63 // pred_region
        %p416 = scmp.lt.s32.totalorder %s20, 1
        %s417 = scalar_select %p416, %s20, 1
        %s418 = scalar_lea.vmem %s1, %s417
      $region72: #{forward.6} parent=63 // pred_fallthru
        _
    $region64: #{forward.6} parent=5 // pred_fallthru
      _
    %p419 = scmp.le.s32.totalorder 1, %s20
    %p420 = scmp.lt.s32.totalorder %s20, 3
    %p421 = pnand %p419, %p420
    %p422 = pneg %p421
    // Predicated region
    $region73: #{forward.6} parent=5 // pred_check
      _
    $region74: #{forward.6} parent=5 // pred_check_branch
      %424 = sbr.rel (%p421) target = $region76
    $region75: #{forward.6} parent=5 // pred_region
      %s425 = ssub.s32 %s20, 1
      %p426 = scmp.lt.s32.totalorder %s25, 1
      %s427 = scalar_select %p426, %s25, 1
      %s428 = smul.addr %s427, 2
      %s429 = smul.addr %s428, 8
      %s430 = scalar_lea.vmem %s0, %s429
      %p431 = pneg %p46
      %p432 = pneg %p43
      %p433 = scmp.lt.s32.totalorder %s25, 1
      %s434 = scalar_select %p433, %s25, 1
      %s435 = scalar_lea.vmem %s1, %s434
      %p436 = pneg %p72
      %p437 = pneg %p69
      %p438 = pneg %p93
      %p439 = pneg %p90
      %p440 = pneg %p114
      %p441 = pneg %p111
      %p442 = pneg %p135
      %p443 = pneg %p132
      %p444 = pneg %p156
      %p445 = pneg %p153
      %p446 = pneg %p177
      %p447 = pneg %p174
      %p448 = pneg %p198
      %p449 = pneg %p195
      %p450 = pneg %p219
      %p451 = pneg %p216
      %p452 = pneg %p240
      %p453 = pneg %p237
      %p454 = pneg %p261
      %p455 = pneg %p258
      %p456 = pneg %p282
      %p457 = pneg %p279
      %p458 = pneg %p303
      %p459 = pneg %p300
      %p460 = pneg %p324
      %p461 = pneg %p321
      %p462 = pneg %p350
      %p463 = pneg %p347
      %p464 = scmp.lt.s32.totalorder %s25, 1
      %s465 = scalar_select %p464, %s25, 1
      %s466 = smul.addr %s465, 2
      %s467 = smul.addr %s466, 8
      %s468 = scalar_lea.vmem %s14, %s467
      %p469 = scmp.lt.s32.totalorder %s25, 1
      %s470 = scalar_select %p469, %s25, 1
      %s471 = smul.addr %s470, 2
      %s472 = smul.addr %s471, 8
      %s473 = scalar_lea.vmem %s0, %s472
      %p474 = scmp.lt.s32.totalorder %s25, 1
      %s475 = scalar_select %p474, %s25, 1
      %s476 = scalar_lea.vmem %s1, %s475
      %p477 = scmp.lt.s32.totalorder %s25, 1
      %s478 = scalar_select %p477, %s25, 1
      %s479 = smul.addr %s478, 2
      %s480 = smul.addr %s479, 8
      %s481 = scalar_lea.vmem %s14, %s480
      %v483 = vld [vmem:[%s473] sm:$0xff]
      %v484 = vld [vmem:[%s473 + $0x8] sm:$0xff]
      %v485 = vld [vmem:[%s476] sm:$0x1]
      %v486 = vpack.c.bf16 %v484, %v483
      %v487 = vld [vmem:[%s2] sm:$0xff]
      %v488 = vld [vmem:[%s2 + $0x8] sm:$0xff]
      %v489 = vld [vmem:[%s2 + $0x10] sm:$0xff]
      %v490 = vld [vmem:[%s2 + $0x18] sm:$0xff]
      %v491 = vpack.c.bf16 %v488, %v487
      %v492 = vpack.c.bf16 %v490, %v489
      %v493 = vld [vmem:[%s3] sm:$0x1]
      %v495 = vlaneseq
      %v496 = vshrl.u32 %v495, 7
      %v497 = vsub.s32 0, %v496
      %v498 = vrot.slane %v493, %v497
      %vm500 = vcmask 261120
      %v502 = vsel %vm500, %v486, 0
      %504 = vmatprep.subr.bf16.mxu0 0
      %505 = vmatpush1.bf16.msra.mxu0 0
      %506 = vmatprep.subr.bf16.mxu0 0
      %507 = vmatpush1.bf16.msra.mxu0 0
      %508 = vmatprep.subr.bf16.mxu0 0
      %509 = vmatpush1.bf16.msra.mxu0 0
      %510 = vmatprep.subr.bf16.mxu0 0
      %511 = vmatpush1.bf16.msra.mxu0 0
      %512 = vmatprep.subr.bf16.mxu0 0
      %513 = vmatpush1.bf16.msra.mxu0 0
      %514 = vmatprep.subr.bf16.mxu0 0
      %515 = vmatpush1.bf16.msra.mxu0 0
      %516 = vmatprep.subr.bf16.mxu0 0
      %517 = vmatpush1.bf16.msra.mxu0 %v492
      %518 = vmatprep.subr.bf16.mxu0 0
      %519 = vmatpush1.bf16.msra.mxu0 %v491
      %520 = vmatprep.subr.bf16.mxu0 0
      %521 = vmatpush2.bf16.msra.mxu0 0
      %522 = vmatprep.subr.bf16.mxu0 0
      %523 = vmatpush2.bf16.msra.mxu0 0
      %524 = vmatprep.subr.bf16.mxu0 0
      %525 = vmatpush2.bf16.msra.mxu0 0
      %526 = vmatprep.subr.bf16.mxu0 0
      %527 = vmatpush2.bf16.msra.mxu0 0
      %528 = vmatprep.subr.bf16.mxu0 0
      %529 = vmatpush2.bf16.msra.mxu0 0
      %530 = vmatprep.subr.bf16.mxu0 0
      %531 = vmatpush2.bf16.msra.mxu0 0
      %532 = vmatprep.subr.bf16.mxu0 0
      %533 = vmatpush2.bf16.msra.mxu0 0
      %534 = vmatprep.subr.bf16.mxu0 0
      %535 = vmatpush2.bf16.msra.mxu0 0
      %536 = vmatprep.mubr.bf16.mxu0 0
      %537 = vmatmul.mubr.bf16.gmra.mxu0 %v502
      %v538 = vpop.f32.mrf.mxu0
      %v539 = vadd.f32 %v498, %v538
      %v540 = vpop.f32.mrf.mxu0
      %v541 = vpop.f32.mrf.mxu0
      %v542 = vadd.f32 %v498, %v541
      %v543 = vpop.f32.mrf.mxu0
      %544 = vdwg.mxu0
      %s545 = scalar_lea.vmem %s2, 128
      %v546 = vld [vmem:[%s545] sm:$0xff]
      %v547 = vld [vmem:[%s545 + $0x8] sm:$0xff]
      %v548 = vld [vmem:[%s545 + $0x10] sm:$0xff]
      %v549 = vld [vmem:[%s545 + $0x18] sm:$0xff]
      %v550 = vpack.c.bf16 %v547, %v546
      %v551 = vpack.c.bf16 %v549, %v548
      %s552 = scalar_lea.vmem %s3, 4
      %v553 = vld [vmem:[%s552] sm:$0x1]
      %v555 = vlaneseq
      %v556 = vshrl.u32 %v555, 7
      %v557 = vsub.s32 0, %v556
      %v558 = vrot.slane %v553, %v557
      %560 = vmatprep.subr.bf16.mxu0 0
      %561 = vmatpush1.bf16.msra.mxu0 0
      %562 = vmatprep.subr.bf16.mxu0 0
      %563 = vmatpush1.bf16.msra.mxu0 0
      %564 = vmatprep.subr.bf16.mxu0 0
      %565 = vmatpush1.bf16.msra.mxu0 0
      %566 = vmatprep.subr.bf16.mxu0 0
      %567 = vmatpush1.bf16.msra.mxu0 0
      %568 = vmatprep.subr.bf16.mxu0 0
      %569 = vmatpush1.bf16.msra.mxu0 0
      %570 = vmatprep.subr.bf16.mxu0 0
      %571 = vmatpush1.bf16.msra.mxu0 0
      %572 = vmatprep.subr.bf16.mxu0 0
      %573 = vmatpush1.bf16.msra.mxu0 %v551
      %574 = vmatprep.subr.bf16.mxu0 0
      %575 = vmatpush1.bf16.msra.mxu0 %v550
      %576 = vmatprep.subr.bf16.mxu0 0
      %577 = vmatpush2.bf16.msra.mxu0 0
      %578 = vmatprep.subr.bf16.mxu0 0
      %579 = vmatpush2.bf16.msra.mxu0 0
      %580 = vmatprep.subr.bf16.mxu0 0
      %581 = vmatpush2.bf16.msra.mxu0 0
      %582 = vmatprep.subr.bf16.mxu0 0
      %583 = vmatpush2.bf16.msra.mxu0 0
      %584 = vmatprep.subr.bf16.mxu0 0
      %585 = vmatpush2.bf16.msra.mxu0 0
      %586 = vmatprep.subr.bf16.mxu0 0
      %587 = vmatpush2.bf16.msra.mxu0 0
      %588 = vmatprep.subr.bf16.mxu0 0
      %589 = vmatpush2.bf16.msra.mxu0 0
      %590 = vmatprep.subr.bf16.mxu0 0
      %591 = vmatpush2.bf16.msra.mxu0 0
      %592 = vmatprep.mubr.bf16.mxu0 0
      %593 = vmatmul.mubr.bf16.gmra.mxu0 %v502
      %v594 = vpop.f32.mrf.mxu0
      %v595 = vadd.f32 %v558, %v594
      %v596 = vpop.f32.mrf.mxu0
      %v597 = vpop.f32.mrf.mxu0
      %v598 = vadd.f32 %v558, %v597
      %v599 = vpop.f32.mrf.mxu0
      %600 = vdwg.mxu0
      %s601 = scalar_lea.vmem %s2, 256
      %v602 = vld [vmem:[%s601] sm:$0xff]
      %v603 = vld [vmem:[%s601 + $0x8] sm:$0xff]
      %v604 = vld [vmem:[%s601 + $0x10] sm:$0xff]
      %v605 = vld [vmem:[%s601 + $0x18] sm:$0xff]
      %v606 = vpack.c.bf16 %v603, %v602
      %v607 = vpack.c.bf16 %v605, %v604
      %s608 = scalar_lea.vmem %s3, 8
      %v609 = vld [vmem:[%s608] sm:$0x1]
      %v611 = vlaneseq
      %v612 = vshrl.u32 %v611, 7
      %v613 = vsub.s32 0, %v612
      %v614 = vrot.slane %v609, %v613
      %616 = vmatprep.subr.bf16.mxu0 0
      %617 = vmatpush1.bf16.msra.mxu0 0
      %618 = vmatprep.subr.bf16.mxu0 0
      %619 = vmatpush1.bf16.msra.mxu0 0
      %620 = vmatprep.subr.bf16.mxu0 0
      %621 = vmatpush1.bf16.msra.mxu0 0
      %622 = vmatprep.subr.bf16.mxu0 0
      %623 = vmatpush1.bf16.msra.mxu0 0
      %624 = vmatprep.subr.bf16.mxu0 0
      %625 = vmatpush1.bf16.msra.mxu0 0
      %626 = vmatprep.subr.bf16.mxu0 0
      %627 = vmatpush1.bf16.msra.mxu0 0
      %628 = vmatprep.subr.bf16.mxu0 0
      %629 = vmatpush1.bf16.msra.mxu0 %v607
      %630 = vmatprep.subr.bf16.mxu0 0
      %631 = vmatpush1.bf16.msra.mxu0 %v606
      %632 = vmatprep.subr.bf16.mxu0 0
      %633 = vmatpush2.bf16.msra.mxu0 0
      %634 = vmatprep.subr.bf16.mxu0 0
      %635 = vmatpush2.bf16.msra.mxu0 0
      %636 = vmatprep.subr.bf16.mxu0 0
      %637 = vmatpush2.bf16.msra.mxu0 0
      %638 = vmatprep.subr.bf16.mxu0 0
      %639 = vmatpush2.bf16.msra.mxu0 0
      %640 = vmatprep.subr.bf16.mxu0 0
      %641 = vmatpush2.bf16.msra.mxu0 0
      %642 = vmatprep.subr.bf16.mxu0 0
      %643 = vmatpush2.bf16.msra.mxu0 0
      %644 = vmatprep.subr.bf16.mxu0 0
      %645 = vmatpush2.bf16.msra.mxu0 0
      %646 = vmatprep.subr.bf16.mxu0 0
      %647 = vmatpush2.bf16.msra.mxu0 0
      %648 = vmatprep.mubr.bf16.mxu0 0
      %649 = vmatmul.mubr.bf16.gmra.mxu0 %v502
      %v650 = vpop.f32.mrf.mxu0
      %v651 = vadd.f32 %v614, %v650
      %v652 = vpop.f32.mrf.mxu0
      %v653 = vpop.f32.mrf.mxu0
      %v654 = vadd.f32 %v614, %v653
      %v655 = vpop.f32.mrf.mxu0
      %656 = vdwg.mxu0
      %v657 = vpack.c.bf16 %v542, %v539
      %v658 = vpack.c.bf16 %v598, %v595
      %vm659 = vcmask 64512
      %v661 = vsel %vm659, %v657, 0
      %v664 = vsel %vm659, %v658, 0
      %666 = vmatprep.subr.bf16.mxu0 0
      %667 = vmatpush1.bf16.xpose.msra.mxu0 0
      %668 = vmatprep.subr.bf16.mxu0 0
      %669 = vmatpush1.bf16.xpose.msra.mxu0 0
      %670 = vmatprep.subr.bf16.mxu0 0
      %671 = vmatpush1.bf16.xpose.msra.mxu0 0
      %672 = vmatprep.subr.bf16.mxu0 0
      %673 = vmatpush1.bf16.xpose.msra.mxu0 0
      %674 = vmatprep.subr.bf16.mxu0 0
      %675 = vmatpush1.bf16.xpose.msra.mxu0 0
      %676 = vmatprep.subr.bf16.mxu0 0
      %677 = vmatpush1.bf16.xpose.msra.mxu0 0
      %678 = vmatprep.subr.bf16.mxu0 0
      %679 = vmatpush1.bf16.xpose.msra.mxu0 0
      %680 = vmatprep.subr.bf16.mxu0 0
      %681 = vmatpush1.bf16.xpose.msra.mxu0 %v664
      %682 = vmatprep.subr.bf16.mxu0 0
      %683 = vmatpush2.bf16.xpose.msra.mxu0 0
      %684 = vmatprep.subr.bf16.mxu0 0
      %685 = vmatpush2.bf16.xpose.msra.mxu0 0
      %686 = vmatprep.subr.bf16.mxu0 0
      %687 = vmatpush2.bf16.xpose.msra.mxu0 0
      %688 = vmatprep.subr.bf16.mxu0 0
      %689 = vmatpush2.bf16.xpose.msra.mxu0 0
      %690 = vmatprep.subr.bf16.mxu0 0
      %691 = vmatpush2.bf16.xpose.msra.mxu0 0
      %692 = vmatprep.subr.bf16.mxu0 0
      %693 = vmatpush2.bf16.xpose.msra.mxu0 0
      %694 = vmatprep.subr.bf16.mxu0 0
      %695 = vmatpush2.bf16.xpose.msra.mxu0 0
      %696 = vmatprep.subr.bf16.mxu0 0
      %697 = vmatpush2.bf16.xpose.msra.mxu0 0
      %698 = vmatprep.mubr.bf16.mxu0 0
      %699 = vmatmul.mubr.bf16.gmra.mxu0 %v661
      %v700 = vpop.f32.mrf.mxu0
      %v701 = vadd.f32 0.0, %v700
      %v702 = vpop.f32.mrf.mxu0
      %v703 = vpop.f32.mrf.mxu0
      %v704 = vadd.f32 0.0, %v703
      %v705 = vpop.f32.mrf.mxu0
      %706 = vdwg.mxu0
      %v707 = vmul.f32 %v701, 0.35355338
      %v708 = vmul.f32 %v704, 0.35355338
      %v710 = vlaneseq
      %v711 = vshrl.u32 %v710, 7
      %v712 = vsub.s32 0, %v711
      %v713 = vrot.slane %v485, %v712
      %v715 = vadd.f32 %v707, %v713
      %v716 = vadd.f32 %v708, %v713
      %vm717 = vcmask 130048
      %v718 = vsel %vm717, %v715, -inf
      %719 = vmax.xlane.f32.xlu0 %v718
      %v720 = vpop.xlane.xlu0 %719
      %v721 = vsel %vm717, %v716, -inf
      %722 = vmax.xlane.f32.xlu0 %v721
      %v723 = vpop.xlane.xlu0 %722
      %v724 = vsub.f32 %v715, %v720
      %v725 = vsub.f32 %v716, %v723
      %v726 = vmul.f32 %v724, 1.442695
      %v727 = vpow.pop %v726
      %v728 = vmul.f32 %v725, 1.442695
      %v729 = vpow.pop %v728
      %v730 = vsel %vm717, %v727, 0.0
      %731 = vadd.xlane.f32.xlu0 %v730
      %v732 = vpop.xlane.xlu0 %731
      %v733 = vsel %vm717, %v729, 0.0
      %734 = vadd.xlane.f32.xlu0 %v733
      %v735 = vpop.xlane.xlu0 %734
      %v736 = vrcp.pop %v732
      %v737 = vrcp.pop %v735
      %v738 = vmul.f32 %v727, %v736
      %v739 = vmul.f32 %v729, %v737
      %v740 = vpack.c.bf16 %v739, %v738
      %v741 = vpack.c.bf16 %v654, %v651
      %v743 = vsel %vm717, %v740, 0
      %745 = vmatprep.subr.bf16.mxu0 0
      %746 = vmatpush1.bf16.msra.mxu0 0
      %747 = vmatprep.subr.bf16.mxu0 0
      %748 = vmatpush1.bf16.msra.mxu0 0
      %749 = vmatprep.subr.bf16.mxu0 0
      %750 = vmatpush1.bf16.msra.mxu0 0
      %751 = vmatprep.subr.bf16.mxu0 0
      %752 = vmatpush1.bf16.msra.mxu0 0
      %753 = vmatprep.subr.bf16.mxu0 0
      %754 = vmatpush1.bf16.msra.mxu0 0
      %755 = vmatprep.subr.bf16.mxu0 0
      %756 = vmatpush1.bf16.msra.mxu0 0
      %757 = vmatprep.subr.bf16.mxu0 0
      %758 = vmatpush1.bf16.msra.mxu0 0
      %759 = vmatprep.subr.bf16.mxu0 0
      %760 = vmatpush1.bf16.msra.mxu0 %v741
      %761 = vmatprep.subr.bf16.mxu0 0
      %762 = vmatpush2.bf16.msra.mxu0 0
      %763 = vmatprep.subr.bf16.mxu0 0
      %764 = vmatpush2.bf16.msra.mxu0 0
      %765 = vmatprep.subr.bf16.mxu0 0
      %766 = vmatpush2.bf16.msra.mxu0 0
      %767 = vmatprep.subr.bf16.mxu0 0
      %768 = vmatpush2.bf16.msra.mxu0 0
      %769 = vmatprep.subr.bf16.mxu0 0
      %770 = vmatpush2.bf16.msra.mxu0 0
      %771 = vmatprep.subr.bf16.mxu0 0
      %772 = vmatpush2.bf16.msra.mxu0 0
      %773 = vmatprep.subr.bf16.mxu0 0
      %774 = vmatpush2.bf16.msra.mxu0 0
      %775 = vmatprep.subr.bf16.mxu0 0
      %776 = vmatpush2.bf16.msra.mxu0 0
      %777 = vmatprep.mubr.bf16.mxu0 0
      %778 = vmatmul.mubr.bf16.gmra.mxu0 %v743
      %v779 = vpop.f32.mrf.mxu0
      %v780 = vadd.f32 0.0, %v779
      %v781 = vpop.f32.mrf.mxu0
      %v782 = vpop.f32.mrf.mxu0
      %v783 = vadd.f32 0.0, %v782
      %v784 = vpop.f32.mrf.mxu0
      %785 = vdwg.mxu0
      %v786 = vpack.c.bf16 %v783, %v780
      %v787 = vld [vmem:[%s4] sm:$0xff]
      %v788 = vpack.c.bf16 %v787, %v787
      %s789 = scalar_lea.vmem %s2, 32
      %v790 = vld [vmem:[%s789] sm:$0xff]
      %v791 = vld [vmem:[%s789 + $0x8] sm:$0xff]
      %v792 = vld [vmem:[%s789 + $0x10] sm:$0xff]
      %v793 = vld [vmem:[%s789 + $0x18] sm:$0xff]
      %v794 = vpack.c.bf16 %v791, %v790
      %v795 = vpack.c.bf16 %v793, %v792
      %s796 = scalar_lea.vmem %s3, 1
      %v797 = vld [vmem:[%s796] sm:$0x1]
      %v799 = vlaneseq
      %v800 = vshrl.u32 %v799, 7
      %v801 = vsub.s32 0, %v800
      %v802 = vrot.slane %v797, %v801
      %804 = vmatprep.subr.bf16.mxu0 0
      %805 = vmatpush1.bf16.msra.mxu0 0
      %806 = vmatprep.subr.bf16.mxu0 0
      %807 = vmatpush1.bf16.msra.mxu0 0
      %808 = vmatprep.subr.bf16.mxu0 0
      %809 = vmatpush1.bf16.msra.mxu0 0
      %810 = vmatprep.subr.bf16.mxu0 0
      %811 = vmatpush1.bf16.msra.mxu0 0
      %812 = vmatprep.subr.bf16.mxu0 0
      %813 = vmatpush1.bf16.msra.mxu0 0
      %814 = vmatprep.subr.bf16.mxu0 0
      %815 = vmatpush1.bf16.msra.mxu0 0
      %816 = vmatprep.subr.bf16.mxu0 0
      %817 = vmatpush1.bf16.msra.mxu0 %v795
      %818 = vmatprep.subr.bf16.mxu0 0
      %819 = vmatpush1.bf16.msra.mxu0 %v794
      %820 = vmatprep.subr.bf16.mxu0 0
      %821 = vmatpush2.bf16.msra.mxu0 0
      %822 = vmatprep.subr.bf16.mxu0 0
      %823 = vmatpush2.bf16.msra.mxu0 0
      %824 = vmatprep.subr.bf16.mxu0 0
      %825 = vmatpush2.bf16.msra.mxu0 0
      %826 = vmatprep.subr.bf16.mxu0 0
      %827 = vmatpush2.bf16.msra.mxu0 0
      %828 = vmatprep.subr.bf16.mxu0 0
      %829 = vmatpush2.bf16.msra.mxu0 0
      %830 = vmatprep.subr.bf16.mxu0 0
      %831 = vmatpush2.bf16.msra.mxu0 0
      %832 = vmatprep.subr.bf16.mxu0 0
      %833 = vmatpush2.bf16.msra.mxu0 0
      %834 = vmatprep.subr.bf16.mxu0 0
      %835 = vmatpush2.bf16.msra.mxu0 0
      %836 = vmatprep.mubr.bf16.mxu0 0
      %837 = vmatmul.mubr.bf16.gmra.mxu0 %v502
      %v838 = vpop.f32.mrf.mxu0
      %v839 = vadd.f32 %v802, %v838
      %v840 = vpop.f32.mrf.mxu0
      %v841 = vpop.f32.mrf.mxu0
      %v842 = vadd.f32 %v802, %v841
      %v843 = vpop.f32.mrf.mxu0
      %844 = vdwg.mxu0
      %s845 = scalar_lea.vmem %s2, 160
      %v846 = vld [vmem:[%s845] sm:$0xff]
      %v847 = vld [vmem:[%s845 + $0x8] sm:$0xff]
      %v848 = vld [vmem:[%s845 + $0x10] sm:$0xff]
      %v849 = vld [vmem:[%s845 + $0x18] sm:$0xff]
      %v850 = vpack.c.bf16 %v847, %v846
      %v851 = vpack.c.bf16 %v849, %v848
      %s852 = scalar_lea.vmem %s3, 5
      %v853 = vld [vmem:[%s852] sm:$0x1]
      %v855 = vlaneseq
      %v856 = vshrl.u32 %v855, 7
      %v857 = vsub.s32 0, %v856
      %v858 = vrot.slane %v853, %v857
      %860 = vmatprep.subr.bf16.mxu0 0
      %861 = vmatpush1.bf16.msra.mxu0 0
      %862 = vmatprep.subr.bf16.mxu0 0
      %863 = vmatpush1.bf16.msra.mxu0 0
      %864 = vmatprep.subr.bf16.mxu0 0
      %865 = vmatpush1.bf16.msra.mxu0 0
      %866 = vmatprep.subr.bf16.mxu0 0
      %867 = vmatpush1.bf16.msra.mxu0 0
      %868 = vmatprep.subr.bf16.mxu0 0
      %869 = vmatpush1.bf16.msra.mxu0 0
      %870 = vmatprep.subr.bf16.mxu0 0
      %871 = vmatpush1.bf16.msra.mxu0 0
      %872 = vmatprep.subr.bf16.mxu0 0
      %873 = vmatpush1.bf16.msra.mxu0 %v851
      %874 = vmatprep.subr.bf16.mxu0 0
      %875 = vmatpush1.bf16.msra.mxu0 %v850
      %876 = vmatprep.subr.bf16.mxu0 0
      %877 = vmatpush2.bf16.msra.mxu0 0
      %878 = vmatprep.subr.bf16.mxu0 0
      %879 = vmatpush2.bf16.msra.mxu0 0
      %880 = vmatprep.subr.bf16.mxu0 0
      %881 = vmatpush2.bf16.msra.mxu0 0
      %882 = vmatprep.subr.bf16.mxu0 0
      %883 = vmatpush2.bf16.msra.mxu0 0
      %884 = vmatprep.subr.bf16.mxu0 0
      %885 = vmatpush2.bf16.msra.mxu0 0
      %886 = vmatprep.subr.bf16.mxu0 0
      %887 = vmatpush2.bf16.msra.mxu0 0
      %888 = vmatprep.subr.bf16.mxu0 0
      %889 = vmatpush2.bf16.msra.mxu0 0
      %890 = vmatprep.subr.bf16.mxu0 0
      %891 = vmatpush2.bf16.msra.mxu0 0
      %892 = vmatprep.mubr.bf16.mxu0 0
      %893 = vmatmul.mubr.bf16.gmra.mxu0 %v502
      %v894 = vpop.f32.mrf.mxu0
      %v895 = vadd.f32 %v858, %v894
      %v896 = vpop.f32.mrf.mxu0
      %v897 = vpop.f32.mrf.mxu0
      %v898 = vadd.f32 %v858, %v897
      %v899 = vpop.f32.mrf.mxu0
      %900 = vdwg.mxu0
      %s901 = scalar_lea.vmem %s2, 288
      %v902 = vld [vmem:[%s901] sm:$0xff]
      %v903 = vld [vmem:[%s901 + $0x8] sm:$0xff]
      %v904 = vld [vmem:[%s901 + $0x10] sm:$0xff]
      %v905 = vld [vmem:[%s901 + $0x18] sm:$0xff]
      %v906 = vpack.c.bf16 %v903, %v902
      %v907 = vpack.c.bf16 %v905, %v904
      %s908 = scalar_lea.vmem %s3, 9
      %v909 = vld [vmem:[%s908] sm:$0x1]
      %v911 = vlaneseq
      %v912 = vshrl.u32 %v911, 7
      %v913 = vsub.s32 0, %v912
      %v914 = vrot.slane %v909, %v913
      %916 = vmatprep.subr.bf16.mxu0 0
      %917 = vmatpush1.bf16.msra.mxu0 0
      %918 = vmatprep.subr.bf16.mxu0 0
      %919 = vmatpush1.bf16.msra.mxu0 0
      %920 = vmatprep.subr.bf16.mxu0 0
      %921 = vmatpush1.bf16.msra.mxu0 0
      %922 = vmatprep.subr.bf16.mxu0 0
      %923 = vmatpush1.bf16.msra.mxu0 0
      %924 = vmatprep.subr.bf16.mxu0 0
      %925 = vmatpush1.bf16.msra.mxu0 0
      %926 = vmatprep.subr.bf16.mxu0 0
      %927 = vmatpush1.bf16.msra.mxu0 0
      %928 = vmatprep.subr.bf16.mxu0 0
      %929 = vmatpush1.bf16.msra.mxu0 %v907
      %930 = vmatprep.subr.bf16.mxu0 0
      %931 = vmatpush1.bf16.msra.mxu0 %v906
      %932 = vmatprep.subr.bf16.mxu0 0
      %933 = vmatpush2.bf16.msra.mxu0 0
      %934 = vmatprep.subr.bf16.mxu0 0
      %935 = vmatpush2.bf16.msra.mxu0 0
      %936 = vmatprep.subr.bf16.mxu0 0
      %937 = vmatpush2.bf16.msra.mxu0 0
      %938 = vmatprep.subr.bf16.mxu0 0
      %939 = vmatpush2.bf16.msra.mxu0 0
      %940 = vmatprep.subr.bf16.mxu0 0
      %941 = vmatpush2.bf16.msra.mxu0 0
      %942 = vmatprep.subr.bf16.mxu0 0
      %943 = vmatpush2.bf16.msra.mxu0 0
      %944 = vmatprep.subr.bf16.mxu0 0
      %945 = vmatpush2.bf16.msra.mxu0 0
      %946 = vmatprep.subr.bf16.mxu0 0
      %947 = vmatpush2.bf16.msra.mxu0 0
      %948 = vmatprep.mubr.bf16.mxu0 0
      %949 = vmatmul.mubr.bf16.gmra.mxu0 %v502
      %v950 = vpop.f32.mrf.mxu0
      %v951 = vadd.f32 %v914, %v950
      %v952 = vpop.f32.mrf.mxu0
      %v953 = vpop.f32.mrf.mxu0
      %v954 = vadd.f32 %v914, %v953
      %v955 = vpop.f32.mrf.mxu0
      %956 = vdwg.mxu0
      %v957 = vpack.c.bf16 %v842, %v839
      %v958 = vpack.c.bf16 %v898, %v895
      %v960 = vsel %vm659, %v957, 0
      %v963 = vsel %vm659, %v958, 0
      %965 = vmatprep.subr.bf16.mxu0 0
      %966 = vmatpush1.bf16.xpose.msra.mxu0 0
      %967 = vmatprep.subr.bf16.mxu0 0
      %968 = vmatpush1.bf16.xpose.msra.mxu0 0
      %969 = vmatprep.subr.bf16.mxu0 0
      %970 = vmatpush1.bf16.xpose.msra.mxu0 0
      %971 = vmatprep.subr.bf16.mxu0 0
      %972 = vmatpush1.bf16.xpose.msra.mxu0 0
      %973 = vmatprep.subr.bf16.mxu0 0
      %974 = vmatpush1.bf16.xpose.msra.mxu0 0
      %975 = vmatprep.subr.bf16.mxu0 0
      %976 = vmatpush1.bf16.xpose.msra.mxu0 0
      %977 = vmatprep.subr.bf16.mxu0 0
      %978 = vmatpush1.bf16.xpose.msra.mxu0 0
      %979 = vmatprep.subr.bf16.mxu0 0
      %980 = vmatpush1.bf16.xpose.msra.mxu0 %v963
      %981 = vmatprep.subr.bf16.mxu0 0
      %982 = vmatpush2.bf16.xpose.msra.mxu0 0
      %983 = vmatprep.subr.bf16.mxu0 0
      %984 = vmatpush2.bf16.xpose.msra.mxu0 0
      %985 = vmatprep.subr.bf16.mxu0 0
      %986 = vmatpush2.bf16.xpose.msra.mxu0 0
      %987 = vmatprep.subr.bf16.mxu0 0
      %988 = vmatpush2.bf16.xpose.msra.mxu0 0
      %989 = vmatprep.subr.bf16.mxu0 0
      %990 = vmatpush2.bf16.xpose.msra.mxu0 0
      %991 = vmatprep.subr.bf16.mxu0 0
      %992 = vmatpush2.bf16.xpose.msra.mxu0 0
      %993 = vmatprep.subr.bf16.mxu0 0
      %994 = vmatpush2.bf16.xpose.msra.mxu0 0
      %995 = vmatprep.subr.bf16.mxu0 0
      %996 = vmatpush2.bf16.xpose.msra.mxu0 0
      %997 = vmatprep.mubr.bf16.mxu0 0
      %998 = vmatmul.mubr.bf16.gmra.mxu0 %v960
      %v999 = vpop.f32.mrf.mxu0
      %v1000 = vadd.f32 0.0, %v999
      %v1001 = vpop.f32.mrf.mxu0
      %v1002 = vpop.f32.mrf.mxu0
      %v1003 = vadd.f32 0.0, %v1002
      %v1004 = vpop.f32.mrf.mxu0
      %1005 = vdwg.mxu0
      %v1006 = vmul.f32 %v1000, 0.35355338
      %v1007 = vmul.f32 %v1003, 0.35355338
      %v1008 = vadd.f32 %v1006, %v713
      %v1009 = vadd.f32 %v1007, %v713
      %v1010 = vsel %vm717, %v1008, -inf
      %1011 = vmax.xlane.f32.xlu0 %v1010
      %v1012 = vpop.xlane.xlu0 %1011
      %v1013 = vsel %vm717, %v1009, -inf
      %1014 = vmax.xlane.f32.xlu0 %v1013
      %v1015 = vpop.xlane.xlu0 %1014
      %v1016 = vsub.f32 %v1008, %v1012
      %v1017 = vsub.f32 %v1009, %v1015
      %v1018 = vmul.f32 %v1016, 1.442695
      %v1019 = vpow.pop %v1018
      %v1020 = vmul.f32 %v1017, 1.442695
      %v1021 = vpow.pop %v1020
      %v1022 = vsel %vm717, %v1019, 0.0
      %1023 = vadd.xlane.f32.xlu0 %v1022
      %v1024 = vpop.xlane.xlu0 %1023
      %v1025 = vsel %vm717, %v1021, 0.0
      %1026 = vadd.xlane.f32.xlu0 %v1025
      %v1027 = vpop.xlane.xlu0 %1026
      %v1028 = vrcp.pop %v1024
      %v1029 = vrcp.pop %v1027
      %v1030 = vmul.f32 %v1019, %v1028
      %v1031 = vmul.f32 %v1021, %v1029
      %v1032 = vpack.c.bf16 %v1031, %v1030
      %v1033 = vpack.c.bf16 %v954, %v951
      %v1035 = vsel %vm717, %v1032, 0
      %1037 = vmatprep.subr.bf16.mxu0 0
      %1038 = vmatpush1.bf16.msra.mxu0 0
      %1039 = vmatprep.subr.bf16.mxu0 0
      %1040 = vmatpush1.bf16.msra.mxu0 0
      %1041 = vmatprep.subr.bf16.mxu0 0
      %1042 = vmatpush1.bf16.msra.mxu0 0
      %1043 = vmatprep.subr.bf16.mxu0 0
      %1044 = vmatpush1.bf16.msra.mxu0 0
      %1045 = vmatprep.subr.bf16.mxu0 0
      %1046 = vmatpush1.bf16.msra.mxu0 0
      %1047 = vmatprep.subr.bf16.mxu0 0
      %1048 = vmatpush1.bf16.msra.mxu0 0
      %1049 = vmatprep.subr.bf16.mxu0 0
      %1050 = vmatpush1.bf16.msra.mxu0 0
      %1051 = vmatprep.subr.bf16.mxu0 0
      %1052 = vmatpush1.bf16.msra.mxu0 %v1033
      %1053 = vmatprep.subr.bf16.mxu0 0
      %1054 = vmatpush2.bf16.msra.mxu0 0
      %1055 = vmatprep.subr.bf16.mxu0 0
      %1056 = vmatpush2.bf16.msra.mxu0 0
      %1057 = vmatprep.subr.bf16.mxu0 0
      %1058 = vmatpush2.bf16.msra.mxu0 0
      %1059 = vmatprep.subr.bf16.mxu0 0
      %1060 = vmatpush2.bf16.msra.mxu0 0
      %1061 = vmatprep.subr.bf16.mxu0 0
      %1062 = vmatpush2.bf16.msra.mxu0 0
      %1063 = vmatprep.subr.bf16.mxu0 0
      %1064 = vmatpush2.bf16.msra.mxu0 0
      %1065 = vmatprep.subr.bf16.mxu0 0
      %1066 = vmatpush2.bf16.msra.mxu0 0
      %1067 = vmatprep.subr.bf16.mxu0 0
      %1068 = vmatpush2.bf16.msra.mxu0 0
      %1069 = vmatprep.mubr.bf16.mxu0 0
      %1070 = vmatmul.mubr.bf16.gmra.mxu0 %v1035
      %v1071 = vpop.f32.mrf.mxu0
      %v1072 = vadd.f32 0.0, %v1071
      %v1073 = vpop.f32.mrf.mxu0
      %v1074 = vpop.f32.mrf.mxu0
      %v1075 = vadd.f32 0.0, %v1074
      %v1076 = vpop.f32.mrf.mxu0
      %1077 = vdwg.mxu0
      %v1078 = vpack.c.bf16 %v1075, %v1072
      %s1079 = scalar_lea.vmem %s4, 8
      %v1080 = vld [vmem:[%s1079] sm:$0xff]
      %v1081 = vpack.c.bf16 %v1080, %v1080
      %v1083 = vsel %vm659, %v1078, 0
      %vm1085 = vcmask 1043456
      %v1087 = vsel %vm1085, %v1081, 0
      %1089 = vmatprep.subr.bf16.mxu0 0
      %1090 = vmatpush1.bf16.msra.mxu0 0
      %1091 = vmatprep.subr.bf16.mxu0 0
      %1092 = vmatpush1.bf16.msra.mxu0 0
      %1093 = vmatprep.subr.bf16.mxu0 0
      %1094 = vmatpush1.bf16.msra.mxu0 0
      %1095 = vmatprep.subr.bf16.mxu0 0
      %1096 = vmatpush1.bf16.msra.mxu0 0
      %1097 = vmatprep.subr.bf16.mxu0 0
      %1098 = vmatpush1.bf16.msra.mxu0 0
      %1099 = vmatprep.subr.bf16.mxu0 0
      %1100 = vmatpush1.bf16.msra.mxu0 0
      %1101 = vmatprep.subr.bf16.mxu0 0
      %1102 = vmatpush1.bf16.msra.mxu0 0
      %1103 = vmatprep.subr.bf16.mxu0 0
      %1104 = vmatpush1.bf16.msra.mxu0 %v1087
      %1105 = vmatprep.subr.bf16.mxu0 0
      %1106 = vmatpush2.bf16.msra.mxu0 0
      %1107 = vmatprep.subr.bf16.mxu0 0
      %1108 = vmatpush2.bf16.msra.mxu0 0
      %1109 = vmatprep.subr.bf16.mxu0 0
      %1110 = vmatpush2.bf16.msra.mxu0 0
      %1111 = vmatprep.subr.bf16.mxu0 0
      %1112 = vmatpush2.bf16.msra.mxu0 0
      %1113 = vmatprep.subr.bf16.mxu0 0
      %1114 = vmatpush2.bf16.msra.mxu0 0
      %1115 = vmatprep.subr.bf16.mxu0 0
      %1116 = vmatpush2.bf16.msra.mxu0 0
      %1117 = vmatprep.subr.bf16.mxu0 0
      %1118 = vmatpush2.bf16.msra.mxu0 0
      %1119 = vmatprep.subr.bf16.mxu0 0
      %1120 = vmatpush2.bf16.msra.mxu0 0
      %1121 = vmatprep.mubr.bf16.mxu0 0
      %1122 = vmatmul.mubr.bf16.gmra.mxu0 %v1083
      %v1123 = vpop.f32.mrf.mxu0
      %v1124 = vadd.f32 0.0, %v1123
      %v1125 = vpop.f32.mrf.mxu0
      %v1126 = vpop.f32.mrf.mxu0
      %v1127 = vadd.f32 0.0, %v1126
      %v1128 = vpop.f32.mrf.mxu0
      %1129 = vdwg.mxu0
      %v1131 = vsel %vm659, %v786, 0
      %v1134 = vsel %vm1085, %v788, 0
      %1136 = vmatprep.subr.bf16.mxu0 0
      %1137 = vmatpush1.bf16.msra.mxu0 0
      %1138 = vmatprep.subr.bf16.mxu0 0
      %1139 = vmatpush1.bf16.msra.mxu0 0
      %1140 = vmatprep.subr.bf16.mxu0 0
      %1141 = vmatpush1.bf16.msra.mxu0 0
      %1142 = vmatprep.subr.bf16.mxu0 0
      %1143 = vmatpush1.bf16.msra.mxu0 0
      %1144 = vmatprep.subr.bf16.mxu0 0
      %1145 = vmatpush1.bf16.msra.mxu0 0
      %1146 = vmatprep.subr.bf16.mxu0 0
      %1147 = vmatpush1.bf16.msra.mxu0 0
      %1148 = vmatprep.subr.bf16.mxu0 0
      %1149 = vmatpush1.bf16.msra.mxu0 0
      %1150 = vmatprep.subr.bf16.mxu0 0
      %1151 = vmatpush1.bf16.msra.mxu0 %v1134
      %1152 = vmatprep.subr.bf16.mxu0 0
      %1153 = vmatpush2.bf16.msra.mxu0 0
      %1154 = vmatprep.subr.bf16.mxu0 0
      %1155 = vmatpush2.bf16.msra.mxu0 0
      %1156 = vmatprep.subr.bf16.mxu0 0
      %1157 = vmatpush2.bf16.msra.mxu0 0
      %1158 = vmatprep.subr.bf16.mxu0 0
      %1159 = vmatpush2.bf16.msra.mxu0 0
      %1160 = vmatprep.subr.bf16.mxu0 0
      %1161 = vmatpush2.bf16.msra.mxu0 0
      %1162 = vmatprep.subr.bf16.mxu0 0
      %1163 = vmatpush2.bf16.msra.mxu0 0
      %1164 = vmatprep.subr.bf16.mxu0 0
      %1165 = vmatpush2.bf16.msra.mxu0 0
      %1166 = vmatprep.subr.bf16.mxu0 0
      %1167 = vmatpush2.bf16.msra.mxu0 0
      %1168 = vmatprep.mubr.bf16.mxu0 0
      %1169 = vmatmul.mubr.bf16.gmra.mxu0 %v1131
      %v1170 = vpop.f32.mrf.mxu0
      %v1171 = vadd.f32 %v1124, %v1170
      %v1172 = vpop.f32.mrf.mxu0
      %v1173 = vpop.f32.mrf.mxu0
      %v1174 = vadd.f32 %v1127, %v1173
      %v1175 = vpop.f32.mrf.mxu0
      %1176 = vdwg.mxu0
      %s1177 = scalar_lea.vmem %s2, 64
      %v1178 = vld [vmem:[%s1177] sm:$0xff]
      %v1179 = vld [vmem:[%s1177 + $0x8] sm:$0xff]
      %v1180 = vld [vmem:[%s1177 + $0x10] sm:$0xff]
      %v1181 = vld [vmem:[%s1177 + $0x18] sm:$0xff]
      %v1182 = vpack.c.bf16 %v1179, %v1178
      %v1183 = vpack.c.bf16 %v1181, %v1180
      %s1184 = scalar_lea.vmem %s3, 2
      %v1185 = vld [vmem:[%s1184] sm:$0x1]
      %v1187 = vlaneseq
      %v1188 = vshrl.u32 %v1187, 7
      %v1189 = vsub.s32 0, %v1188
      %v1190 = vrot.slane %v1185, %v1189
      %1192 = vmatprep.subr.bf16.mxu0 0
      %1193 = vmatpush1.bf16.msra.mxu0 0
      %1194 = vmatprep.subr.bf16.mxu0 0
      %1195 = vmatpush1.bf16.msra.mxu0 0
      %1196 = vmatprep.subr.bf16.mxu0 0
      %1197 = vmatpush1.bf16.msra.mxu0 0
      %1198 = vmatprep.subr.bf16.mxu0 0
      %1199 = vmatpush1.bf16.msra.mxu0 0
      %1200 = vmatprep.subr.bf16.mxu0 0
      %1201 = vmatpush1.bf16.msra.mxu0 0
      %1202 = vmatprep.subr.bf16.mxu0 0
      %1203 = vmatpush1.bf16.msra.mxu0 0
      %1204 = vmatprep.subr.bf16.mxu0 0
      %1205 = vmatpush1.bf16.msra.mxu0 %v1183
      %1206 = vmatprep.subr.bf16.mxu0 0
      %1207 = vmatpush1.bf16.msra.mxu0 %v1182
      %1208 = vmatprep.subr.bf16.mxu0 0
      %1209 = vmatpush2.bf16.msra.mxu0 0
      %1210 = vmatprep.subr.bf16.mxu0 0
      %1211 = vmatpush2.bf16.msra.mxu0 0
      %1212 = vmatprep.subr.bf16.mxu0 0
      %1213 = vmatpush2.bf16.msra.mxu0 0
      %1214 = vmatprep.subr.bf16.mxu0 0
      %1215 = vmatpush2.bf16.msra.mxu0 0
      %1216 = vmatprep.subr.bf16.mxu0 0
      %1217 = vmatpush2.bf16.msra.mxu0 0
      %1218 = vmatprep.subr.bf16.mxu0 0
      %1219 = vmatpush2.bf16.msra.mxu0 0
      %1220 = vmatprep.subr.bf16.mxu0 0
      %1221 = vmatpush2.bf16.msra.mxu0 0
      %1222 = vmatprep.subr.bf16.mxu0 0
      %1223 = vmatpush2.bf16.msra.mxu0 0
      %1224 = vmatprep.mubr.bf16.mxu0 0
      %1225 = vmatmul.mubr.bf16.gmra.mxu0 %v502
      %v1226 = vpop.f32.mrf.mxu0
      %v1227 = vadd.f32 %v1190, %v1226
      %v1228 = vpop.f32.mrf.mxu0
      %v1229 = vpop.f32.mrf.mxu0
      %v1230 = vadd.f32 %v1190, %v1229
      %v1231 = vpop.f32.mrf.mxu0
      %1232 = vdwg.mxu0
      %s1233 = scalar_lea.vmem %s2, 192
      %v1234 = vld [vmem:[%s1233] sm:$0xff]
      %v1235 = vld [vmem:[%s1233 + $0x8] sm:$0xff]
      %v1236 = vld [vmem:[%s1233 + $0x10] sm:$0xff]
      %v1237 = vld [vmem:[%s1233 + $0x18] sm:$0xff]
      %v1238 = vpack.c.bf16 %v1235, %v1234
      %v1239 = vpack.c.bf16 %v1237, %v1236
      %s1240 = scalar_lea.vmem %s3, 6
      %v1241 = vld [vmem:[%s1240] sm:$0x1]
      %v1243 = vlaneseq
      %v1244 = vshrl.u32 %v1243, 7
      %v1245 = vsub.s32 0, %v1244
      %v1246 = vrot.slane %v1241, %v1245
      %1248 = vmatprep.subr.bf16.mxu0 0
      %1249 = vmatpush1.bf16.msra.mxu0 0
      %1250 = vmatprep.subr.bf16.mxu0 0
      %1251 = vmatpush1.bf16.msra.mxu0 0
      %1252 = vmatprep.subr.bf16.mxu0 0
      %1253 = vmatpush1.bf16.msra.mxu0 0
      %1254 = vmatprep.subr.bf16.mxu0 0
      %1255 = vmatpush1.bf16.msra.mxu0 0
      %1256 = vmatprep.subr.bf16.mxu0 0
      %1257 = vmatpush1.bf16.msra.mxu0 0
      %1258 = vmatprep.subr.bf16.mxu0 0
      %1259 = vmatpush1.bf16.msra.mxu0 0
      %1260 = vmatprep.subr.bf16.mxu0 0
      %1261 = vmatpush1.bf16.msra.mxu0 %v1239
      %1262 = vmatprep.subr.bf16.mxu0 0
      %1263 = vmatpush1.bf16.msra.mxu0 %v1238
      %1264 = vmatprep.subr.bf16.mxu0 0
      %1265 = vmatpush2.bf16.msra.mxu0 0
      %1266 = vmatprep.subr.bf16.mxu0 0
      %1267 = vmatpush2.bf16.msra.mxu0 0
      %1268 = vmatprep.subr.bf16.mxu0 0
      %1269 = vmatpush2.bf16.msra.mxu0 0
      %1270 = vmatprep.subr.bf16.mxu0 0
      %1271 = vmatpush2.bf16.msra.mxu0 0
      %1272 = vmatprep.subr.bf16.mxu0 0
      %1273 = vmatpush2.bf16.msra.mxu0 0
      %1274 = vmatprep.subr.bf16.mxu0 0
      %1275 = vmatpush2.bf16.msra.mxu0 0
      %1276 = vmatprep.subr.bf16.mxu0 0
      %1277 = vmatpush2.bf16.msra.mxu0 0
      %1278 = vmatprep.subr.bf16.mxu0 0
      %1279 = vmatpush2.bf16.msra.mxu0 0
      %1280 = vmatprep.mubr.bf16.mxu0 0
      %1281 = vmatmul.mubr.bf16.gmra.mxu0 %v502
      %v1282 = vpop.f32.mrf.mxu0
      %v1283 = vadd.f32 %v1246, %v1282
      %v1284 = vpop.f32.mrf.mxu0
      %v1285 = vpop.f32.mrf.mxu0
      %v1286 = vadd.f32 %v1246, %v1285
      %v1287 = vpop.f32.mrf.mxu0
      %1288 = vdwg.mxu0
      %s1289 = scalar_lea.vmem %s2, 320
      %v1290 = vld [vmem:[%s1289] sm:$0xff]
      %v1291 = vld [vmem:[%s1289 + $0x8] sm:$0xff]
      %v1292 = vld [vmem:[%s1289 + $0x10] sm:$0xff]
      %v1293 = vld [vmem:[%s1289 + $0x18] sm:$0xff]
      %v1294 = vpack.c.bf16 %v1291, %v1290
      %v1295 = vpack.c.bf16 %v1293, %v1292
      %s1296 = scalar_lea.vmem %s3, 10
      %v1297 = vld [vmem:[%s1296] sm:$0x1]
      %v1299 = vlaneseq
      %v1300 = vshrl.u32 %v1299, 7
      %v1301 = vsub.s32 0, %v1300
      %v1302 = vrot.slane %v1297, %v1301
      %1304 = vmatprep.subr.bf16.mxu0 0
      %1305 = vmatpush1.bf16.msra.mxu0 0
      %1306 = vmatprep.subr.bf16.mxu0 0
      %1307 = vmatpush1.bf16.msra.mxu0 0
      %1308 = vmatprep.subr.bf16.mxu0 0
      %1309 = vmatpush1.bf16.msra.mxu0 0
      %1310 = vmatprep.subr.bf16.mxu0 0
      %1311 = vmatpush1.bf16.msra.mxu0 0
      %1312 = vmatprep.subr.bf16.mxu0 0
      %1313 = vmatpush1.bf16.msra.mxu0 0
      %1314 = vmatprep.subr.bf16.mxu0 0
      %1315 = vmatpush1.bf16.msra.mxu0 0
      %1316 = vmatprep.subr.bf16.mxu0 0
      %1317 = vmatpush1.bf16.msra.mxu0 %v1295
      %1318 = vmatprep.subr.bf16.mxu0 0
      %1319 = vmatpush1.bf16.msra.mxu0 %v1294
      %1320 = vmatprep.subr.bf16.mxu0 0
      %1321 = vmatpush2.bf16.msra.mxu0 0
      %1322 = vmatprep.subr.bf16.mxu0 0
      %1323 = vmatpush2.bf16.msra.mxu0 0
      %1324 = vmatprep.subr.bf16.mxu0 0
      %1325 = vmatpush2.bf16.msra.mxu0 0
      %1326 = vmatprep.subr.bf16.mxu0 0
      %1327 = vmatpush2.bf16.msra.mxu0 0
      %1328 = vmatprep.subr.bf16.mxu0 0
      %1329 = vmatpush2.bf16.msra.mxu0 0
      %1330 = vmatprep.subr.bf16.mxu0 0
      %1331 = vmatpush2.bf16.msra.mxu0 0
      %1332 = vmatprep.subr.bf16.mxu0 0
      %1333 = vmatpush2.bf16.msra.mxu0 0
      %1334 = vmatprep.subr.bf16.mxu0 0
      %1335 = vmatpush2.bf16.msra.mxu0 0
      %1336 = vmatprep.mubr.bf16.mxu0 0
      %1337 = vmatmul.mubr.bf16.gmra.mxu0 %v502
      %v1338 = vpop.f32.mrf.mxu0
      %v1339 = vadd.f32 %v1302, %v1338
      %v1340 = vpop.f32.mrf.mxu0
      %v1341 = vpop.f32.mrf.mxu0
      %v1342 = vadd.f32 %v1302, %v1341
      %v1343 = vpop.f32.mrf.mxu0
      %1344 = vdwg.mxu0
      %v1345 = vpack.c.bf16 %v1230, %v1227
      %v1346 = vpack.c.bf16 %v1286, %v1283
      %v1348 = vsel %vm659, %v1345, 0
      %v1351 = vsel %vm659, %v1346, 0
      %1353 = vmatprep.subr.bf16.mxu0 0
      %1354 = vmatpush1.bf16.xpose.msra.mxu0 0
      %1355 = vmatprep.subr.bf16.mxu0 0
      %1356 = vmatpush1.bf16.xpose.msra.mxu0 0
      %1357 = vmatprep.subr.bf16.mxu0 0
      %1358 = vmatpush1.bf16.xpose.msra.mxu0 0
      %1359 = vmatprep.subr.bf16.mxu0 0
      %1360 = vmatpush1.bf16.xpose.msra.mxu0 0
      %1361 = vmatprep.subr.bf16.mxu0 0
      %1362 = vmatpush1.bf16.xpose.msra.mxu0 0
      %1363 = vmatprep.subr.bf16.mxu0 0
      %1364 = vmatpush1.bf16.xpose.msra.mxu0 0
      %1365 = vmatprep.subr.bf16.mxu0 0
      %1366 = vmatpush1.bf16.xpose.msra.mxu0 0
      %1367 = vmatprep.subr.bf16.mxu0 0
      %1368 = vmatpush1.bf16.xpose.msra.mxu0 %v1351
      %1369 = vmatprep.subr.bf16.mxu0 0
      %1370 = vmatpush2.bf16.xpose.msra.mxu0 0
      %1371 = vmatprep.subr.bf16.mxu0 0
      %1372 = vmatpush2.bf16.xpose.msra.mxu0 0
      %1373 = vmatprep.subr.bf16.mxu0 0
      %1374 = vmatpush2.bf16.xpose.msra.mxu0 0
      %1375 = vmatprep.subr.bf16.mxu0 0
      %1376 = vmatpush2.bf16.xpose.msra.mxu0 0
      %1377 = vmatprep.subr.bf16.mxu0 0
      %1378 = vmatpush2.bf16.xpose.msra.mxu0 0
      %1379 = vmatprep.subr.bf16.mxu0 0
      %1380 = vmatpush2.bf16.xpose.msra.mxu0 0
      %1381 = vmatprep.subr.bf16.mxu0 0
      %1382 = vmatpush2.bf16.xpose.msra.mxu0 0
      %1383 = vmatprep.subr.bf16.mxu0 0
      %1384 = vmatpush2.bf16.xpose.msra.mxu0 0
      %1385 = vmatprep.mubr.bf16.mxu0 0
      %1386 = vmatmul.mubr.bf16.gmra.mxu0 %v1348
      %v1387 = vpop.f32.mrf.mxu0
      %v1388 = vadd.f32 0.0, %v1387
      %v1389 = vpop.f32.mrf.mxu0
      %v1390 = vpop.f32.mrf.mxu0
      %v1391 = vadd.f32 0.0, %v1390
      %v1392 = vpop.f32.mrf.mxu0
      %1393 = vdwg.mxu0
      %v1394 = vmul.f32 %v1388, 0.35355338
      %v1395 = vmul.f32 %v1391, 0.35355338
      %v1396 = vadd.f32 %v1394, %v713
      %v1397 = vadd.f32 %v1395, %v713
      %v1398 = vsel %vm717, %v1396, -inf
      %1399 = vmax.xlane.f32.xlu0 %v1398
      %v1400 = vpop.xlane.xlu0 %1399
      %v1401 = vsel %vm717, %v1397, -inf
      %1402 = vmax.xlane.f32.xlu0 %v1401
      %v1403 = vpop.xlane.xlu0 %1402
      %v1404 = vsub.f32 %v1396, %v1400
      %v1405 = vsub.f32 %v1397, %v1403
      %v1406 = vmul.f32 %v1404, 1.442695
      %v1407 = vpow.pop %v1406
      %v1408 = vmul.f32 %v1405, 1.442695
      %v1409 = vpow.pop %v1408
      %v1410 = vsel %vm717, %v1407, 0.0
      %1411 = vadd.xlane.f32.xlu0 %v1410
      %v1412 = vpop.xlane.xlu0 %1411
      %v1413 = vsel %vm717, %v1409, 0.0
      %1414 = vadd.xlane.f32.xlu0 %v1413
      %v1415 = vpop.xlane.xlu0 %1414
      %v1416 = vrcp.pop %v1412
      %v1417 = vrcp.pop %v1415
      %v1418 = vmul.f32 %v1407, %v1416
      %v1419 = vmul.f32 %v1409, %v1417
      %v1420 = vpack.c.bf16 %v1419, %v1418
      %v1421 = vpack.c.bf16 %v1342, %v1339
      %v1423 = vsel %vm717, %v1420, 0
      %1425 = vmatprep.subr.bf16.mxu0 0
      %1426 = vmatpush1.bf16.msra.mxu0 0
      %1427 = vmatprep.subr.bf16.mxu0 0
      %1428 = vmatpush1.bf16.msra.mxu0 0
      %1429 = vmatprep.subr.bf16.mxu0 0
      %1430 = vmatpush1.bf16.msra.mxu0 0
      %1431 = vmatprep.subr.bf16.mxu0 0
      %1432 = vmatpush1.bf16.msra.mxu0 0
      %1433 = vmatprep.subr.bf16.mxu0 0
      %1434 = vmatpush1.bf16.msra.mxu0 0
      %1435 = vmatprep.subr.bf16.mxu0 0
      %1436 = vmatpush1.bf16.msra.mxu0 0
      %1437 = vmatprep.subr.bf16.mxu0 0
      %1438 = vmatpush1.bf16.msra.mxu0 0
      %1439 = vmatprep.subr.bf16.mxu0 0
      %1440 = vmatpush1.bf16.msra.mxu0 %v1421
      %1441 = vmatprep.subr.bf16.mxu0 0
      %1442 = vmatpush2.bf16.msra.mxu0 0
      %1443 = vmatprep.subr.bf16.mxu0 0
      %1444 = vmatpush2.bf16.msra.mxu0 0
      %1445 = vmatprep.subr.bf16.mxu0 0
      %1446 = vmatpush2.bf16.msra.mxu0 0
      %1447 = vmatprep.subr.bf16.mxu0 0
      %1448 = vmatpush2.bf16.msra.mxu0 0
      %1449 = vmatprep.subr.bf16.mxu0 0
      %1450 = vmatpush2.bf16.msra.mxu0 0
      %1451 = vmatprep.subr.bf16.mxu0 0
      %1452 = vmatpush2.bf16.msra.mxu0 0
      %1453 = vmatprep.subr.bf16.mxu0 0
      %1454 = vmatpush2.bf16.msra.mxu0 0
      %1455 = vmatprep.subr.bf16.mxu0 0
      %1456 = vmatpush2.bf16.msra.mxu0 0
      %1457 = vmatprep.mubr.bf16.mxu0 0
      %1458 = vmatmul.mubr.bf16.gmra.mxu0 %v1423
      %v1459 = vpop.f32.mrf.mxu0
      %v1460 = vadd.f32 0.0, %v1459
      %v1461 = vpop.f32.mrf.mxu0
      %v1462 = vpop.f32.mrf.mxu0
      %v1463 = vadd.f32 0.0, %v1462
      %v1464 = vpop.f32.mrf.mxu0
      %1465 = vdwg.mxu0
      %v1466 = vpack.c.bf16 %v1463, %v1460
      %s1467 = scalar_lea.vmem %s4, 16
      %v1468 = vld [vmem:[%s1467] sm:$0xff]
      %v1469 = vpack.c.bf16 %v1468, %v1468
      %v1471 = vsel %vm659, %v1466, 0
      %v1474 = vsel %vm1085, %v1469, 0
      %1476 = vmatprep.subr.bf16.mxu0 0
      %1477 = vmatpush1.bf16.msra.mxu0 0
      %1478 = vmatprep.subr.bf16.mxu0 0
      %1479 = vmatpush1.bf16.msra.mxu0 0
      %1480 = vmatprep.subr.bf16.mxu0 0
      %1481 = vmatpush1.bf16.msra.mxu0 0
      %1482 = vmatprep.subr.bf16.mxu0 0
      %1483 = vmatpush1.bf16.msra.mxu0 0
      %1484 = vmatprep.subr.bf16.mxu0 0
      %1485 = vmatpush1.bf16.msra.mxu0 0
      %1486 = vmatprep.subr.bf16.mxu0 0
      %1487 = vmatpush1.bf16.msra.mxu0 0
      %1488 = vmatprep.subr.bf16.mxu0 0
      %1489 = vmatpush1.bf16.msra.mxu0 0
      %1490 = vmatprep.subr.bf16.mxu0 0
      %1491 = vmatpush1.bf16.msra.mxu0 %v1474
      %1492 = vmatprep.subr.bf16.mxu0 0
      %1493 = vmatpush2.bf16.msra.mxu0 0
      %1494 = vmatprep.subr.bf16.mxu0 0
      %1495 = vmatpush2.bf16.msra.mxu0 0
      %1496 = vmatprep.subr.bf16.mxu0 0
      %1497 = vmatpush2.bf16.msra.mxu0 0
      %1498 = vmatprep.subr.bf16.mxu0 0
      %1499 = vmatpush2.bf16.msra.mxu0 0
      %1500 = vmatprep.subr.bf16.mxu0 0
      %1501 = vmatpush2.bf16.msra.mxu0 0
      %1502 = vmatprep.subr.bf16.mxu0 0
      %1503 = vmatpush2.bf16.msra.mxu0 0
      %1504 = vmatprep.subr.bf16.mxu0 0
      %1505 = vmatpush2.bf16.msra.mxu0 0
      %1506 = vmatprep.subr.bf16.mxu0 0
      %1507 = vmatpush2.bf16.msra.mxu0 0
      %1508 = vmatprep.mubr.bf16.mxu0 0
      %1509 = vmatmul.mubr.bf16.gmra.mxu0 %v1471
      %v1510 = vpop.f32.mrf.mxu0
      %v1511 = vadd.f32 0.0, %v1510
      %v1512 = vpop.f32.mrf.mxu0
      %v1513 = vpop.f32.mrf.mxu0
      %v1514 = vadd.f32 0.0, %v1513
      %v1515 = vpop.f32.mrf.mxu0
      %1516 = vdwg.mxu0
      %v1517 = vadd.f32 %v1171, %v1511
      %v1518 = vadd.f32 %v1174, %v1514
      %s1519 = scalar_lea.vmem %s2, 96
      %v1520 = vld [vmem:[%s1519] sm:$0xff]
      %v1521 = vld [vmem:[%s1519 + $0x8] sm:$0xff]
      %v1522 = vld [vmem:[%s1519 + $0x10] sm:$0xff]
      %v1523 = vld [vmem:[%s1519 + $0x18] sm:$0xff]
      %v1524 = vpack.c.bf16 %v1521, %v1520
      %v1525 = vpack.c.bf16 %v1523, %v1522
      %s1526 = scalar_lea.vmem %s3, 3
      %v1527 = vld [vmem:[%s1526] sm:$0x1]
      %v1529 = vlaneseq
      %v1530 = vshrl.u32 %v1529, 7
      %v1531 = vsub.s32 0, %v1530
      %v1532 = vrot.slane %v1527, %v1531
      %1534 = vmatprep.subr.bf16.mxu0 0
      %1535 = vmatpush1.bf16.msra.mxu0 0
      %1536 = vmatprep.subr.bf16.mxu0 0
      %1537 = vmatpush1.bf16.msra.mxu0 0
      %1538 = vmatprep.subr.bf16.mxu0 0
      %1539 = vmatpush1.bf16.msra.mxu0 0
      %1540 = vmatprep.subr.bf16.mxu0 0
      %1541 = vmatpush1.bf16.msra.mxu0 0
      %1542 = vmatprep.subr.bf16.mxu0 0
      %1543 = vmatpush1.bf16.msra.mxu0 0
      %1544 = vmatprep.subr.bf16.mxu0 0
      %1545 = vmatpush1.bf16.msra.mxu0 0
      %1546 = vmatprep.subr.bf16.mxu0 0
      %1547 = vmatpush1.bf16.msra.mxu0 %v1525
      %1548 = vmatprep.subr.bf16.mxu0 0
      %1549 = vmatpush1.bf16.msra.mxu0 %v1524
      %1550 = vmatprep.subr.bf16.mxu0 0
      %1551 = vmatpush2.bf16.msra.mxu0 0
      %1552 = vmatprep.subr.bf16.mxu0 0
      %1553 = vmatpush2.bf16.msra.mxu0 0
      %1554 = vmatprep.subr.bf16.mxu0 0
      %1555 = vmatpush2.bf16.msra.mxu0 0
      %1556 = vmatprep.subr.bf16.mxu0 0
      %1557 = vmatpush2.bf16.msra.mxu0 0
      %1558 = vmatprep.subr.bf16.mxu0 0
      %1559 = vmatpush2.bf16.msra.mxu0 0
      %1560 = vmatprep.subr.bf16.mxu0 0
      %1561 = vmatpush2.bf16.msra.mxu0 0
      %1562 = vmatprep.subr.bf16.mxu0 0
      %1563 = vmatpush2.bf16.msra.mxu0 0
      %1564 = vmatprep.subr.bf16.mxu0 0
      %1565 = vmatpush2.bf16.msra.mxu0 0
      %1566 = vmatprep.mubr.bf16.mxu0 0
      %1567 = vmatmul.mubr.bf16.gmra.mxu0 %v502
      %v1568 = vpop.f32.mrf.mxu0
      %v1569 = vadd.f32 %v1532, %v1568
      %v1570 = vpop.f32.mrf.mxu0
      %v1571 = vpop.f32.mrf.mxu0
      %v1572 = vadd.f32 %v1532, %v1571
      %v1573 = vpop.f32.mrf.mxu0
      %1574 = vdwg.mxu0
      %s1575 = scalar_lea.vmem %s2, 224
      %v1576 = vld [vmem:[%s1575] sm:$0xff]
      %v1577 = vld [vmem:[%s1575 + $0x8] sm:$0xff]
      %v1578 = vld [vmem:[%s1575 + $0x10] sm:$0xff]
      %v1579 = vld [vmem:[%s1575 + $0x18] sm:$0xff]
      %v1580 = vpack.c.bf16 %v1577, %v1576
      %v1581 = vpack.c.bf16 %v1579, %v1578
      %s1582 = scalar_lea.vmem %s3, 7
      %v1583 = vld [vmem:[%s1582] sm:$0x1]
      %v1585 = vlaneseq
      %v1586 = vshrl.u32 %v1585, 7
      %v1587 = vsub.s32 0, %v1586
      %v1588 = vrot.slane %v1583, %v1587
      %1590 = vmatprep.subr.bf16.mxu0 0
      %1591 = vmatpush1.bf16.msra.mxu0 0
      %1592 = vmatprep.subr.bf16.mxu0 0
      %1593 = vmatpush1.bf16.msra.mxu0 0
      %1594 = vmatprep.subr.bf16.mxu0 0
      %1595 = vmatpush1.bf16.msra.mxu0 0
      %1596 = vmatprep.subr.bf16.mxu0 0
      %1597 = vmatpush1.bf16.msra.mxu0 0
      %1598 = vmatprep.subr.bf16.mxu0 0
      %1599 = vmatpush1.bf16.msra.mxu0 0
      %1600 = vmatprep.subr.bf16.mxu0 0
      %1601 = vmatpush1.bf16.msra.mxu0 0
      %1602 = vmatprep.subr.bf16.mxu0 0
      %1603 = vmatpush1.bf16.msra.mxu0 %v1581
      %1604 = vmatprep.subr.bf16.mxu0 0
      %1605 = vmatpush1.bf16.msra.mxu0 %v1580
      %1606 = vmatprep.subr.bf16.mxu0 0
      %1607 = vmatpush2.bf16.msra.mxu0 0
      %1608 = vmatprep.subr.bf16.mxu0 0
      %1609 = vmatpush2.bf16.msra.mxu0 0
      %1610 = vmatprep.subr.bf16.mxu0 0
      %1611 = vmatpush2.bf16.msra.mxu0 0
      %1612 = vmatprep.subr.bf16.mxu0 0
      %1613 = vmatpush2.bf16.msra.mxu0 0
      %1614 = vmatprep.subr.bf16.mxu0 0
      %1615 = vmatpush2.bf16.msra.mxu0 0
      %1616 = vmatprep.subr.bf16.mxu0 0
      %1617 = vmatpush2.bf16.msra.mxu0 0
      %1618 = vmatprep.subr.bf16.mxu0 0
      %1619 = vmatpush2.bf16.msra.mxu0 0
      %1620 = vmatprep.subr.bf16.mxu0 0
      %1621 = vmatpush2.bf16.msra.mxu0 0
      %1622 = vmatprep.mubr.bf16.mxu0 0
      %1623 = vmatmul.mubr.bf16.gmra.mxu0 %v502
      %v1624 = vpop.f32.mrf.mxu0
      %v1625 = vadd.f32 %v1588, %v1624
      %v1626 = vpop.f32.mrf.mxu0
      %v1627 = vpop.f32.mrf.mxu0
      %v1628 = vadd.f32 %v1588, %v1627
      %v1629 = vpop.f32.mrf.mxu0
      %1630 = vdwg.mxu0
      %s1631 = scalar_lea.vmem %s2, 352
      %v1632 = vld [vmem:[%s1631] sm:$0xff]
      %v1633 = vld [vmem:[%s1631 + $0x8] sm:$0xff]
      %v1634 = vld [vmem:[%s1631 + $0x10] sm:$0xff]
      %v1635 = vld [vmem:[%s1631 + $0x18] sm:$0xff]
      %v1636 = vpack.c.bf16 %v1633, %v1632
      %v1637 = vpack.c.bf16 %v1635, %v1634
      %s1638 = scalar_lea.vmem %s3, 11
      %v1639 = vld [vmem:[%s1638] sm:$0x1]
      %v1641 = vlaneseq
      %v1642 = vshrl.u32 %v1641, 7
      %v1643 = vsub.s32 0, %v1642
      %v1644 = vrot.slane %v1639, %v1643
      %1646 = vmatprep.subr.bf16.mxu0 0
      %1647 = vmatpush1.bf16.msra.mxu0 0
      %1648 = vmatprep.subr.bf16.mxu0 0
      %1649 = vmatpush1.bf16.msra.mxu0 0
      %1650 = vmatprep.subr.bf16.mxu0 0
      %1651 = vmatpush1.bf16.msra.mxu0 0
      %1652 = vmatprep.subr.bf16.mxu0 0
      %1653 = vmatpush1.bf16.msra.mxu0 0
      %1654 = vmatprep.subr.bf16.mxu0 0
      %1655 = vmatpush1.bf16.msra.mxu0 0
      %1656 = vmatprep.subr.bf16.mxu0 0
      %1657 = vmatpush1.bf16.msra.mxu0 0
      %1658 = vmatprep.subr.bf16.mxu0 0
      %1659 = vmatpush1.bf16.msra.mxu0 %v1637
      %1660 = vmatprep.subr.bf16.mxu0 0
      %1661 = vmatpush1.bf16.msra.mxu0 %v1636
      %1662 = vmatprep.subr.bf16.mxu0 0
      %1663 = vmatpush2.bf16.msra.mxu0 0
      %1664 = vmatprep.subr.bf16.mxu0 0
      %1665 = vmatpush2.bf16.msra.mxu0 0
      %1666 = vmatprep.subr.bf16.mxu0 0
      %1667 = vmatpush2.bf16.msra.mxu0 0
      %1668 = vmatprep.subr.bf16.mxu0 0
      %1669 = vmatpush2.bf16.msra.mxu0 0
      %1670 = vmatprep.subr.bf16.mxu0 0
      %1671 = vmatpush2.bf16.msra.mxu0 0
      %1672 = vmatprep.subr.bf16.mxu0 0
      %1673 = vmatpush2.bf16.msra.mxu0 0
      %1674 = vmatprep.subr.bf16.mxu0 0
      %1675 = vmatpush2.bf16.msra.mxu0 0
      %1676 = vmatprep.subr.bf16.mxu0 0
      %1677 = vmatpush2.bf16.msra.mxu0 0
      %1678 = vmatprep.mubr.bf16.mxu0 0
      %1679 = vmatmul.mubr.bf16.gmra.mxu0 %v502
      %v1680 = vpop.f32.mrf.mxu0
      %v1681 = vadd.f32 %v1644, %v1680
      %v1682 = vpop.f32.mrf.mxu0
      %v1683 = vpop.f32.mrf.mxu0
      %v1684 = vadd.f32 %v1644, %v1683
      %v1685 = vpop.f32.mrf.mxu0
      %1686 = vdwg.mxu0
      %v1687 = vpack.c.bf16 %v1572, %v1569
      %v1688 = vpack.c.bf16 %v1628, %v1625
      %v1690 = vsel %vm659, %v1687, 0
      %v1693 = vsel %vm659, %v1688, 0
      %1695 = vmatprep.subr.bf16.mxu0 0
      %1696 = vmatpush1.bf16.xpose.msra.mxu0 0
      %1697 = vmatprep.subr.bf16.mxu0 0
      %1698 = vmatpush1.bf16.xpose.msra.mxu0 0
      %1699 = vmatprep.subr.bf16.mxu0 0
      %1700 = vmatpush1.bf16.xpose.msra.mxu0 0
      %1701 = vmatprep.subr.bf16.mxu0 0
      %1702 = vmatpush1.bf16.xpose.msra.mxu0 0
      %1703 = vmatprep.subr.bf16.mxu0 0
      %1704 = vmatpush1.bf16.xpose.msra.mxu0 0
      %1705 = vmatprep.subr.bf16.mxu0 0
      %1706 = vmatpush1.bf16.xpose.msra.mxu0 0
      %1707 = vmatprep.subr.bf16.mxu0 0
      %1708 = vmatpush1.bf16.xpose.msra.mxu0 0
      %1709 = vmatprep.subr.bf16.mxu0 0
      %1710 = vmatpush1.bf16.xpose.msra.mxu0 %v1693
      %1711 = vmatprep.subr.bf16.mxu0 0
      %1712 = vmatpush2.bf16.xpose.msra.mxu0 0
      %1713 = vmatprep.subr.bf16.mxu0 0
      %1714 = vmatpush2.bf16.xpose.msra.mxu0 0
      %1715 = vmatprep.subr.bf16.mxu0 0
      %1716 = vmatpush2.bf16.xpose.msra.mxu0 0
      %1717 = vmatprep.subr.bf16.mxu0 0
      %1718 = vmatpush2.bf16.xpose.msra.mxu0 0
      %1719 = vmatprep.subr.bf16.mxu0 0
      %1720 = vmatpush2.bf16.xpose.msra.mxu0 0
      %1721 = vmatprep.subr.bf16.mxu0 0
      %1722 = vmatpush2.bf16.xpose.msra.mxu0 0
      %1723 = vmatprep.subr.bf16.mxu0 0
      %1724 = vmatpush2.bf16.xpose.msra.mxu0 0
      %1725 = vmatprep.subr.bf16.mxu0 0
      %1726 = vmatpush2.bf16.xpose.msra.mxu0 0
      %1727 = vmatprep.mubr.bf16.mxu0 0
      %1728 = vmatmul.mubr.bf16.gmra.mxu0 %v1690
      %v1729 = vpop.f32.mrf.mxu0
      %v1730 = vadd.f32 0.0, %v1729
      %v1731 = vpop.f32.mrf.mxu0
      %v1732 = vpop.f32.mrf.mxu0
      %v1733 = vadd.f32 0.0, %v1732
      %v1734 = vpop.f32.mrf.mxu0
      %1735 = vdwg.mxu0
      %v1736 = vmul.f32 %v1730, 0.35355338
      %v1737 = vmul.f32 %v1733, 0.35355338
      %v1738 = vadd.f32 %v1736, %v713
      %v1739 = vadd.f32 %v1737, %v713
      %v1740 = vsel %vm717, %v1738, -inf
      %1741 = vmax.xlane.f32.xlu0 %v1740
      %v1742 = vpop.xlane.xlu0 %1741
      %v1743 = vsel %vm717, %v1739, -inf
      %1744 = vmax.xlane.f32.xlu0 %v1743
      %v1745 = vpop.xlane.xlu0 %1744
      %v1746 = vsub.f32 %v1738, %v1742
      %v1747 = vsub.f32 %v1739, %v1745
      %v1748 = vmul.f32 %v1746, 1.442695
      %v1749 = vpow.pop %v1748
      %v1750 = vmul.f32 %v1747, 1.442695
      %v1751 = vpow.pop %v1750
      %v1752 = vsel %vm717, %v1749, 0.0
      %1753 = vadd.xlane.f32.xlu0 %v1752
      %v1754 = vpop.xlane.xlu0 %1753
      %v1755 = vsel %vm717, %v1751, 0.0
      %1756 = vadd.xlane.f32.xlu0 %v1755
      %v1757 = vpop.xlane.xlu0 %1756
      %v1758 = vrcp.pop %v1754
      %v1759 = vrcp.pop %v1757
      %v1760 = vmul.f32 %v1749, %v1758
      %v1761 = vmul.f32 %v1751, %v1759
      %v1762 = vpack.c.bf16 %v1761, %v1760
      %v1763 = vpack.c.bf16 %v1684, %v1681
      %v1765 = vsel %vm717, %v1762, 0
      %1767 = vmatprep.subr.bf16.mxu0 0
      %1768 = vmatpush1.bf16.msra.mxu0 0
      %1769 = vmatprep.subr.bf16.mxu0 0
      %1770 = vmatpush1.bf16.msra.mxu0 0
      %1771 = vmatprep.subr.bf16.mxu0 0
      %1772 = vmatpush1.bf16.msra.mxu0 0
      %1773 = vmatprep.subr.bf16.mxu0 0
      %1774 = vmatpush1.bf16.msra.mxu0 0
      %1775 = vmatprep.subr.bf16.mxu0 0
      %1776 = vmatpush1.bf16.msra.mxu0 0
      %1777 = vmatprep.subr.bf16.mxu0 0
      %1778 = vmatpush1.bf16.msra.mxu0 0
      %1779 = vmatprep.subr.bf16.mxu0 0
      %1780 = vmatpush1.bf16.msra.mxu0 0
      %1781 = vmatprep.subr.bf16.mxu0 0
      %1782 = vmatpush1.bf16.msra.mxu0 %v1763
      %1783 = vmatprep.subr.bf16.mxu0 0
      %1784 = vmatpush2.bf16.msra.mxu0 0
      %1785 = vmatprep.subr.bf16.mxu0 0
      %1786 = vmatpush2.bf16.msra.mxu0 0
      %1787 = vmatprep.subr.bf16.mxu0 0
      %1788 = vmatpush2.bf16.msra.mxu0 0
      %1789 = vmatprep.subr.bf16.mxu0 0
      %1790 = vmatpush2.bf16.msra.mxu0 0
      %1791 = vmatprep.subr.bf16.mxu0 0
      %1792 = vmatpush2.bf16.msra.mxu0 0
      %1793 = vmatprep.subr.bf16.mxu0 0
      %1794 = vmatpush2.bf16.msra.mxu0 0
      %1795 = vmatprep.subr.bf16.mxu0 0
      %1796 = vmatpush2.bf16.msra.mxu0 0
      %1797 = vmatprep.subr.bf16.mxu0 0
      %1798 = vmatpush2.bf16.msra.mxu0 0
      %1799 = vmatprep.mubr.bf16.mxu0 0
      %1800 = vmatmul.mubr.bf16.gmra.mxu0 %v1765
      %v1801 = vpop.f32.mrf.mxu0
      %v1802 = vadd.f32 0.0, %v1801
      %v1803 = vpop.f32.mrf.mxu0
      %v1804 = vpop.f32.mrf.mxu0
      %v1805 = vadd.f32 0.0, %v1804
      %v1806 = vpop.f32.mrf.mxu0
      %1807 = vdwg.mxu0
      %v1808 = vpack.c.bf16 %v1805, %v1802
      %s1809 = scalar_lea.vmem %s4, 24
      %v1810 = vld [vmem:[%s1809] sm:$0xff]
      %v1811 = vpack.c.bf16 %v1810, %v1810
      %v1813 = vsel %vm659, %v1808, 0
      %v1816 = vsel %vm1085, %v1811, 0
      %1818 = vmatprep.subr.bf16.mxu0 0
      %1819 = vmatpush1.bf16.msra.mxu0 0
      %1820 = vmatprep.subr.bf16.mxu0 0
      %1821 = vmatpush1.bf16.msra.mxu0 0
      %1822 = vmatprep.subr.bf16.mxu0 0
      %1823 = vmatpush1.bf16.msra.mxu0 0
      %1824 = vmatprep.subr.bf16.mxu0 0
      %1825 = vmatpush1.bf16.msra.mxu0 0
      %1826 = vmatprep.subr.bf16.mxu0 0
      %1827 = vmatpush1.bf16.msra.mxu0 0
      %1828 = vmatprep.subr.bf16.mxu0 0
      %1829 = vmatpush1.bf16.msra.mxu0 0
      %1830 = vmatprep.subr.bf16.mxu0 0
      %1831 = vmatpush1.bf16.msra.mxu0 0
      %1832 = vmatprep.subr.bf16.mxu0 0
      %1833 = vmatpush1.bf16.msra.mxu0 %v1816
      %1834 = vmatprep.subr.bf16.mxu0 0
      %1835 = vmatpush2.bf16.msra.mxu0 0
      %1836 = vmatprep.subr.bf16.mxu0 0
      %1837 = vmatpush2.bf16.msra.mxu0 0
      %1838 = vmatprep.subr.bf16.mxu0 0
      %1839 = vmatpush2.bf16.msra.mxu0 0
      %1840 = vmatprep.subr.bf16.mxu0 0
      %1841 = vmatpush2.bf16.msra.mxu0 0
      %1842 = vmatprep.subr.bf16.mxu0 0
      %1843 = vmatpush2.bf16.msra.mxu0 0
      %1844 = vmatprep.subr.bf16.mxu0 0
      %1845 = vmatpush2.bf16.msra.mxu0 0
      %1846 = vmatprep.subr.bf16.mxu0 0
      %1847 = vmatpush2.bf16.msra.mxu0 0
      %1848 = vmatprep.subr.bf16.mxu0 0
      %1849 = vmatpush2.bf16.msra.mxu0 0
      %1850 = vmatprep.mubr.bf16.mxu0 0
      %1851 = vmatmul.mubr.bf16.gmra.mxu0 %v1813
      %v1852 = vpop.f32.mrf.mxu0
      %v1853 = vadd.f32 0.0, %v1852
      %v1854 = vpop.f32.mrf.mxu0
      %v1855 = vpop.f32.mrf.mxu0
      %v1856 = vadd.f32 0.0, %v1855
      %v1857 = vpop.f32.mrf.mxu0
      %1858 = vdwg.mxu0
      %v1859 = vadd.f32 %v1517, %v1853
      %v1860 = vadd.f32 %v1518, %v1856
      %v1861 = vld [vmem:[%s5] sm:$0x1]
      %v1863 = vlaneseq
      %v1864 = vshrl.u32 %v1863, 7
      %v1865 = vsub.s32 0, %v1864
      %v1866 = vrot.slane %v1861, %v1865
      %v1868 = vadd.f32 %v1859, %v1866
      %v1869 = vadd.f32 %v1860, %v1866
      %v1870 = vadd.f32 %v483, %v1868
      %v1871 = vadd.f32 %v484, %v1869
      %v1872 = vld [vmem:[%s6] sm:$0x1]
      %v1873 = vld [vmem:[%s7] sm:$0x1]
      %v1874 = vsel %vm500, %v1870, 0.0
      %1875 = vadd.xlane.f32.xlu0 %v1874
      %v1876 = vpop.xlane.xlu0 %1875
      %v1877 = vsel %vm500, %v1871, 0.0
      %1878 = vadd.xlane.f32.xlu0 %v1877
      %v1879 = vpop.xlane.xlu0 %1878
      %v1880 = vrcp.pop 32.0
      %v1881 = vmul.f32 %v1876, %v1880
      %v1882 = vmul.f32 %v1879, %v1880
      %v1883 = vsub.f32 %v1870, %v1881
      %v1884 = vsub.f32 %v1871, %v1882
      %v1885 = vmul.f32 %v1883, %v1883
      %v1886 = vmul.f32 %v1884, %v1884
      %v1887 = vsel %vm500, %v1885, 0.0
      %1888 = vadd.xlane.f32.xlu0 %v1887
      %v1889 = vpop.xlane.xlu0 %1888
      %v1890 = vsel %vm500, %v1886, 0.0
      %1891 = vadd.xlane.f32.xlu0 %v1890
      %v1892 = vpop.xlane.xlu0 %1891
      %v1893 = vmul.f32 %v1889, %v1880
      %v1894 = vmul.f32 %v1892, %v1880
      %v1895 = vadd.f32 %v1893, 1e-05
      %v1896 = vadd.f32 %v1894, 1e-05
      %v1897 = vrsqrt.pop %v1895
      %v1898 = vrsqrt.pop %v1896
      %v1899 = vmul.f32 %v1883, %v1897
      %v1900 = vmul.f32 %v1884, %v1898
      %v1902 = vlaneseq
      %v1903 = vshrl.u32 %v1902, 7
      %v1904 = vsub.s32 0, %v1903
      %v1905 = vrot.slane %v1872, %v1904
      %v1907 = vmul.f32 %v1899, %v1905
      %v1908 = vmul.f32 %v1900, %v1905
      %v1910 = vlaneseq
      %v1911 = vshrl.u32 %v1910, 7
      %v1912 = vsub.s32 0, %v1911
      %v1913 = vrot.slane %v1873, %v1912
      %v1915 = vadd.f32 %v1907, %v1913
      %v1916 = vadd.f32 %v1908, %v1913
      %v1917 = vpack.c.bf16 %v1916, %v1915
      %v1918 = vld [vmem:[%s8] sm:$0xff]
      %v1919 = vld [vmem:[%s8 + $0x8] sm:$0xff]
      %v1920 = vld [vmem:[%s8 + $0x10] sm:$0xff]
      %v1921 = vld [vmem:[%s8 + $0x18] sm:$0xff]
      %v1922 = vpack.c.bf16 %v1919, %v1918
      %v1923 = vpack.c.bf16 %v1921, %v1920
      %v1924 = vld [vmem:[%s9] sm:$0x1]
      %v1926 = vlaneseq
      %v1927 = vshrl.u32 %v1926, 7
      %v1928 = vsub.s32 0, %v1927
      %v1929 = vrot.slane %v1924, %v1928
      %v1932 = vsel %vm500, %v1917, 0
      %1934 = vmatprep.subr.bf16.mxu0 0
      %1935 = vmatpush1.bf16.msra.mxu0 0
      %1936 = vmatprep.subr.bf16.mxu0 0
      %1937 = vmatpush1.bf16.msra.mxu0 0
      %1938 = vmatprep.subr.bf16.mxu0 0
      %1939 = vmatpush1.bf16.msra.mxu0 0
      %1940 = vmatprep.subr.bf16.mxu0 0
      %1941 = vmatpush1.bf16.msra.mxu0 0
      %1942 = vmatprep.subr.bf16.mxu0 0
      %1943 = vmatpush1.bf16.msra.mxu0 0
      %1944 = vmatprep.subr.bf16.mxu0 0
      %1945 = vmatpush1.bf16.msra.mxu0 0
      %1946 = vmatprep.subr.bf16.mxu0 0
      %1947 = vmatpush1.bf16.msra.mxu0 %v1923
      %1948 = vmatprep.subr.bf16.mxu0 0
      %1949 = vmatpush1.bf16.msra.mxu0 %v1922
      %1950 = vmatprep.subr.bf16.mxu0 0
      %1951 = vmatpush2.bf16.msra.mxu0 0
      %1952 = vmatprep.subr.bf16.mxu0 0
      %1953 = vmatpush2.bf16.msra.mxu0 0
      %1954 = vmatprep.subr.bf16.mxu0 0
      %1955 = vmatpush2.bf16.msra.mxu0 0
      %1956 = vmatprep.subr.bf16.mxu0 0
      %1957 = vmatpush2.bf16.msra.mxu0 0
      %1958 = vmatprep.subr.bf16.mxu0 0
      %1959 = vmatpush2.bf16.msra.mxu0 0
      %1960 = vmatprep.subr.bf16.mxu0 0
      %1961 = vmatpush2.bf16.msra.mxu0 0
      %1962 = vmatprep.subr.bf16.mxu0 0
      %1963 = vmatpush2.bf16.msra.mxu0 0
      %1964 = vmatprep.subr.bf16.mxu0 0
      %1965 = vmatpush2.bf16.msra.mxu0 0
      %1966 = vmatprep.mubr.bf16.mxu0 0
      %1967 = vmatmul.mubr.bf16.gmra.mxu0 %v1932
      %v1968 = vpop.f32.mrf.mxu0
      %v1969 = vadd.f32 %v1929, %v1968
      %v1970 = vpop.f32.mrf.mxu0
      %v1971 = vpop.f32.mrf.mxu0
      %v1972 = vadd.f32 %v1929, %v1971
      %v1973 = vpop.f32.mrf.mxu0
      %1974 = vdwg.mxu0
      %v1975 = vmax.f32 %v1969, 0.0
      %v1976 = vmax.f32 %v1972, 0.0
      %v1977 = vpack.c.bf16 %v1976, %v1975
      %v1978 = vld [vmem:[%s10] sm:$0xff]
      %v1979 = vld [vmem:[%s10 + $0x8] sm:$0xff]
      %v1980 = vld [vmem:[%s10 + $0x10] sm:$0xff]
      %v1981 = vld [vmem:[%s10 + $0x18] sm:$0xff]
      %v1982 = vld [vmem:[%s10 + $0x20] sm:$0xff]
      %v1983 = vld [vmem:[%s10 + $0x28] sm:$0xff]
      %v1984 = vld [vmem:[%s10 + $0x30] sm:$0xff]
      %v1985 = vld [vmem:[%s10 + $0x38] sm:$0xff]
      %v1986 = vpack.c.bf16 %v1979, %v1978
      %v1987 = vpack.c.bf16 %v1981, %v1980
      %v1988 = vpack.c.bf16 %v1983, %v1982
      %v1989 = vpack.c.bf16 %v1985, %v1984
      %v1990 = vld [vmem:[%s11] sm:$0x1]
      %v1992 = vlaneseq
      %v1993 = vshrl.u32 %v1992, 7
      %v1994 = vsub.s32 0, %v1993
      %v1995 = vrot.slane %v1990, %v1994
      %vm1997 = vcmask 523264
      %v1999 = vsel %vm1997, %v1977, 0
      %2001 = vmatprep.subr.bf16.mxu0 0
      %2002 = vmatpush1.bf16.msra.mxu0 0
      %2003 = vmatprep.subr.bf16.mxu0 0
      %2004 = vmatpush1.bf16.msra.mxu0 0
      %2005 = vmatprep.subr.bf16.mxu0 0
      %2006 = vmatpush1.bf16.msra.mxu0 0
      %2007 = vmatprep.subr.bf16.mxu0 0
      %2008 = vmatpush1.bf16.msra.mxu0 0
      %2009 = vmatprep.subr.bf16.mxu0 0
      %2010 = vmatpush1.bf16.msra.mxu0 %v1989
      %2011 = vmatprep.subr.bf16.mxu0 0
      %2012 = vmatpush1.bf16.msra.mxu0 %v1988
      %2013 = vmatprep.subr.bf16.mxu0 0
      %2014 = vmatpush1.bf16.msra.mxu0 %v1987
      %2015 = vmatprep.subr.bf16.mxu0 0
      %2016 = vmatpush1.bf16.msra.mxu0 %v1986
      %2017 = vmatprep.subr.bf16.mxu0 0
      %2018 = vmatpush2.bf16.msra.mxu0 0
      %2019 = vmatprep.subr.bf16.mxu0 0
      %2020 = vmatpush2.bf16.msra.mxu0 0
      %2021 = vmatprep.subr.bf16.mxu0 0
      %2022 = vmatpush2.bf16.msra.mxu0 0
      %2023 = vmatprep.subr.bf16.mxu0 0
      %2024 = vmatpush2.bf16.msra.mxu0 0
      %2025 = vmatprep.subr.bf16.mxu0 0
      %2026 = vmatpush2.bf16.msra.mxu0 0
      %2027 = vmatprep.subr.bf16.mxu0 0
      %2028 = vmatpush2.bf16.msra.mxu0 0
      %2029 = vmatprep.subr.bf16.mxu0 0
      %2030 = vmatpush2.bf16.msra.mxu0 0
      %2031 = vmatprep.subr.bf16.mxu0 0
      %2032 = vmatpush2.bf16.msra.mxu0 0
      %2033 = vmatprep.mubr.bf16.mxu0 0
      %2034 = vmatmul.mubr.bf16.gmra.mxu0 %v1999
      %v2035 = vpop.f32.mrf.mxu0
      %v2036 = vadd.f32 %v1995, %v2035
      %v2037 = vpop.f32.mrf.mxu0
      %v2038 = vpop.f32.mrf.mxu0
      %v2039 = vadd.f32 %v1995, %v2038
      %v2040 = vpop.f32.mrf.mxu0
      %2041 = vdwg.mxu0
      %v2042 = vadd.f32 %v1915, %v2036
      %v2043 = vadd.f32 %v1916, %v2039
      %v2044 = vld [vmem:[%s12] sm:$0x1]
      %v2045 = vld [vmem:[%s13] sm:$0x1]
      %v2046 = vsel %vm500, %v2042, 0.0
      %2047 = vadd.xlane.f32.xlu0 %v2046
      %v2048 = vpop.xlane.xlu0 %2047
      %v2049 = vsel %vm500, %v2043, 0.0
      %2050 = vadd.xlane.f32.xlu0 %v2049
      %v2051 = vpop.xlane.xlu0 %2050
      %v2052 = vmul.f32 %v2048, %v1880
      %v2053 = vmul.f32 %v2051, %v1880
      %v2054 = vsub.f32 %v2042, %v2052
      %v2055 = vsub.f32 %v2043, %v2053
      %v2056 = vmul.f32 %v2054, %v2054
      %v2057 = vmul.f32 %v2055, %v2055
      %v2058 = vsel %vm500, %v2056, 0.0
      %2059 = vadd.xlane.f32.xlu0 %v2058
      %v2060 = vpop.xlane.xlu0 %2059
      %v2061 = vsel %vm500, %v2057, 0.0
      %2062 = vadd.xlane.f32.xlu0 %v2061
      %v2063 = vpop.xlane.xlu0 %2062
      %v2064 = vmul.f32 %v2060, %v1880
      %v2065 = vmul.f32 %v2063, %v1880
      %v2066 = vadd.f32 %v2064, 1e-05
      %v2067 = vadd.f32 %v2065, 1e-05
      %v2068 = vrsqrt.pop %v2066
      %v2069 = vrsqrt.pop %v2067
      %v2070 = vmul.f32 %v2054, %v2068
      %v2071 = vmul.f32 %v2055, %v2069
      %v2073 = vlaneseq
      %v2074 = vshrl.u32 %v2073, 7
      %v2075 = vsub.s32 0, %v2074
      %v2076 = vrot.slane %v2044, %v2075
      %v2078 = vmul.f32 %v2070, %v2076
      %v2079 = vmul.f32 %v2071, %v2076
      %v2081 = vlaneseq
      %v2082 = vshrl.u32 %v2081, 7
      %v2083 = vsub.s32 0, %v2082
      %v2084 = vrot.slane %v2045, %v2083
      %v2086 = vadd.f32 %v2078, %v2084
      %v2087 = vadd.f32 %v2079, %v2084
      %2088 = vst.msk [vmem:[%s481] sm:$0xff] %vm500, %v2086
      %2089 = vst.msk [vmem:[%s481 + $0x8] sm:$0xff] %vm500, %v2087
      %p2090 = scmp.lt.s32.totalorder %s25, 1
      %s2091 = scalar_select %p2090, %s25, 1
      %s2092 = smul.addr %s2091, 2
      %s2093 = smul.addr %s2092, 8
      %s2094 = scalar_lea.vmem %s14, %s2093
      // Predicated region
      $region77: #{forward.6} parent=75 // pred_check
        %p2095 = pneg %p347
      $region78: #{forward.6} parent=75 // pred_check_branch
        %2097 = sbr.rel (%p2095) target = $region80
      $region79: #{forward.6} parent=75 // pred_region
        _
      $region80: #{forward.6} parent=75 // pred_fallthru
        _
    $region76: #{forward.6} parent=5 // pred_fallthru
      _
    %p2098 = scmp.le.s32.totalorder 2, %s20
    // Predicated region
    $region81: #{forward.6} parent=5 // pred_check
      %p2099 = pneg %p2098
    $region82: #{forward.6} parent=5 // pred_check_branch
      %2101 = sbr.rel (%p2099) target = $region84
    $region83: #{forward.6} parent=5 // pred_region
      %s2102 = ssub.s32 %s20, 2
      // Predicated region
      $region85: #{forward.6} parent=83 // pred_check
        %p2103 = pneg %p353
      $region86: #{forward.6} parent=83 // pred_check_branch
        %2105 = sbr.rel (%p2103) target = $region88
      $region87: #{forward.6} parent=83 // pred_region
        %p2106 = scmp.lt.s32.totalorder %s26, 1
        %s2107 = scalar_select %p2106, %s26, 1
        %s2108 = smul.addr %s2107, 2
        %s2109 = smul.addr %s2108, 8
        %s2110 = scalar_lea.vmem %s14, %s2109
      $region88: #{forward.6} parent=83 // pred_fallthru
        _
    $region84: #{forward.6} parent=5 // pred_fallthru
      _
  $region6: #{forward.6} parent=0 // loop_footer
    %s24 = sadd.s32 1, %s20
  $region7: #{forward.6} parent=0 // loop_footer_branch
    %19 = sbr.rel target = $region3
  $region8: #{forward.6} parent=0 // loop_exit
    _

// kernel: forward.8
$region0: #{forward.8}
  #allocation0 [shape = 'u32[]', space=smem, size = 0x4, offset = 0x4, fixed_abs, tag = 'smem constant byte address 0x4 - core index']
  #allocation1 [shape = 'u32[144,128]{1,0:T(1,128)}', space=vmem, size = 0x12000, scoped, tag = 'internal scratch']
  %s0 = inlined_call_operand.vmem [shape: f32[2,15,64], index: 0, kind: input, shape index: {}]
  %s1 = inlined_call_operand.vmem [shape: f32[64,128], index: 1, kind: input, shape index: {}]
  %s2 = inlined_call_operand.vmem [shape: f32[1,128], index: 2, kind: input, shape index: {}]
  %s3 = inlined_call_operand.vmem [shape: f32[2,15,128], index: 3, kind: output, shape index: {}]
  %s4 = sld [smem:[#allocation0]]
  $region45: #{forward.8} parent=0
    _
  %s6 = ssub.s32 1, %s4
  %s7 = scalar_select 0, %s6, %s4
  loop: start=0, step=1, limit=4
  $region2: #{forward.8} parent=0 // loop_pre_header
    _
  $region3: #{forward.8} parent=0 // loop_header
    %s9 = sphi 0, %s13
    %p10 = scmp.ge.s32.totalorder %s9, 4
    %s19 = sphi 0, %s21
    %s22 = sphi 0, %s19
    %s23 = sphi 0, %s22
    %s39 = sphi 0, %s23
    %s43 = sphi 0, %s43
    %s45 = sphi 0, %s43
    %s46 = sphi 0, %s45
    %s60 = sphi 0, %s46
    %s64 = sphi 0, %s64
    %s66 = sphi 0, %s64
    %s67 = sphi 0, %s66
    %s81 = sphi 0, %s67
    %s87 = sphi 0, %s89
    %s90 = sphi 0, %s87
    %s91 = sphi 0, %s90
    %s107 = sphi 0, %s91
  $region4: #{forward.8} parent=0 // loop_header_branch
    %12 = sbr.rel (%p10) target = $region8
  $region5: #{forward.8} parent=0 // loop_body
    %s14 = ssub.s32 %s9, 1
    %s15 = ssub.s32 %s9, 2
    %s16 = sadd.s32 %s9, 1
    %s17 = ssub.s32 %s9, %s16
    %p18 = scmp.eq.s32.totalorder %s17, 0
    %s20 = sadd.s32 %s19, 1
    %s21 = scalar_select %p18, %s19, %s20
    %p24 = pneg %p18
    %p25 = scmp.eq.s32.totalorder %s9, 1
    %p26 = por %p24, %p25
    %p27 = scmp.ne.s32.totalorder %s19, %s22
    %p28 = scmp.eq.s32.totalorder %s9, 0
    %p29 = por %p27, %p28
    %p30 = scmp.ne.s32.totalorder %s19, %s22
    %p31 = scmp.eq.s32.totalorder %s14, 1
    %p32 = por %p30, %p31
    %p33 = scmp.ne.s32.totalorder %s22, %s23
    %p34 = scmp.eq.s32.totalorder %s14, 0
    %p35 = por %p33, %p34
    %p36 = scmp.ne.s32.totalorder %s22, %s23
    %p37 = scmp.eq.s32.totalorder %s15, 1
    %p38 = por %p36, %p37
    %p40 = scmp.ne.s32.totalorder %s23, %s39
    %p41 = scmp.eq.s32.totalorder %s15, 0
    %p42 = por %p40, %p41
    %s44 = sadd.s32 %s43, 1
    %p47 = scmp.eq.s32.totalorder %s9, 1
    %p48 = scmp.ne.s32.totalorder %s43, %s45
    %p49 = scmp.eq.s32.totalorder %s9, 0
    %p50 = por %p48, %p49
    %p51 = scmp.ne.s32.totalorder %s43, %s45
    %p52 = scmp.eq.s32.totalorder %s14, 1
    %p53 = por %p51, %p52
    %p54 = scmp.ne.s32.totalorder %s45, %s46
    %p55 = scmp.eq.s32.totalorder %s14, 0
    %p56 = por %p54, %p55
    %p57 = scmp.ne.s32.totalorder %s45, %s46
    %p58 = scmp.eq.s32.totalorder %s15, 1
    %p59 = por %p57, %p58
    %p61 = scmp.ne.s32.totalorder %s46, %s60
    %p62 = scmp.eq.s32.totalorder %s15, 0
    %p63 = por %p61, %p62
    %s65 = sadd.s32 %s64, 1
    %p68 = scmp.eq.s32.totalorder %s9, 1
    %p69 = scmp.ne.s32.totalorder %s64, %s66
    %p70 = scmp.eq.s32.totalorder %s9, 0
    %p71 = por %p69, %p70
    %p72 = scmp.ne.s32.totalorder %s64, %s66
    %p73 = scmp.eq.s32.totalorder %s14, 1
    %p74 = por %p72, %p73
    %p75 = scmp.ne.s32.totalorder %s66, %s67
    %p76 = scmp.eq.s32.totalorder %s14, 0
    %p77 = por %p75, %p76
    %p78 = scmp.ne.s32.totalorder %s66, %s67
    %p79 = scmp.eq.s32.totalorder %s15, 1
    %p80 = por %p78, %p79
    %p82 = scmp.ne.s32.totalorder %s67, %s81
    %p83 = scmp.eq.s32.totalorder %s15, 0
    %p84 = por %p82, %p83
    %s85 = ssub.s32 %s9, %s16
    %p86 = scmp.eq.s32.totalorder %s85, 0
    %s88 = sadd.s32 %s87, 1
    %s89 = scalar_select %p86, %s87, %s88
    %p92 = pneg %p86
    %p93 = scmp.eq.s32.totalorder %s9, 1
    %p94 = por %p92, %p93
    %p95 = scmp.ne.s32.totalorder %s87, %s90
    %p96 = scmp.eq.s32.totalorder %s9, 0
    %p97 = por %p95, %p96
    %p98 = scmp.ne.s32.totalorder %s87, %s90
    %p99 = scmp.eq.s32.totalorder %s14, 1
    %p100 = por %p98, %p99
    %p101 = scmp.ne.s32.totalorder %s90, %s91
    %p102 = scmp.eq.s32.totalorder %s14, 0
    %p103 = por %p101, %p102
    %p104 = scmp.ne.s32.totalorder %s90, %s91
    %p105 = scmp.eq.s32.totalorder %s15, 1
    %p106 = por %p104, %p105
    %p108 = scmp.ne.s32.totalorder %s91, %s107
    %p109 = scmp.eq.s32.totalorder %s15, 0
    %p110 = por %p108, %p109
    %p111 = scmp.le.s32.totalorder 1, %s9
    %p112 = scmp.lt.s32.totalorder %s9, 3
    %p113 = pnand %p111, %p112
    %p114 = pneg %p113
    // Predicated region
    $region9: #{forward.8} parent=5 // pred_check
      _
    $region10: #{forward.8} parent=5 // pred_check_branch
      %116 = sbr.rel (%p113) target = $region12
    $region11: #{forward.8} parent=5 // pred_region
      %s117 = ssub.s32 %s9, 1
      // Predicated region
      $region13: #{forward.8} parent=11 // pred_check
        %p118 = pneg %p56
      $region14: #{forward.8} parent=11 // pred_check_branch
        %120 = sbr.rel (%p118) target = $region16
      $region15: #{forward.8} parent=11 // pred_region
        _
      $region16: #{forward.8} parent=11 // pred_fallthru
        _
      // Predicated region
      $region17: #{forward.8} parent=11 // pred_check
        %p121 = pneg %p77
      $region18: #{forward.8} parent=11 // pred_check_branch
        %123 = sbr.rel (%p121) target = $region20
      $region19: #{forward.8} parent=11 // pred_region
        _
      $region20: #{forward.8} parent=11 // pred_fallthru
        _
    $region12: #{forward.8} parent=5 // pred_fallthru
      _
    %p124 = scmp.lt.s32.totalorder %s9, 2
    // Predicated region
    $region21: #{forward.8} parent=5 // pred_check
      %p125 = pneg %p124
    $region22: #{forward.8} parent=5 // pred_check_branch
      %127 = sbr.rel (%p125) target = $region24
    $region23: #{forward.8} parent=5 // pred_region
      // Predicated region
      $region25: #{forward.8} parent=23 // pred_check
        %p128 = pneg %p29
      $region26: #{forward.8} parent=23 // pred_check_branch
        %130 = sbr.rel (%p128) target = $region28
      $region27: #{forward.8} parent=23 // pred_region
        %p131 = scmp.lt.s32.totalorder %s9, 1
        %s132 = scalar_select %p131, %s9, 1
        %s133 = smul.addr %s132, 2
        %s134 = smul.addr %s133, 8
        %s135 = scalar_lea.vmem %s0, %s134
      $region28: #{forward.8} parent=23 // pred_fallthru
        _
    $region24: #{forward.8} parent=5 // pred_fallthru
      _
    %p136 = scmp.le.s32.totalorder 1, %s9
    %p137 = scmp.lt.s32.totalorder %s9, 3
    %p138 = pnand %p136, %p137
    %p139 = pneg %p138
    // Predicated region
    $region29: #{forward.8} parent=5 // pred_check
      _
    $region30: #{forward.8} parent=5 // pred_check_branch
      %141 = sbr.rel (%p138) target = $region32
    $region31: #{forward.8} parent=5 // pred_region
      %s142 = ssub.s32 %s9, 1
      %p143 = scmp.lt.s32.totalorder %s14, 1
      %s144 = scalar_select %p143, %s14, 1
      %s145 = smul.addr %s144, 2
      %s146 = smul.addr %s145, 8
      %s147 = scalar_lea.vmem %s0, %s146
      %p148 = pneg %p35
      %p149 = pneg %p32
      %p150 = pneg %p56
      %p151 = pneg %p53
      %p152 = pneg %p77
      %p153 = pneg %p74
      %p154 = pneg %p103
      %p155 = pneg %p100
      %p156 = scmp.lt.s32.totalorder %s14, 1
      %s157 = scalar_select %p156, %s14, 1
      %s158 = smul.addr %s157, 2
      %s159 = smul.addr %s158, 8
      %s160 = scalar_lea.vmem %s3, %s159
      %p161 = scmp.lt.s32.totalorder %s14, 1
      %s162 = scalar_select %p161, %s14, 1
      %s163 = smul.addr %s162, 2
      %s164 = smul.addr %s163, 8
      %s165 = scalar_lea.vmem %s0, %s164
      %p166 = scmp.lt.s32.totalorder %s14, 1
      %s167 = scalar_select %p166, %s14, 1
      %s168 = smul.addr %s167, 2
      %s169 = smul.addr %s168, 8
      %s170 = scalar_lea.vmem %s3, %s169
      %v172 = vld [vmem:[%s165] sm:$0xff]
      %v173 = vld [vmem:[%s165 + $0x8] sm:$0x7f]
      %v174 = vpack.c.bf16 %v173, %v172
      %v175 = vld [vmem:[%s1] sm:$0xff]
      %v176 = vld [vmem:[%s1 + $0x8] sm:$0xff]
      %v177 = vld [vmem:[%s1 + $0x10] sm:$0xff]
      %v178 = vld [vmem:[%s1 + $0x18] sm:$0xff]
      %v179 = vld [vmem:[%s1 + $0x20] sm:$0xff]
      %v180 = vld [vmem:[%s1 + $0x28] sm:$0xff]
      %v181 = vld [vmem:[%s1 + $0x30] sm:$0xff]
      %v182 = vld [vmem:[%s1 + $0x38] sm:$0xff]
      %v183 = vpack.c.bf16 %v176, %v175
      %v184 = vpack.c.bf16 %v178, %v177
      %v185 = vpack.c.bf16 %v180, %v179
      %v186 = vpack.c.bf16 %v182, %v181
      %v187 = vld [vmem:[%s2] sm:$0x1]
      %v189 = vlaneseq
      %v190 = vshrl.u32 %v189, 7
      %v191 = vsub.s32 0, %v190
      %v192 = vrot.slane %v187, %v191
      %vm194 = vcmask 523264
      %v196 = vsel %vm194, %v174, 0
      %198 = vmatprep.subr.bf16.mxu0 0
      %199 = vmatpush1.bf16.msra.mxu0 0
      %200 = vmatprep.subr.bf16.mxu0 0
      %201 = vmatpush1.bf16.msra.mxu0 0
      %202 = vmatprep.subr.bf16.mxu0 0
      %203 = vmatpush1.bf16.msra.mxu0 0
      %204 = vmatprep.subr.bf16.mxu0 0
      %205 = vmatpush1.bf16.msra.mxu0 0
      %206 = vmatprep.subr.bf16.mxu0 0
      %207 = vmatpush1.bf16.msra.mxu0 %v186
      %208 = vmatprep.subr.bf16.mxu0 0
      %209 = vmatpush1.bf16.msra.mxu0 %v185
      %210 = vmatprep.subr.bf16.mxu0 0
      %211 = vmatpush1.bf16.msra.mxu0 %v184
      %212 = vmatprep.subr.bf16.mxu0 0
      %213 = vmatpush1.bf16.msra.mxu0 %v183
      %214 = vmatprep.subr.bf16.mxu0 0
      %215 = vmatpush2.bf16.msra.mxu0 0
      %216 = vmatprep.subr.bf16.mxu0 0
      %217 = vmatpush2.bf16.msra.mxu0 0
      %218 = vmatprep.subr.bf16.mxu0 0
      %219 = vmatpush2.bf16.msra.mxu0 0
      %220 = vmatprep.subr.bf16.mxu0 0
      %221 = vmatpush2.bf16.msra.mxu0 0
      %222 = vmatprep.subr.bf16.mxu0 0
      %223 = vmatpush2.bf16.msra.mxu0 0
      %224 = vmatprep.subr.bf16.mxu0 0
      %225 = vmatpush2.bf16.msra.mxu0 0
      %226 = vmatprep.subr.bf16.mxu0 0
      %227 = vmatpush2.bf16.msra.mxu0 0
      %228 = vmatprep.subr.bf16.mxu0 0
      %229 = vmatpush2.bf16.msra.mxu0 0
      %230 = vmatprep.mubr.bf16.mxu0 0
      %231 = vmatmul.mubr.bf16.gmra.mxu0 %v196
      %v232 = vpop.f32.mrf.mxu0
      %v233 = vadd.f32 %v192, %v232
      %v234 = vpop.f32.mrf.mxu0
      %v235 = vpop.f32.mrf.mxu0
      %v236 = vadd.f32 %v192, %v235
      %v237 = vpop.f32.mrf.mxu0
      %238 = vdwg.mxu0
      %239 = vst [vmem:[%s170] sm:$0xff] %v233
      %240 = vst [vmem:[%s170 + $0x8] sm:$0x7f] %v236
      %p241 = scmp.lt.s32.totalorder %s14, 1
      %s242 = scalar_select %p241, %s14, 1
      %s243 = smul.addr %s242, 2
      %s244 = smul.addr %s243, 8
      %s245 = scalar_lea.vmem %s3, %s244
      // Predicated region
      $region33: #{forward.8} parent=31 // pred_check
        %p246 = pneg %p100
      $region34: #{forward.8} parent=31 // pred_check_branch
        %248 = sbr.rel (%p246) target = $region36
      $region35: #{forward.8} parent=31 // pred_region
        _
      $region36: #{forward.8} parent=31 // pred_fallthru
        _
    $region32: #{forward.8} parent=5 // pred_fallthru
      _
    %p249 = scmp.le.s32.totalorder 2, %s9
    // Predicated region
    $region37: #{forward.8} parent=5 // pred_check
      %p250 = pneg %p249
    $region38: #{forward.8} parent=5 // pred_check_branch
      %252 = sbr.rel (%p250) target = $region40
    $region39: #{forward.8} parent=5 // pred_region
      %s253 = ssub.s32 %s9, 2
      // Predicated region
      $region41: #{forward.8} parent=39 // pred_check
        %p254 = pneg %p106
      $region42: #{forward.8} parent=39 // pred_check_branch
        %256 = sbr.rel (%p254) target = $region44
      $region43: #{forward.8} parent=39 // pred_region
        %p257 = scmp.lt.s32.totalorder %s15, 1
        %s258 = scalar_select %p257, %s15, 1
        %s259 = smul.addr %s258, 2
        %s260 = smul.addr %s259, 8
        %s261 = scalar_lea.vmem %s3, %s260
      $region44: #{forward.8} parent=39 // pred_fallthru
        _
    $region40: #{forward.8} parent=5 // pred_fallthru
      _
  $region6: #{forward.8} parent=0 // loop_footer
    %s13 = sadd.s32 1, %s9
  $region7: #{forward.8} parent=0 // loop_footer_branch
    %8 = sbr.rel target = $region3
  $region8: #{forward.8} parent=0 // loop_exit
    _

// kernel: forward.11
$region0: #{forward.11}
  #allocation0 [shape = 'u32[]', space=smem, size = 0x4, offset = 0x4, fixed_abs, tag = 'smem constant byte address 0x4 - core index']
  #allocation1 [shape = 'u32[144,128]{1,0:T(1,128)}', space=vmem, size = 0x12000, scoped, tag = 'internal scratch']
  %s0 = inlined_call_operand.vmem [shape: f32[2,16,32], index: 0, kind: input, shape index: {}]
  %s1 = inlined_call_operand.vmem [shape: f32[2,16,32], index: 1, kind: input, shape index: {}]
  %s2 = inlined_call_operand.vmem [shape: f32[2,16,1], index: 2, kind: input, shape index: {}]
  %s3 = inlined_call_operand.vmem [shape: f32[2,16,32], index: 3, kind: input, shape index: {}]
  %s4 = inlined_call_operand.vmem [shape: f32[2,16,32], index: 4, kind: input, shape index: {}]
  %s5 = inlined_call_operand.vmem [shape: f32[2,16,32], index: 5, kind: input, shape index: {}]
  %s6 = inlined_call_operand.vmem [shape: f32[32,64], index: 6, kind: input, shape index: {}]
  %s7 = inlined_call_operand.vmem [shape: f32[1,64], index: 7, kind: input, shape index: {}]
  %s8 = inlined_call_operand.vmem [shape: f32[64,32], index: 8, kind: input, shape index: {}]
  %s9 = inlined_call_operand.vmem [shape: f32[1,32], index: 9, kind: input, shape index: {}]
  %s10 = inlined_call_operand.vmem [shape: f32[32,128], index: 10, kind: input, shape index: {}]
  %s11 = inlined_call_operand.vmem [shape: f32[32,128], index: 11, kind: input, shape index: {}]
  %s12 = inlined_call_operand.vmem [shape: f32[32,128], index: 12, kind: input, shape index: {}]
  %s13 = inlined_call_operand.vmem [shape: f32[32,128], index: 13, kind: input, shape index: {}]
  %s14 = inlined_call_operand.vmem [shape: f32[1,128], index: 14, kind: input, shape index: {}]
  %s15 = inlined_call_operand.vmem [shape: f32[2,16,128], index: 15, kind: output, shape index: {0}]
  %s16 = inlined_call_operand.hbm [shape: f32[2,16,32], index: 16, kind: output, shape index: {1}]
  %17 = xla_tuple %s15, %s16
  %s18 = sld [smem:[#allocation0]]
  $region101: #{forward.11} parent=0
    _
  %s20 = ssub.s32 1, %s18
  %s21 = scalar_select 0, %s20, %s18
  $region1: #{forward.11} parent=0
    #allocation2 [shape = 'u8[16384]{0}', space=vmem, size = 0x4000, scoped, tag = 'output window, operand 1']
    #allocation3 [shape = 's32[2]{0}', space=sflag, size = 0x8, scoped, tag = 'scoped memory for forward.11']
    %22 = vsyncpa [#allocation3], 0
    %s23 = scalar_lea.sflag [#allocation3], 1
    %24 = vsyncpa %s23, 0
    loop: start=0, step=1, limit=4
    $region2: #{forward.11} parent=1 // loop_pre_header
      _
    $region3: #{forward.11} parent=1 // loop_header
      %s26 = sphi 0, %s30
      %p27 = scmp.ge.s32.totalorder %s26, 4
      %s36 = sphi 0, %s38
      %s39 = sphi 0, %s36
      %s40 = sphi 0, %s39
      %s56 = sphi 0, %s40
      %s62 = sphi 0, %s64
      %s65 = sphi 0, %s62
      %s66 = sphi 0, %s65
      %s82 = sphi 0, %s66
      %s88 = sphi 0, %s90
      %s91 = sphi 0, %s88
      %s92 = sphi 0, %s91
      %s108 = sphi 0, %s92
      %s114 = sphi 0, %s116
      %s117 = sphi 0, %s114
      %s118 = sphi 0, %s117
      %s134 = sphi 0, %s118
      %s140 = sphi 0, %s142
      %s143 = sphi 0, %s140
      %s144 = sphi 0, %s143
      %s160 = sphi 0, %s144
      %s166 = sphi 0, %s168
      %s169 = sphi 0, %s166
      %s170 = sphi 0, %s169
      %s186 = sphi 0, %s170
      %s190 = sphi 0, %s190
      %s192 = sphi 0, %s190
      %s193 = sphi 0, %s192
      %s207 = sphi 0, %s193
      %s211 = sphi 0, %s211
      %s213 = sphi 0, %s211
      %s214 = sphi 0, %s213
      %s228 = sphi 0, %s214
      %s232 = sphi 0, %s232
      %s234 = sphi 0, %s232
      %s235 = sphi 0, %s234
      %s249 = sphi 0, %s235
      %s253 = sphi 0, %s253
      %s255 = sphi 0, %s253
      %s256 = sphi 0, %s255
      %s270 = sphi 0, %s256
      %s274 = sphi 0, %s274
      %s276 = sphi 0, %s274
      %s277 = sphi 0, %s276
      %s291 = sphi 0, %s277
      %s295 = sphi 0, %s295
      %s297 = sphi 0, %s295
      %s298 = sphi 0, %s297
      %s312 = sphi 0, %s298
      %s316 = sphi 0, %s316
      %s318 = sphi 0, %s316
      %s319 = sphi 0, %s318
      %s333 = sphi 0, %s319
      %s337 = sphi 0, %s337
      %s339 = sphi 0, %s337
      %s340 = sphi 0, %s339
      %s354 = sphi 0, %s340
      %s358 = sphi 0, %s358
      %s360 = sphi 0, %s358
      %s361 = sphi 0, %s360
      %s375 = sphi 0, %s361
      %s381 = sphi 0, %s383
      %s384 = sphi 0, %s381
      %s385 = sphi 0, %s384
      %s401 = sphi 0, %s385
      %s407 = sphi 0, %s409
      %s410 = sphi 0, %s407
      %s411 = sphi 0, %s410
      %s427 = sphi 0, %s411
    $region4: #{forward.11} parent=1 // loop_header_branch
      %29 = sbr.rel (%p27) target = $region8
    $region5: #{forward.11} parent=1 // loop_body
      %s31 = ssub.s32 %s26, 1
      %s32 = ssub.s32 %s26, 2
      %s33 = sadd.s32 %s26, 1
      %s34 = ssub.s32 %s26, %s33
      %p35 = scmp.eq.s32.totalorder %s34, 0
      %s37 = sadd.s32 %s36, 1
      %s38 = scalar_select %p35, %s36, %s37
      %p41 = pneg %p35
      %p42 = scmp.eq.s32.totalorder %s26, 1
      %p43 = por %p41, %p42
      %p44 = scmp.ne.s32.totalorder %s36, %s39
      %p45 = scmp.eq.s32.totalorder %s26, 0
      %p46 = por %p44, %p45
      %p47 = scmp.ne.s32.totalorder %s36, %s39
      %p48 = scmp.eq.s32.totalorder %s31, 1
      %p49 = por %p47, %p48
      %p50 = scmp.ne.s32.totalorder %s39, %s40
      %p51 = scmp.eq.s32.totalorder %s31, 0
      %p52 = por %p50, %p51
      %p53 = scmp.ne.s32.totalorder %s39, %s40
      %p54 = scmp.eq.s32.totalorder %s32, 1
      %p55 = por %p53, %p54
      %p57 = scmp.ne.s32.totalorder %s40, %s56
      %p58 = scmp.eq.s32.totalorder %s32, 0
      %p59 = por %p57, %p58
      %s60 = ssub.s32 %s26, %s33
      %p61 = scmp.eq.s32.totalorder %s60, 0
      %s63 = sadd.s32 %s62, 1
      %s64 = scalar_select %p61, %s62, %s63
      %p67 = pneg %p61
      %p68 = scmp.eq.s32.totalorder %s26, 1
      %p69 = por %p67, %p68
      %p70 = scmp.ne.s32.totalorder %s62, %s65
      %p71 = scmp.eq.s32.totalorder %s26, 0
      %p72 = por %p70, %p71
      %p73 = scmp.ne.s32.totalorder %s62, %s65
      %p74 = scmp.eq.s32.totalorder %s31, 1
      %p75 = por %p73, %p74
      %p76 = scmp.ne.s32.totalorder %s65, %s66
      %p77 = scmp.eq.s32.totalorder %s31, 0
      %p78 = por %p76, %p77
      %p79 = scmp.ne.s32.totalorder %s65, %s66
      %p80 = scmp.eq.s32.totalorder %s32, 1
      %p81 = por %p79, %p80
      %p83 = scmp.ne.s32.totalorder %s66, %s82
      %p84 = scmp.eq.s32.totalorder %s32, 0
      %p85 = por %p83, %p84
      %s86 = ssub.s32 %s26, %s33
      %p87 = scmp.eq.s32.totalorder %s86, 0
      %s89 = sadd.s32 %s88, 1
      %s90 = scalar_select %p87, %s88, %s89
      %p93 = pneg %p87
      %p94 = scmp.eq.s32.totalorder %s26, 1
      %p95 = por %p93, %p94
      %p96 = scmp.ne.s32.totalorder %s88, %s91
      %p97 = scmp.eq.s32.totalorder %s26, 0
      %p98 = por %p96, %p97
      %p99 = scmp.ne.s32.totalorder %s88, %s91
      %p100 = scmp.eq.s32.totalorder %s31, 1
      %p101 = por %p99, %p100
      %p102 = scmp.ne.s32.totalorder %s91, %s92
      %p103 = scmp.eq.s32.totalorder %s31, 0
      %p104 = por %p102, %p103
      %p105 = scmp.ne.s32.totalorder %s91, %s92
      %p106 = scmp.eq.s32.totalorder %s32, 1
      %p107 = por %p105, %p106
      %p109 = scmp.ne.s32.totalorder %s92, %s108
      %p110 = scmp.eq.s32.totalorder %s32, 0
      %p111 = por %p109, %p110
      %s112 = ssub.s32 %s26, %s33
      %p113 = scmp.eq.s32.totalorder %s112, 0
      %s115 = sadd.s32 %s114, 1
      %s116 = scalar_select %p113, %s114, %s115
      %p119 = pneg %p113
      %p120 = scmp.eq.s32.totalorder %s26, 1
      %p121 = por %p119, %p120
      %p122 = scmp.ne.s32.totalorder %s114, %s117
      %p123 = scmp.eq.s32.totalorder %s26, 0
      %p124 = por %p122, %p123
      %p125 = scmp.ne.s32.totalorder %s114, %s117
      %p126 = scmp.eq.s32.totalorder %s31, 1
      %p127 = por %p125, %p126
      %p128 = scmp.ne.s32.totalorder %s117, %s118
      %p129 = scmp.eq.s32.totalorder %s31, 0
      %p130 = por %p128, %p129
      %p131 = scmp.ne.s32.totalorder %s117, %s118
      %p132 = scmp.eq.s32.totalorder %s32, 1
      %p133 = por %p131, %p132
      %p135 = scmp.ne.s32.totalorder %s118, %s134
      %p136 = scmp.eq.s32.totalorder %s32, 0
      %p137 = por %p135, %p136
      %s138 = ssub.s32 %s26, %s33
      %p139 = scmp.eq.s32.totalorder %s138, 0
      %s141 = sadd.s32 %s140, 1
      %s142 = scalar_select %p139, %s140, %s141
      %p145 = pneg %p139
      %p146 = scmp.eq.s32.totalorder %s26, 1
      %p147 = por %p145, %p146
      %p148 = scmp.ne.s32.totalorder %s140, %s143
      %p149 = scmp.eq.s32.totalorder %s26, 0
      %p150 = por %p148, %p149
      %p151 = scmp.ne.s32.totalorder %s140, %s143
      %p152 = scmp.eq.s32.totalorder %s31, 1
      %p153 = por %p151, %p152
      %p154 = scmp.ne.s32.totalorder %s143, %s144
      %p155 = scmp.eq.s32.totalorder %s31, 0
      %p156 = por %p154, %p155
      %p157 = scmp.ne.s32.totalorder %s143, %s144
      %p158 = scmp.eq.s32.totalorder %s32, 1
      %p159 = por %p157, %p158
      %p161 = scmp.ne.s32.totalorder %s144, %s160
      %p162 = scmp.eq.s32.totalorder %s32, 0
      %p163 = por %p161, %p162
      %s164 = ssub.s32 %s26, %s33
      %p165 = scmp.eq.s32.totalorder %s164, 0
      %s167 = sadd.s32 %s166, 1
      %s168 = scalar_select %p165, %s166, %s167
      %p171 = pneg %p165
      %p172 = scmp.eq.s32.totalorder %s26, 1
      %p173 = por %p171, %p172
      %p174 = scmp.ne.s32.totalorder %s166, %s169
      %p175 = scmp.eq.s32.totalorder %s26, 0
      %p176 = por %p174, %p175
      %p177 = scmp.ne.s32.totalorder %s166, %s169
      %p178 = scmp.eq.s32.totalorder %s31, 1
      %p179 = por %p177, %p178
      %p180 = scmp.ne.s32.totalorder %s169, %s170
      %p181 = scmp.eq.s32.totalorder %s31, 0
      %p182 = por %p180, %p181
      %p183 = scmp.ne.s32.totalorder %s169, %s170
      %p184 = scmp.eq.s32.totalorder %s32, 1
      %p185 = por %p183, %p184
      %p187 = scmp.ne.s32.totalorder %s170, %s186
      %p188 = scmp.eq.s32.totalorder %s32, 0
      %p189 = por %p187, %p188
      %s191 = sadd.s32 %s190, 1
      %p194 = scmp.eq.s32.totalorder %s26, 1
      %p195 = scmp.ne.s32.totalorder %s190, %s192
      %p196 = scmp.eq.s32.totalorder %s26, 0
      %p197 = por %p195, %p196
      %p198 = scmp.ne.s32.totalorder %s190, %s192
      %p199 = scmp.eq.s32.totalorder %s31, 1
      %p200 = por %p198, %p199
      %p201 = scmp.ne.s32.totalorder %s192, %s193
      %p202 = scmp.eq.s32.totalorder %s31, 0
      %p203 = por %p201, %p202
      %p204 = scmp.ne.s32.totalorder %s192, %s193
      %p205 = scmp.eq.s32.totalorder %s32, 1
      %p206 = por %p204, %p205
      %p208 = scmp.ne.s32.totalorder %s193, %s207
      %p209 = scmp.eq.s32.totalorder %s32, 0
      %p210 = por %p208, %p209
      %s212 = sadd.s32 %s211, 1
      %p215 = scmp.eq.s32.totalorder %s26, 1
      %p216 = scmp.ne.s32.totalorder %s211, %s213
      %p217 = scmp.eq.s32.totalorder %s26, 0
      %p218 = por %p216, %p217
      %p219 = scmp.ne.s32.totalorder %s211, %s213
      %p220 = scmp.eq.s32.totalorder %s31, 1
      %p221 = por %p219, %p220
      %p222 = scmp.ne.s32.totalorder %s213, %s214
      %p223 = scmp.eq.s32.totalorder %s31, 0
      %p224 = por %p222, %p223
      %p225 = scmp.ne.s32.totalorder %s213, %s214
      %p226 = scmp.eq.s32.totalorder %s32, 1
      %p227 = por %p225, %p226
      %p229 = scmp.ne.s32.totalorder %s214, %s228
      %p230 = scmp.eq.s32.totalorder %s32, 0
      %p231 = por %p229, %p230
      %s233 = sadd.s32 %s232, 1
      %p236 = scmp.eq.s32.totalorder %s26, 1
      %p237 = scmp.ne.s32.totalorder %s232, %s234
      %p238 = scmp.eq.s32.totalorder %s26, 0
      %p239 = por %p237, %p238
      %p240 = scmp.ne.s32.totalorder %s232, %s234
      %p241 = scmp.eq.s32.totalorder %s31, 1
      %p242 = por %p240, %p241
      %p243 = scmp.ne.s32.totalorder %s234, %s235
      %p244 = scmp.eq.s32.totalorder %s31, 0
      %p245 = por %p243, %p244
      %p246 = scmp.ne.s32.totalorder %s234, %s235
      %p247 = scmp.eq.s32.totalorder %s32, 1
      %p248 = por %p246, %p247
      %p250 = scmp.ne.s32.totalorder %s235, %s249
      %p251 = scmp.eq.s32.totalorder %s32, 0
      %p252 = por %p250, %p251
      %s254 = sadd.s32 %s253, 1
      %p257 = scmp.eq.s32.totalorder %s26, 1
      %p258 = scmp.ne.s32.totalorder %s253, %s255
      %p259 = scmp.eq.s32.totalorder %s26, 0
      %p260 = por %p258, %p259
      %p261 = scmp.ne.s32.totalorder %s253, %s255
      %p262 = scmp.eq.s32.totalorder %s31, 1
      %p263 = por %p261, %p262
      %p264 = scmp.ne.s32.totalorder %s255, %s256
      %p265 = scmp.eq.s32.totalorder %s31, 0
      %p266 = por %p264, %p265
      %p267 = scmp.ne.s32.totalorder %s255, %s256
      %p268 = scmp.eq.s32.totalorder %s32, 1
      %p269 = por %p267, %p268
      %p271 = scmp.ne.s32.totalorder %s256, %s270
      %p272 = scmp.eq.s32.totalorder %s32, 0
      %p273 = por %p271, %p272
      %s275 = sadd.s32 %s274, 1
      %p278 = scmp.eq.s32.totalorder %s26, 1
      %p279 = scmp.ne.s32.totalorder %s274, %s276
      %p280 = scmp.eq.s32.totalorder %s26, 0
      %p281 = por %p279, %p280
      %p282 = scmp.ne.s32.totalorder %s274, %s276
      %p283 = scmp.eq.s32.totalorder %s31, 1
      %p284 = por %p282, %p283
      %p285 = scmp.ne.s32.totalorder %s276, %s277
      %p286 = scmp.eq.s32.totalorder %s31, 0
      %p287 = por %p285, %p286
      %p288 = scmp.ne.s32.totalorder %s276, %s277
      %p289 = scmp.eq.s32.totalorder %s32, 1
      %p290 = por %p288, %p289
      %p292 = scmp.ne.s32.totalorder %s277, %s291
      %p293 = scmp.eq.s32.totalorder %s32, 0
      %p294 = por %p292, %p293
      %s296 = sadd.s32 %s295, 1
      %p299 = scmp.eq.s32.totalorder %s26, 1
      %p300 = scmp.ne.s32.totalorder %s295, %s297
      %p301 = scmp.eq.s32.totalorder %s26, 0
      %p302 = por %p300, %p301
      %p303 = scmp.ne.s32.totalorder %s295, %s297
      %p304 = scmp.eq.s32.totalorder %s31, 1
      %p305 = por %p303, %p304
      %p306 = scmp.ne.s32.totalorder %s297, %s298
      %p307 = scmp.eq.s32.totalorder %s31, 0
      %p308 = por %p306, %p307
      %p309 = scmp.ne.s32.totalorder %s297, %s298
      %p310 = scmp.eq.s32.totalorder %s32, 1
      %p311 = por %p309, %p310
      %p313 = scmp.ne.s32.totalorder %s298, %s312
      %p314 = scmp.eq.s32.totalorder %s32, 0
      %p315 = por %p313, %p314
      %s317 = sadd.s32 %s316, 1
      %p320 = scmp.eq.s32.totalorder %s26, 1
      %p321 = scmp.ne.s32.totalorder %s316, %s318
      %p322 = scmp.eq.s32.totalorder %s26, 0
      %p323 = por %p321, %p322
      %p324 = scmp.ne.s32.totalorder %s316, %s318
      %p325 = scmp.eq.s32.totalorder %s31, 1
      %p326 = por %p324, %p325
      %p327 = scmp.ne.s32.totalorder %s318, %s319
      %p328 = scmp.eq.s32.totalorder %s31, 0
      %p329 = por %p327, %p328
      %p330 = scmp.ne.s32.totalorder %s318, %s319
      %p331 = scmp.eq.s32.totalorder %s32, 1
      %p332 = por %p330, %p331
      %p334 = scmp.ne.s32.totalorder %s319, %s333
      %p335 = scmp.eq.s32.totalorder %s32, 0
      %p336 = por %p334, %p335
      %s338 = sadd.s32 %s337, 1
      %p341 = scmp.eq.s32.totalorder %s26, 1
      %p342 = scmp.ne.s32.totalorder %s337, %s339
      %p343 = scmp.eq.s32.totalorder %s26, 0
      %p344 = por %p342, %p343
      %p345 = scmp.ne.s32.totalorder %s337, %s339
      %p346 = scmp.eq.s32.totalorder %s31, 1
      %p347 = por %p345, %p346
      %p348 = scmp.ne.s32.totalorder %s339, %s340
      %p349 = scmp.eq.s32.totalorder %s31, 0
      %p350 = por %p348, %p349
      %p351 = scmp.ne.s32.totalorder %s339, %s340
      %p352 = scmp.eq.s32.totalorder %s32, 1
      %p353 = por %p351, %p352
      %p355 = scmp.ne.s32.totalorder %s340, %s354
      %p356 = scmp.eq.s32.totalorder %s32, 0
      %p357 = por %p355, %p356
      %s359 = sadd.s32 %s358, 1
      %p362 = scmp.eq.s32.totalorder %s26, 1
      %p363 = scmp.ne.s32.totalorder %s358, %s360
      %p364 = scmp.eq.s32.totalorder %s26, 0
      %p365 = por %p363, %p364
      %p366 = scmp.ne.s32.totalorder %s358, %s360
      %p367 = scmp.eq.s32.totalorder %s31, 1
      %p368 = por %p366, %p367
      %p369 = scmp.ne.s32.totalorder %s360, %s361
      %p370 = scmp.eq.s32.totalorder %s31, 0
      %p371 = por %p369, %p370
      %p372 = scmp.ne.s32.totalorder %s360, %s361
      %p373 = scmp.eq.s32.totalorder %s32, 1
      %p374 = por %p372, %p373
      %p376 = scmp.ne.s32.totalorder %s361, %s375
      %p377 = scmp.eq.s32.totalorder %s32, 0
      %p378 = por %p376, %p377
      %s379 = ssub.s32 %s26, %s33
      %p380 = scmp.eq.s32.totalorder %s379, 0
      %s382 = sadd.s32 %s381, 1
      %s383 = scalar_select %p380, %s381, %s382
      %p386 = pneg %p380
      %p387 = scmp.eq.s32.totalorder %s26, 1
      %p388 = por %p386, %p387
      %p389 = scmp.ne.s32.totalorder %s381, %s384
      %p390 = scmp.eq.s32.totalorder %s26, 0
      %p391 = por %p389, %p390
      %p392 = scmp.ne.s32.totalorder %s381, %s384
      %p393 = scmp.eq.s32.totalorder %s31, 1
      %p394 = por %p392, %p393
      %p395 = scmp.ne.s32.totalorder %s384, %s385
      %p396 = scmp.eq.s32.totalorder %s31, 0
      %p397 = por %p395, %p396
      %p398 = scmp.ne.s32.totalorder %s384, %s385
      %p399 = scmp.eq.s32.totalorder %s32, 1
      %p400 = por %p398, %p399
      %p402 = scmp.ne.s32.totalorder %s385, %s401
      %p403 = scmp.eq.s32.totalorder %s32, 0
      %p404 = por %p402, %p403
      %s405 = ssub.s32 %s26, %s33
      %p406 = scmp.eq.s32.totalorder %s405, 0
      %s408 = sadd.s32 %s407, 1
      %s409 = scalar_select %p406, %s407, %s408
      %p412 = pneg %p406
      %p413 = scmp.eq.s32.totalorder %s26, 1
      %p414 = por %p412, %p413
      %p415 = scmp.ne.s32.totalorder %s407, %s410
      %p416 = scmp.eq.s32.totalorder %s26, 0
      %p417 = por %p415, %p416
      %p418 = scmp.ne.s32.totalorder %s407, %s410
      %p419 = scmp.eq.s32.totalorder %s31, 1
      %p420 = por %p418, %p419
      %p421 = scmp.ne.s32.totalorder %s410, %s411
      %p422 = scmp.eq.s32.totalorder %s31, 0
      %p423 = por %p421, %p422
      %p424 = scmp.ne.s32.totalorder %s410, %s411
      %p425 = scmp.eq.s32.totalorder %s32, 1
      %p426 = por %p424, %p425
      %p428 = scmp.ne.s32.totalorder %s411, %s427
      %p429 = scmp.eq.s32.totalorder %s32, 0
      %p430 = por %p428, %p429
      %p431 = scmp.le.s32.totalorder 1, %s26
      %p432 = scmp.lt.s32.totalorder %s26, 3
      %p433 = pnand %p431, %p432
      %p434 = pneg %p433
      // Predicated region
      $region9: #{forward.11} parent=5 // pred_check
        _
      $region10: #{forward.11} parent=5 // pred_check_branch
        %436 = sbr.rel (%p433) target = $region12
      $region11: #{forward.11} parent=5 // pred_region
        %s437 = ssub.s32 %s26, 1
        // Predicated region
        $region13: #{forward.11} parent=11 // pred_check
          %p438 = pneg %p203
        $region14: #{forward.11} parent=11 // pred_check_branch
          %440 = sbr.rel (%p438) target = $region16
        $region15: #{forward.11} parent=11 // pred_region
          _
        $region16: #{forward.11} parent=11 // pred_fallthru
          _
        // Predicated region
        $region17: #{forward.11} parent=11 // pred_check
          %p441 = pneg %p224
        $region18: #{forward.11} parent=11 // pred_check_branch
          %443 = sbr.rel (%p441) target = $region20
        $region19: #{forward.11} parent=11 // pred_region
          _
        $region20: #{forward.11} parent=11 // pred_fallthru
          _
        // Predicated region
        $region21: #{forward.11} parent=11 // pred_check
          %p444 = pneg %p245
        $region22: #{forward.11} parent=11 // pred_check_branch
          %446 = sbr.rel (%p444) target = $region24
        $region23: #{forward.11} parent=11 // pred_region
          _
        $region24: #{forward.11} parent=11 // pred_fallthru
          _
        // Predicated region
        $region25: #{forward.11} parent=11 // pred_check
          %p447 = pneg %p266
        $region26: #{forward.11} parent=11 // pred_check_branch
          %449 = sbr.rel (%p447) target = $region28
        $region27: #{forward.11} parent=11 // pred_region
          _
        $region28: #{forward.11} parent=11 // pred_fallthru
          _
        // Predicated region
        $region29: #{forward.11} parent=11 // pred_check
          %p450 = pneg %p287
        $region30: #{forward.11} parent=11 // pred_check_branch
          %452 = sbr.rel (%p450) target = $region32
        $region31: #{forward.11} parent=11 // pred_region
          _
        $region32: #{forward.11} parent=11 // pred_fallthru
          _
        // Predicated region
        $region33: #{forward.11} parent=11 // pred_check
          %p453 = pneg %p308
        $region34: #{forward.11} parent=11 // pred_check_branch
          %455 = sbr.rel (%p453) target = $region36
        $region35: #{forward.11} parent=11 // pred_region
          _
        $region36: #{forward.11} parent=11 // pred_fallthru
          _
        // Predicated region
        $region37: #{forward.11} parent=11 // pred_check
          %p456 = pneg %p329
        $region38: #{forward.11} parent=11 // pred_check_branch
          %458 = sbr.rel (%p456) target = $region40
        $region39: #{forward.11} parent=11 // pred_region
          _
        $region40: #{forward.11} parent=11 // pred_fallthru
          _
        // Predicated region
        $region41: #{forward.11} parent=11 // pred_check
          %p459 = pneg %p350
        $region42: #{forward.11} parent=11 // pred_check_branch
          %461 = sbr.rel (%p459) target = $region44
        $region43: #{forward.11} parent=11 // pred_region
          _
        $region44: #{forward.11} parent=11 // pred_fallthru
          _
        // Predicated region
        $region45: #{forward.11} parent=11 // pred_check
          %p462 = pneg %p371
        $region46: #{forward.11} parent=11 // pred_check_branch
          %464 = sbr.rel (%p462) target = $region48
        $region47: #{forward.11} parent=11 // pred_region
          _
        $region48: #{forward.11} parent=11 // pred_fallthru
          _
      $region12: #{forward.11} parent=5 // pred_fallthru
        _
      %p465 = scmp.lt.s32.totalorder %s26, 2
      // Predicated region
      $region49: #{forward.11} parent=5 // pred_check
        %p466 = pneg %p465
      $region50: #{forward.11} parent=5 // pred_check_branch
        %468 = sbr.rel (%p466) target = $region52
      $region51: #{forward.11} parent=5 // pred_region
        // Predicated region
        $region53: #{forward.11} parent=51 // pred_check
          %p469 = pneg %p46
        $region54: #{forward.11} parent=51 // pred_check_branch
          %471 = sbr.rel (%p469) target = $region56
        $region55: #{forward.11} parent=51 // pred_region
          %p472 = scmp.lt.s32.totalorder %s26, 1
          %s473 = scalar_select %p472, %s26, 1
          %s474 = smul.addr %s473, 2
          %s475 = smul.addr %s474, 8
          %s476 = scalar_lea.vmem %s0, %s475
        $region56: #{forward.11} parent=51 // pred_fallthru
          _
        // Predicated region
        $region57: #{forward.11} parent=51 // pred_check
          %p477 = pneg %p72
        $region58: #{forward.11} parent=51 // pred_check_branch
          %479 = sbr.rel (%p477) target = $region60
        $region59: #{forward.11} parent=51 // pred_region
          %p480 = scmp.lt.s32.totalorder %s26, 1
          %s481 = scalar_select %p480, %s26, 1
          %s482 = smul.addr %s481, 2
          %s483 = smul.addr %s482, 8
          %s484 = scalar_lea.vmem %s1, %s483
        $region60: #{forward.11} parent=51 // pred_fallthru
          _
        // Predicated region
        $region61: #{forward.11} parent=51 // pred_check
          %p485 = pneg %p98
        $region62: #{forward.11} parent=51 // pred_check_branch
          %487 = sbr.rel (%p485) target = $region64
        $region63: #{forward.11} parent=51 // pred_region
          %p488 = scmp.lt.s32.totalorder %s26, 1
          %s489 = scalar_select %p488, %s26, 1
          %s490 = smul.addr %s489, 2
          %s491 = smul.addr %s490, 8
          %s492 = scalar_lea.vmem %s2, %s491
        $region64: #{forward.11} parent=51 // pred_fallthru
          _
        // Predicated region
        $region65: #{forward.11} parent=51 // pred_check
          %p493 = pneg %p124
        $region66: #{forward.11} parent=51 // pred_check_branch
          %495 = sbr.rel (%p493) target = $region68
        $region67: #{forward.11} parent=51 // pred_region
          %p496 = scmp.lt.s32.totalorder %s26, 1
          %s497 = scalar_select %p496, %s26, 1
          %s498 = smul.addr %s497, 2
          %s499 = smul.addr %s498, 8
          %s500 = scalar_lea.vmem %s3, %s499
        $region68: #{forward.11} parent=51 // pred_fallthru
          _
        // Predicated region
        $region69: #{forward.11} parent=51 // pred_check
          %p501 = pneg %p150
        $region70: #{forward.11} parent=51 // pred_check_branch
          %503 = sbr.rel (%p501) target = $region72
        $region71: #{forward.11} parent=51 // pred_region
          %p504 = scmp.lt.s32.totalorder %s26, 1
          %s505 = scalar_select %p504, %s26, 1
          %s506 = smul.addr %s505, 2
          %s507 = smul.addr %s506, 8
          %s508 = scalar_lea.vmem %s4, %s507
        $region72: #{forward.11} parent=51 // pred_fallthru
          _
        // Predicated region
        $region73: #{forward.11} parent=51 // pred_check
          %p509 = pneg %p176
        $region74: #{forward.11} parent=51 // pred_check_branch
          %511 = sbr.rel (%p509) target = $region76
        $region75: #{forward.11} parent=51 // pred_region
          %p512 = scmp.lt.s32.totalorder %s26, 1
          %s513 = scalar_select %p512, %s26, 1
          %s514 = smul.addr %s513, 2
          %s515 = smul.addr %s514, 8
          %s516 = scalar_lea.vmem %s5, %s515
        $region76: #{forward.11} parent=51 // pred_fallthru
          _
      $region52: #{forward.11} parent=5 // pred_fallthru
        _
      %p517 = scmp.le.s32.totalorder 1, %s26
      %p518 = scmp.lt.s32.totalorder %s26, 3
      %p519 = pnand %p517, %p518
      %p520 = pneg %p519
      // Predicated region
      $region77: #{forward.11} parent=5 // pred_check
        _
      $region78: #{forward.11} parent=5 // pred_check_branch
        %522 = sbr.rel (%p519) target = $region80
      $region79: #{forward.11} parent=5 // pred_region
        %s523 = ssub.s32 %s26, 1
        %p524 = scmp.lt.s32.totalorder %s31, 1
        %s525 = scalar_select %p524, %s31, 1
        %s526 = smul.addr %s525, 2
        %s527 = smul.addr %s526, 8
        %s528 = scalar_lea.vmem %s0, %s527
        %p529 = pneg %p52
        %p530 = pneg %p49
        %p531 = scmp.lt.s32.totalorder %s31, 1
        %s532 = scalar_select %p531, %s31, 1
        %s533 = smul.addr %s532, 2
        %s534 = smul.addr %s533, 8
        %s535 = scalar_lea.vmem %s1, %s534
        %p536 = pneg %p78
        %p537 = pneg %p75
        %p538 = scmp.lt.s32.totalorder %s31, 1
        %s539 = scalar_select %p538, %s31, 1
        %s540 = smul.addr %s539, 2
        %s541 = smul.addr %s540, 8
        %s542 = scalar_lea.vmem %s2, %s541
        %p543 = pneg %p104
        %p544 = pneg %p101
        %p545 = scmp.lt.s32.totalorder %s31, 1
        %s546 = scalar_select %p545, %s31, 1
        %s547 = smul.addr %s546, 2
        %s548 = smul.addr %s547, 8
        %s549 = scalar_lea.vmem %s3, %s548
        %p550 = pneg %p130
        %p551 = pneg %p127
        %p552 = scmp.lt.s32.totalorder %s31, 1
        %s553 = scalar_select %p552, %s31, 1
        %s554 = smul.addr %s553, 2
        %s555 = smul.addr %s554, 8
        %s556 = scalar_lea.vmem %s4, %s555
        %p557 = pneg %p156
        %p558 = pneg %p153
        %p559 = scmp.lt.s32.totalorder %s31, 1
        %s560 = scalar_select %p559, %s31, 1
        %s561 = smul.addr %s560, 2
        %s562 = smul.addr %s561, 8
        %s563 = scalar_lea.vmem %s5, %s562
        %p564 = pneg %p182
        %p565 = pneg %p179
        %p566 = pneg %p203
        %p567 = pneg %p200
        %p568 = pneg %p224
        %p569 = pneg %p221
        %p570 = pneg %p245
        %p571 = pneg %p242
        %p572 = pneg %p266
        %p573 = pneg %p263
        %p574 = pneg %p287
        %p575 = pneg %p284
        %p576 = pneg %p308
        %p577 = pneg %p305
        %p578 = pneg %p329
        %p579 = pneg %p326
        %p580 = pneg %p350
        %p581 = pneg %p347
        %p582 = pneg %p371
        %p583 = pneg %p368
        %p584 = pneg %p397
        %p585 = pneg %p394
        %p586 = scmp.lt.s32.totalorder %s31, 1
        %s587 = scalar_select %p586, %s31, 1
        %s588 = smul.addr %s587, 2
        %s589 = smul.addr %s588, 8
        %s590 = scalar_lea.vmem %s15, %s589
        %p591 = pneg %p423
        %p592 = pneg %p420
        %s593 = sand.u32 %s410, 1
        %s594 = scalar_lea.sflag [#allocation3], %s593
        %s595 = sand.u32 %s410, 1
        %s596 = smul.addr %s595, 16
        %s597 = scalar_lea.vmem [#allocation2], %s596
        %p598 = scmp.lt.s32.totalorder %s31, 1
        %s599 = scalar_select %p598, %s31, 1
        %s600 = smul.addr %s599, 2
        %s601 = smul.addr %s600, 8
        %s602 = scalar_lea.vmem %s0, %s601
        %p603 = scmp.lt.s32.totalorder %s31, 1
        %s604 = scalar_select %p603, %s31, 1
        %s605 = smul.addr %s604, 2
        %s606 = smul.addr %s605, 8
        %s607 = scalar_lea.vmem %s1, %s606
        %p608 = scmp.lt.s32.totalorder %s31, 1
        %s609 = scalar_select %p608, %s31, 1
        %s610 = smul.addr %s609, 2
        %s611 = smul.addr %s610, 8
        %s612 = scalar_lea.vmem %s2, %s611
        %p613 = scmp.lt.s32.totalorder %s31, 1
        %s614 = scalar_select %p613, %s31, 1
        %s615 = smul.addr %s614, 2
        %s616 = smul.addr %s615, 8
        %s617 = scalar_lea.vmem %s3, %s616
        %p618 = scmp.lt.s32.totalorder %s31, 1
        %s619 = scalar_select %p618, %s31, 1
        %s620 = smul.addr %s619, 2
        %s621 = smul.addr %s620, 8
        %s622 = scalar_lea.vmem %s4, %s621
        %p623 = scmp.lt.s32.totalorder %s31, 1
        %s624 = scalar_select %p623, %s31, 1
        %s625 = smul.addr %s624, 2
        %s626 = smul.addr %s625, 8
        %s627 = scalar_lea.vmem %s5, %s626
        %p628 = scmp.lt.s32.totalorder %s31, 1
        %s629 = scalar_select %p628, %s31, 1
        %s630 = smul.addr %s629, 2
        %s631 = smul.addr %s630, 8
        %s632 = scalar_lea.vmem %s15, %s631
        %v634 = vld [vmem:[%s602] sm:$0xff]
        %v635 = vld [vmem:[%s602 + $0x8] sm:$0xff]
        %v636 = vld [vmem:[%s607] sm:$0xff]
        %v637 = vld [vmem:[%s607 + $0x8] sm:$0xff]
        %v638 = vld [vmem:[%s612] sm:$0xff]
        %v639 = vld [vmem:[%s612 + $0x8] sm:$0xff]
        %v640 = vpack.c.bf16 %v637, %v636
        %v641 = vld [vmem:[%s6] sm:$0xff]
        %v642 = vld [vmem:[%s6 + $0x8] sm:$0xff]
        %v643 = vld [vmem:[%s6 + $0x10] sm:$0xff]
        %v644 = vld [vmem:[%s6 + $0x18] sm:$0xff]
        %v645 = vpack.c.bf16 %v642, %v641
        %v646 = vpack.c.bf16 %v644, %v643
        %v647 = vld [vmem:[%s7] sm:$0x1]
        %v649 = vlaneseq
        %v650 = vshrl.u32 %v649, 7
        %v651 = vsub.s32 0, %v650
        %v652 = vrot.slane %v647, %v651
        %vm654 = vcmask 261120
        %v656 = vsel %vm654, %v640, 0
        %658 = vmatprep.subr.bf16.mxu0 0
        %659 = vmatpush1.bf16.msra.mxu0 0
        %660 = vmatprep.subr.bf16.mxu0 0
        %661 = vmatpush1.bf16.msra.mxu0 0
        %662 = vmatprep.subr.bf16.mxu0 0
        %663 = vmatpush1.bf16.msra.mxu0 0
        %664 = vmatprep.subr.bf16.mxu0 0
        %665 = vmatpush1.bf16.msra.mxu0 0
        %666 = vmatprep.subr.bf16.mxu0 0
        %667 = vmatpush1.bf16.msra.mxu0 0
        %668 = vmatprep.subr.bf16.mxu0 0
        %669 = vmatpush1.bf16.msra.mxu0 0
        %670 = vmatprep.subr.bf16.mxu0 0
        %671 = vmatpush1.bf16.msra.mxu0 %v646
        %672 = vmatprep.subr.bf16.mxu0 0
        %673 = vmatpush1.bf16.msra.mxu0 %v645
        %674 = vmatprep.subr.bf16.mxu0 0
        %675 = vmatpush2.bf16.msra.mxu0 0
        %676 = vmatprep.subr.bf16.mxu0 0
        %677 = vmatpush2.bf16.msra.mxu0 0
        %678 = vmatprep.subr.bf16.mxu0 0
        %679 = vmatpush2.bf16.msra.mxu0 0
        %680 = vmatprep.subr.bf16.mxu0 0
        %681 = vmatpush2.bf16.msra.mxu0 0
        %682 = vmatprep.subr.bf16.mxu0 0
        %683 = vmatpush2.bf16.msra.mxu0 0
        %684 = vmatprep.subr.bf16.mxu0 0
        %685 = vmatpush2.bf16.msra.mxu0 0
        %686 = vmatprep.subr.bf16.mxu0 0
        %687 = vmatpush2.bf16.msra.mxu0 0
        %688 = vmatprep.subr.bf16.mxu0 0
        %689 = vmatpush2.bf16.msra.mxu0 0
        %690 = vmatprep.mubr.bf16.mxu0 0
        %691 = vmatmul.mubr.bf16.gmra.mxu0 %v656
        %v692 = vpop.f32.mrf.mxu0
        %v693 = vadd.f32 %v652, %v692
        %v694 = vpop.f32.mrf.mxu0
        %v695 = vpop.f32.mrf.mxu0
        %v696 = vadd.f32 %v652, %v695
        %v697 = vpop.f32.mrf.mxu0
        %698 = vdwg.mxu0
        %v699 = vmax.f32 %v693, 0.0
        %v700 = vmax.f32 %v696, 0.0
        %v701 = vpack.c.bf16 %v700, %v699
        %v702 = vld [vmem:[%s8] sm:$0xff]
        %v703 = vld [vmem:[%s8 + $0x8] sm:$0xff]
        %v704 = vld [vmem:[%s8 + $0x10] sm:$0xff]
        %v705 = vld [vmem:[%s8 + $0x18] sm:$0xff]
        %v706 = vld [vmem:[%s8 + $0x20] sm:$0xff]
        %v707 = vld [vmem:[%s8 + $0x28] sm:$0xff]
        %v708 = vld [vmem:[%s8 + $0x30] sm:$0xff]
        %v709 = vld [vmem:[%s8 + $0x38] sm:$0xff]
        %v710 = vpack.c.bf16 %v703, %v702
        %v711 = vpack.c.bf16 %v705, %v704
        %v712 = vpack.c.bf16 %v707, %v706
        %v713 = vpack.c.bf16 %v709, %v708
        %v714 = vld [vmem:[%s9] sm:$0x1]
        %v716 = vlaneseq
        %v717 = vshrl.u32 %v716, 7
        %v718 = vsub.s32 0, %v717
        %v719 = vrot.slane %v714, %v718
        %vm721 = vcmask 523264
        %v723 = vsel %vm721, %v701, 0
        %725 = vmatprep.subr.bf16.mxu0 0
        %726 = vmatpush1.bf16.msra.mxu0 0
        %727 = vmatprep.subr.bf16.mxu0 0
        %728 = vmatpush1.bf16.msra.mxu0 0
        %729 = vmatprep.subr.bf16.mxu0 0
        %730 = vmatpush1.bf16.msra.mxu0 0
        %731 = vmatprep.subr.bf16.mxu0 0
        %732 = vmatpush1.bf16.msra.mxu0 0
        %733 = vmatprep.subr.bf16.mxu0 0
        %734 = vmatpush1.bf16.msra.mxu0 %v713
        %735 = vmatprep.subr.bf16.mxu0 0
        %736 = vmatpush1.bf16.msra.mxu0 %v712
        %737 = vmatprep.subr.bf16.mxu0 0
        %738 = vmatpush1.bf16.msra.mxu0 %v711
        %739 = vmatprep.subr.bf16.mxu0 0
        %740 = vmatpush1.bf16.msra.mxu0 %v710
        %741 = vmatprep.subr.bf16.mxu0 0
        %742 = vmatpush2.bf16.msra.mxu0 0
        %743 = vmatprep.subr.bf16.mxu0 0
        %744 = vmatpush2.bf16.msra.mxu0 0
        %745 = vmatprep.subr.bf16.mxu0 0
        %746 = vmatpush2.bf16.msra.mxu0 0
        %747 = vmatprep.subr.bf16.mxu0 0
        %748 = vmatpush2.bf16.msra.mxu0 0
        %749 = vmatprep.subr.bf16.mxu0 0
        %750 = vmatpush2.bf16.msra.mxu0 0
        %751 = vmatprep.subr.bf16.mxu0 0
        %752 = vmatpush2.bf16.msra.mxu0 0
        %753 = vmatprep.subr.bf16.mxu0 0
        %754 = vmatpush2.bf16.msra.mxu0 0
        %755 = vmatprep.subr.bf16.mxu0 0
        %756 = vmatpush2.bf16.msra.mxu0 0
        %757 = vmatprep.mubr.bf16.mxu0 0
        %758 = vmatmul.mubr.bf16.gmra.mxu0 %v723
        %v759 = vpop.f32.mrf.mxu0
        %v760 = vadd.f32 %v719, %v759
        %v761 = vpop.f32.mrf.mxu0
        %v762 = vpop.f32.mrf.mxu0
        %v763 = vadd.f32 %v719, %v762
        %v764 = vpop.f32.mrf.mxu0
        %765 = vdwg.mxu0
        %767 = vset.pattern.permute.xlu0 0
        %768 = vperm.xlu0 %767, %v638
        %v769 = vpop.permute.xlu0 %768
        %772 = vset.pattern.permute.xlu0 0
        %773 = vperm.xlu0 %772, %v639
        %v774 = vpop.permute.xlu0 %773
        %v776 = vmul.f32 %v769, %v760
        %v777 = vmul.f32 %v774, %v763
        %v778 = vadd.f32 %v636, %v776
        %v779 = vadd.f32 %v637, %v777
        %v780 = vld [vmem:[%s617] sm:$0xff]
        %v781 = vld [vmem:[%s617 + $0x8] sm:$0xff]
        %v782 = vadd.f32 %v778, %v780
        %v783 = vadd.f32 %v779, %v781
        %v784 = vld [vmem:[%s622] sm:$0xff]
        %v785 = vld [vmem:[%s622 + $0x8] sm:$0xff]
        %v786 = vadd.f32 %v782, %v784
        %v787 = vadd.f32 %v783, %v785
        %v788 = vpack.c.bf16 %v635, %v634
        %v789 = vld [vmem:[%s10] sm:$0xff]
        %v790 = vld [vmem:[%s10 + $0x8] sm:$0xff]
        %v791 = vld [vmem:[%s10 + $0x10] sm:$0xff]
        %v792 = vld [vmem:[%s10 + $0x18] sm:$0xff]
        %v793 = vpack.c.bf16 %v790, %v789
        %v794 = vpack.c.bf16 %v792, %v791
        %v795 = vpack.c.bf16 %v779, %v778
        %v796 = vld [vmem:[%s11] sm:$0xff]
        %v797 = vld [vmem:[%s11 + $0x8] sm:$0xff]
        %v798 = vld [vmem:[%s11 + $0x10] sm:$0xff]
        %v799 = vld [vmem:[%s11 + $0x18] sm:$0xff]
        %v800 = vpack.c.bf16 %v797, %v796
        %v801 = vpack.c.bf16 %v799, %v798
        %v803 = vsel %vm654, %v795, 0
        %805 = vmatprep.subr.bf16.mxu0 0
        %806 = vmatpush1.bf16.msra.mxu0 0
        %807 = vmatprep.subr.bf16.mxu0 0
        %808 = vmatpush1.bf16.msra.mxu0 0
        %809 = vmatprep.subr.bf16.mxu0 0
        %810 = vmatpush1.bf16.msra.mxu0 0
        %811 = vmatprep.subr.bf16.mxu0 0
        %812 = vmatpush1.bf16.msra.mxu0 0
        %813 = vmatprep.subr.bf16.mxu0 0
        %814 = vmatpush1.bf16.msra.mxu0 0
        %815 = vmatprep.subr.bf16.mxu0 0
        %816 = vmatpush1.bf16.msra.mxu0 0
        %817 = vmatprep.subr.bf16.mxu0 0
        %818 = vmatpush1.bf16.msra.mxu0 %v801
        %819 = vmatprep.subr.bf16.mxu0 0
        %820 = vmatpush1.bf16.msra.mxu0 %v800
        %821 = vmatprep.subr.bf16.mxu0 0
        %822 = vmatpush2.bf16.msra.mxu0 0
        %823 = vmatprep.subr.bf16.mxu0 0
        %824 = vmatpush2.bf16.msra.mxu0 0
        %825 = vmatprep.subr.bf16.mxu0 0
        %826 = vmatpush2.bf16.msra.mxu0 0
        %827 = vmatprep.subr.bf16.mxu0 0
        %828 = vmatpush2.bf16.msra.mxu0 0
        %829 = vmatprep.subr.bf16.mxu0 0
        %830 = vmatpush2.bf16.msra.mxu0 0
        %831 = vmatprep.subr.bf16.mxu0 0
        %832 = vmatpush2.bf16.msra.mxu0 0
        %833 = vmatprep.subr.bf16.mxu0 0
        %834 = vmatpush2.bf16.msra.mxu0 0
        %835 = vmatprep.subr.bf16.mxu0 0
        %836 = vmatpush2.bf16.msra.mxu0 0
        %837 = vmatprep.mubr.bf16.mxu0 0
        %838 = vmatmul.mubr.bf16.gmra.mxu0 %v803
        %v839 = vpop.f32.mrf.mxu0
        %v840 = vadd.f32 0.0, %v839
        %v841 = vpop.f32.mrf.mxu0
        %v842 = vpop.f32.mrf.mxu0
        %v843 = vadd.f32 0.0, %v842
        %v844 = vpop.f32.mrf.mxu0
        %845 = vdwg.mxu0
        %v847 = vsel %vm654, %v788, 0
        %849 = vmatprep.subr.bf16.mxu0 0
        %850 = vmatpush1.bf16.msra.mxu0 0
        %851 = vmatprep.subr.bf16.mxu0 0
        %852 = vmatpush1.bf16.msra.mxu0 0
        %853 = vmatprep.subr.bf16.mxu0 0
        %854 = vmatpush1.bf16.msra.mxu0 0
        %855 = vmatprep.subr.bf16.mxu0 0
        %856 = vmatpush1.bf16.msra.mxu0 0
        %857 = vmatprep.subr.bf16.mxu0 0
        %858 = vmatpush1.bf16.msra.mxu0 0
        %859 = vmatprep.subr.bf16.mxu0 0
        %860 = vmatpush1.bf16.msra.mxu0 0
        %861 = vmatprep.subr.bf16.mxu0 0
        %862 = vmatpush1.bf16.msra.mxu0 %v794
        %863 = vmatprep.subr.bf16.mxu0 0
        %864 = vmatpush1.bf16.msra.mxu0 %v793
        %865 = vmatprep.subr.bf16.mxu0 0
        %866 = vmatpush2.bf16.msra.mxu0 0
        %867 = vmatprep.subr.bf16.mxu0 0
        %868 = vmatpush2.bf16.msra.mxu0 0
        %869 = vmatprep.subr.bf16.mxu0 0
        %870 = vmatpush2.bf16.msra.mxu0 0
        %871 = vmatprep.subr.bf16.mxu0 0
        %872 = vmatpush2.bf16.msra.mxu0 0
        %873 = vmatprep.subr.bf16.mxu0 0
        %874 = vmatpush2.bf16.msra.mxu0 0
        %875 = vmatprep.subr.bf16.mxu0 0
        %876 = vmatpush2.bf16.msra.mxu0 0
        %877 = vmatprep.subr.bf16.mxu0 0
        %878 = vmatpush2.bf16.msra.mxu0 0
        %879 = vmatprep.subr.bf16.mxu0 0
        %880 = vmatpush2.bf16.msra.mxu0 0
        %881 = vmatprep.mubr.bf16.mxu0 0
        %882 = vmatmul.mubr.bf16.gmra.mxu0 %v847
        %v883 = vpop.f32.mrf.mxu0
        %v884 = vadd.f32 %v840, %v883
        %v885 = vpop.f32.mrf.mxu0
        %v886 = vpop.f32.mrf.mxu0
        %v887 = vadd.f32 %v843, %v886
        %v888 = vpop.f32.mrf.mxu0
        %889 = vdwg.mxu0
        %v890 = vpack.c.bf16 %v783, %v782
        %v891 = vld [vmem:[%s12] sm:$0xff]
        %v892 = vld [vmem:[%s12 + $0x8] sm:$0xff]
        %v893 = vld [vmem:[%s12 + $0x10] sm:$0xff]
        %v894 = vld [vmem:[%s12 + $0x18] sm:$0xff]
        %v895 = vpack.c.bf16 %v892, %v891
        %v896 = vpack.c.bf16 %v894, %v893
        %v898 = vsel %vm654, %v890, 0
        %900 = vmatprep.subr.bf16.mxu0 0
        %901 = vmatpush1.bf16.msra.mxu0 0
        %902 = vmatprep.subr.bf16.mxu0 0
        %903 = vmatpush1.bf16.msra.mxu0 0
        %904 = vmatprep.subr.bf16.mxu0 0
        %905 = vmatpush1.bf16.msra.mxu0 0
        %906 = vmatprep.subr.bf16.mxu0 0
        %907 = vmatpush1.bf16.msra.mxu0 0
        %908 = vmatprep.subr.bf16.mxu0 0
        %909 = vmatpush1.bf16.msra.mxu0 0
        %910 = vmatprep.subr.bf16.mxu0 0
        %911 = vmatpush1.bf16.msra.mxu0 0
        %912 = vmatprep.subr.bf16.mxu0 0
        %913 = vmatpush1.bf16.msra.mxu0 %v896
        %914 = vmatprep.subr.bf16.mxu0 0
        %915 = vmatpush1.bf16.msra.mxu0 %v895
        %916 = vmatprep.subr.bf16.mxu0 0
        %917 = vmatpush2.bf16.msra.mxu0 0
        %918 = vmatprep.subr.bf16.mxu0 0
        %919 = vmatpush2.bf16.msra.mxu0 0
        %920 = vmatprep.subr.bf16.mxu0 0
        %921 = vmatpush2.bf16.msra.mxu0 0
        %922 = vmatprep.subr.bf16.mxu0 0
        %923 = vmatpush2.bf16.msra.mxu0 0
        %924 = vmatprep.subr.bf16.mxu0 0
        %925 = vmatpush2.bf16.msra.mxu0 0
        %926 = vmatprep.subr.bf16.mxu0 0
        %927 = vmatpush2.bf16.msra.mxu0 0
        %928 = vmatprep.subr.bf16.mxu0 0
        %929 = vmatpush2.bf16.msra.mxu0 0
        %930 = vmatprep.subr.bf16.mxu0 0
        %931 = vmatpush2.bf16.msra.mxu0 0
        %932 = vmatprep.mubr.bf16.mxu0 0
        %933 = vmatmul.mubr.bf16.gmra.mxu0 %v898
        %v934 = vpop.f32.mrf.mxu0
        %v935 = vadd.f32 0.0, %v934
        %v936 = vpop.f32.mrf.mxu0
        %v937 = vpop.f32.mrf.mxu0
        %v938 = vadd.f32 0.0, %v937
        %v939 = vpop.f32.mrf.mxu0
        %940 = vdwg.mxu0
        %v941 = vadd.f32 %v884, %v935
        %v942 = vadd.f32 %v887, %v938
        %v943 = vpack.c.bf16 %v787, %v786
        %v944 = vld [vmem:[%s13] sm:$0xff]
        %v945 = vld [vmem:[%s13 + $0x8] sm:$0xff]
        %v946 = vld [vmem:[%s13 + $0x10] sm:$0xff]
        %v947 = vld [vmem:[%s13 + $0x18] sm:$0xff]
        %v948 = vpack.c.bf16 %v945, %v944
        %v949 = vpack.c.bf16 %v947, %v946
        %v951 = vsel %vm654, %v943, 0
        %953 = vmatprep.subr.bf16.mxu0 0
        %954 = vmatpush1.bf16.msra.mxu0 0
        %955 = vmatprep.subr.bf16.mxu0 0
        %956 = vmatpush1.bf16.msra.mxu0 0
        %957 = vmatprep.subr.bf16.mxu0 0
        %958 = vmatpush1.bf16.msra.mxu0 0
        %959 = vmatprep.subr.bf16.mxu0 0
        %960 = vmatpush1.bf16.msra.mxu0 0
        %961 = vmatprep.subr.bf16.mxu0 0
        %962 = vmatpush1.bf16.msra.mxu0 0
        %963 = vmatprep.subr.bf16.mxu0 0
        %964 = vmatpush1.bf16.msra.mxu0 0
        %965 = vmatprep.subr.bf16.mxu0 0
        %966 = vmatpush1.bf16.msra.mxu0 %v949
        %967 = vmatprep.subr.bf16.mxu0 0
        %968 = vmatpush1.bf16.msra.mxu0 %v948
        %969 = vmatprep.subr.bf16.mxu0 0
        %970 = vmatpush2.bf16.msra.mxu0 0
        %971 = vmatprep.subr.bf16.mxu0 0
        %972 = vmatpush2.bf16.msra.mxu0 0
        %973 = vmatprep.subr.bf16.mxu0 0
        %974 = vmatpush2.bf16.msra.mxu0 0
        %975 = vmatprep.subr.bf16.mxu0 0
        %976 = vmatpush2.bf16.msra.mxu0 0
        %977 = vmatprep.subr.bf16.mxu0 0
        %978 = vmatpush2.bf16.msra.mxu0 0
        %979 = vmatprep.subr.bf16.mxu0 0
        %980 = vmatpush2.bf16.msra.mxu0 0
        %981 = vmatprep.subr.bf16.mxu0 0
        %982 = vmatpush2.bf16.msra.mxu0 0
        %983 = vmatprep.subr.bf16.mxu0 0
        %984 = vmatpush2.bf16.msra.mxu0 0
        %985 = vmatprep.mubr.bf16.mxu0 0
        %986 = vmatmul.mubr.bf16.gmra.mxu0 %v951
        %v987 = vpop.f32.mrf.mxu0
        %v988 = vadd.f32 0.0, %v987
        %v989 = vpop.f32.mrf.mxu0
        %v990 = vpop.f32.mrf.mxu0
        %v991 = vadd.f32 0.0, %v990
        %v992 = vpop.f32.mrf.mxu0
        %993 = vdwg.mxu0
        %v994 = vadd.f32 %v941, %v988
        %v995 = vadd.f32 %v942, %v991
        %v996 = vld [vmem:[%s14] sm:$0x1]
        %v998 = vlaneseq
        %v999 = vshrl.u32 %v998, 7
        %v1000 = vsub.s32 0, %v999
        %v1001 = vrot.slane %v996, %v1000
        %v1003 = vadd.f32 %v994, %v1001
        %v1004 = vadd.f32 %v995, %v1001
        %1005 = vst [vmem:[%s632] sm:$0xff] %v1003
        %1006 = vst [vmem:[%s632 + $0x8] sm:$0xff] %v1004
        %v1007 = vld [vmem:[%s627] sm:$0xff]
        %v1008 = vld [vmem:[%s627 + $0x8] sm:$0xff]
        %v1009 = vadd.f32 %v786, %v1007
        %v1010 = vadd.f32 %v787, %v1008
        %1011 = vst.msk [vmem:[%s597] sm:$0xff] %vm654, %v1009
        %1012 = vst.msk [vmem:[%s597 + $0x8] sm:$0xff] %vm654, %v1010
        %p1013 = scmp.lt.s32.totalorder %s31, 1
        %s1014 = scalar_select %p1013, %s31, 1
        %s1015 = smul.addr %s1014, 2
        %s1016 = smul.addr %s1015, 8
        %s1017 = scalar_lea.vmem %s15, %s1016
        %s1018 = sand.u32 %s410, 1
        %s1019 = scalar_lea.sflag [#allocation3], %s1018
        %s1020 = sand.u32 %s410, 1
        %s1021 = smul.addr %s1020, 16
        %s1022 = scalar_lea.vmem [#allocation2], %s1021
        // Predicated region
        $region81: #{forward.11} parent=79 // pred_check
          %p1023 = pneg %p394
        $region82: #{forward.11} parent=79 // pred_check_branch
          %1025 = sbr.rel (%p1023) target = $region84
        $region83: #{forward.11} parent=79 // pred_region
          _
        $region84: #{forward.11} parent=79 // pred_fallthru
          _
        // Predicated region
        $region85: #{forward.11} parent=79 // pred_check
          %p1026 = pneg %p420
        $region86: #{forward.11} parent=79 // pred_check_branch
          %1028 = sbr.rel (%p1026) target = $region88
        $region87: #{forward.11} parent=79 // pred_region
          %s1030 = ssub.s32 256, 256
          %1031 = vsyncadd %s1019, %s1030
          %s1032 = smul.addr %s31, 2
          %s1033 = smul.addr %s1032, 128
          %s1034 = scalar_lea.hbm %s16, %s1033
          %s1035 = sshll.u32 %s1022, 4
          %s1036 = int_to_ptr.vmem [resolvable:$true] %s1035
          %1041 = dma.vmem_to_hbm [thread:$0]  %s1036, 256, %s1034, %s1019, 128, 128, 8
        $region88: #{forward.11} parent=79 // pred_fallthru
          _
      $region80: #{forward.11} parent=5 // pred_fallthru
        _
      %p1042 = scmp.le.s32.totalorder 2, %s26
      // Predicated region
      $region89: #{forward.11} parent=5 // pred_check
        %p1043 = pneg %p1042
      $region90: #{forward.11} parent=5 // pred_check_branch
        %1045 = sbr.rel (%p1043) target = $region92
      $region91: #{forward.11} parent=5 // pred_region
        %s1046 = ssub.s32 %s26, 2
        // Predicated region
        $region93: #{forward.11} parent=91 // pred_check
          %p1047 = pneg %p400
        $region94: #{forward.11} parent=91 // pred_check_branch
          %1049 = sbr.rel (%p1047) target = $region96
        $region95: #{forward.11} parent=91 // pred_region
          %p1050 = scmp.lt.s32.totalorder %s32, 1
          %s1051 = scalar_select %p1050, %s32, 1
          %s1052 = smul.addr %s1051, 2
          %s1053 = smul.addr %s1052, 8
          %s1054 = scalar_lea.vmem %s15, %s1053
        $region96: #{forward.11} parent=91 // pred_fallthru
          _
        // Predicated region
        $region97: #{forward.11} parent=91 // pred_check
          %p1055 = pneg %p426
        $region98: #{forward.11} parent=91 // pred_check_branch
          %1057 = sbr.rel (%p1055) target = $region100
        $region99: #{forward.11} parent=91 // pred_region
          %s1058 = sand.u32 %s411, 1
          %s1059 = scalar_lea.sflag [#allocation3], %s1058
          %s1060 = sand.u32 %s411, 1
          %s1061 = smul.addr %s1060, 16
          %s1062 = scalar_lea.vmem [#allocation2], %s1061
          %1063 = dma.done %s1059, 256
        $region100: #{forward.11} parent=91 // pred_fallthru
          _
      $region92: #{forward.11} parent=5 // pred_fallthru
        _
    $region6: #{forward.11} parent=1 // loop_footer
      %s30 = sadd.s32 1, %s26
    $region7: #{forward.11} parent=1 // loop_footer_branch
      %25 = sbr.rel target = $region3
    $region8: #{forward.11} parent=1 // loop_exit
      _
    %1064 = vsyncpa [#allocation3], 1
    %s1065 = scalar_lea.sflag [#allocation3], 1
    %1066 = vsyncpa %s1065, 1

</llo_original>
